<compile_context>
chip_gen: v7x
topology: tpu7x:2x2x1
jax: 0.10.0
libtpu: 0.0.40
codegen_flags: <defaults>
</compile_context>

<pallas_src>
import numpy as np

import jax
import jax.numpy as jnp
from jax import lax
from jax.experimental import pallas as pl
from jax.experimental.pallas import tpu as pltpu

EPS = 1e-5                     # PyTorch BatchNorm2d default eps
_CDT = jnp.bfloat16            # MXU operand dtype (accumulation stays f32)

# (suffix, spatial H=W at stage input, in-channels (pre-pad), out-channels)
_STAGES = (("1", 16, 3, 16), ("2", 8, 16, 32), ("3", 4, 32, 64))


# ---------------------------------------------------------------------------
# Pallas kernel: the whole network for a block of images, VMEM-resident.
# Activation layout: rows = (image-in-block, spatial row) stacked along
# sublanes, lanes = (spatial col, channel).
# ---------------------------------------------------------------------------
def _conv_pool_bn_stage(x, bd, s, r, aff, h, cout):
    """x: (b*h, w*cin) f32.  Returns (b*h/2, (w/2)*cout) f32."""
    bh, _ = x.shape
    # dy taps of the 3x3 conv: XLU sublane roll + per-image boundary zero mask
    # (pltpu.roll follows np.roll: out[i] = in[i - shift]; only non-negative
    # shifts are used).
    rows = lax.broadcasted_iota(jnp.int32, (bh, 1), 0)
    not_top = ((rows % h) != 0).astype(jnp.float32)
    not_bot = ((rows % h) != (h - 1)).astype(jnp.float32)
    up = (pltpu.roll(x, 1, 0) * not_top).astype(_CDT)        # up[r] = x[r-1]
    dn = (pltpu.roll(x, bh - 1, 0) * not_bot).astype(_CDT)   # dn[r] = x[r+1]
    # 3x3 conv (padding 1): dx taps + horizontal zero padding are folded into
    # the host-precomputed banded bd matrices; dy taps into the rolls above.
    conv = (jnp.dot(up, bd[0], preferred_element_type=jnp.float32)
            + jnp.dot(x.astype(_CDT), bd[1], preferred_element_type=jnp.float32)
            + jnp.dot(dn, bd[2], preferred_element_type=jnp.float32))
    # 2x2 max-pool (stride 2): pairwise max via roll (XLU) + max (VPU), then a
    # single even-row selector matmul and a single even-column-block selector
    # matmul (half the selector matmuls of the previous version).
    rowmax = jnp.maximum(conv, pltpu.roll(conv, bh - 1, 0))        # max(r, r+1)
    vert = jnp.dot(s[...], rowmax.astype(_CDT),
                   preferred_element_type=jnp.float32)             # keep rows 2i
    lanemax = jnp.maximum(vert, pltpu.roll(vert, conv.shape[1] - cout, 1))
    pooled = jnp.dot(lanemax.astype(_CDT), r[...],
                     preferred_element_type=jnp.float32)           # keep cols 2j
    # conv bias + ReLU hoisted past the (monotone) pool max, then eval-mode BN
    # folded to a per-channel scale/shift FMA.
    a = aff[...]
    return jnp.maximum(pooled + a[0:1, :], 0.0) * a[1:2, :] + a[2:3, :]


def _patchcnn_kernel(x_ref,
                     bd1, s1, r1, aff1,
                     bd2, s2, r2, aff2,
                     bd3, s3, r3, aff3,
                     w1a, w1b, b1, w2p, b2p,
                     o_ref):
    y = _conv_pool_bn_stage(x_ref[...], bd1, s1, r1, aff1, 16, 16)  # (b*8, 128)
    y = _conv_pool_bn_stage(y, bd2, s2, r2, aff2, 8, 32)            # (b*4, 128)
    y = _conv_pool_bn_stage(y, bd3, s3, r3, aff3, 4, 64)            # (b*2, 128)
    # FC head.  Each image owns two rows of y (h = 0, 1); lin1's rows were
    # pre-permuted on the host to this (h, w, c) lane order and split into
    # w1a (h=0 rows) / w1b (h=1 rows), lane-padded 10 -> 128.  Combining row r
    # with roll(r+1) yields the full 256-feature contraction on even rows; odd
    # rows are garbage and dropped by the host-side stride-2 slice.
    u = (jnp.dot(y.astype(_CDT), w1a[...], preferred_element_type=jnp.float32)
         + jnp.dot(pltpu.roll(y, y.shape[0] - 1, 0).astype(_CDT), w1b[...],
                   preferred_element_type=jnp.float32)
         + b1[...])
    hrel = jnp.maximum(u, 0.0).astype(_CDT)
    o_ref[...] = (jnp.dot(hrel, w2p[...], preferred_element_type=jnp.float32)
                  + b2p[...])


# ---------------------------------------------------------------------------
# One-time, host-side (numpy) parameter packing -- hoisted out of the per-call
# jit so no kron/take/tile device ops run per forward pass.
# ---------------------------------------------------------------------------
def pack_params(p, block):
    """`block` = images per grid step (baked into the block-diag selectors)."""
    f32 = lambda a: np.asarray(jax.device_get(a), np.float32)
    packed = {}
    for suf, hw, cin, cout in _STAGES:
        w = f32(p["w" + suf])                            # (cout, cin, 3, 3)
        cinp = 8 if suf == "1" else cin                  # stage-1 lanes 48 -> 128
        if cinp != cin:
            w = np.concatenate(
                [w, np.zeros((cout, cinp - cin, 3, 3), np.float32)], axis=1)
        # Banded conv matrices: bd[dy][w'*cinp+c, x*cout+o] = W[o,c,dy,x-w'+1].
        bd = np.zeros((3, hw * cinp, hw * cout), np.float32)
        for dy in range(3):
            for dx in range(3):
                band = np.eye(hw, k=1 - dx, dtype=np.float32)
                bd[dy] += np.kron(band, np.ascontiguousarray(w[:, :, dy, dx].T))
        packed["bd" + suf] = jnp.asarray(bd, _CDT)
        hp = hw // 2
        # Even-row pool selector, block-diagonal across the images of a block.
        se = np.zeros((hp, hw), np.float32)
        se[np.arange(hp), 2 * np.arange(hp)] = 1.0
        packed["s" + suf] = jnp.asarray(
            np.kron(np.eye(block, dtype=np.float32), se), _CDT)
        # Even-column-block pool selector (batch-invariant, acts on lanes).
        ee = np.zeros((hw, hp), np.float32)
        ee[2 * np.arange(hp), np.arange(hp)] = 1.0
        packed["r" + suf] = jnp.asarray(
            np.kron(ee, np.eye(cout, dtype=np.float32)), _CDT)
        # Conv bias + folded eval-mode BatchNorm, tiled across the w lane blocks.
        scale = f32(p["g" + suf]) / np.sqrt(f32(p["v" + suf]) + EPS)
        shift = f32(p["be" + suf]) - f32(p["m" + suf]) * scale
        packed["aff" + suf] = jnp.asarray(
            np.stack([np.tile(f32(p["b" + suf]), hp),
                      np.tile(scale, hp),
                      np.tile(shift, hp)]), jnp.float32)
    # lin1: permute rows from torch's NCHW flatten order to the kernel's
    # (h, w, c) order, split by h, lane-pad the 10 outputs to 128.
    idx = np.array([c * 4 + h * 2 + w
                    for h in range(2) for w in range(2) for c in range(64)],
                   np.int64)
    lw1 = f32(p["lw1"])[idx]                             # (256, 10)
    w1a = np.zeros((128, 128), np.float32); w1a[:, :10] = lw1[:128]
    w1b = np.zeros((128, 128), np.float32); w1b[:, :10] = lw1[128:]
    b1 = np.zeros((1, 128), np.float32);    b1[0, :10] = f32(p["lb1"])
    # lin2: zero-pad contraction rows 10 -> 128, lane-pad the output to 128.
    w2 = np.zeros((128, 128), np.float32);  w2[:10, 0] = f32(p["lw2"])[:, 0]
    b2 = np.zeros((1, 128), np.float32);    b2[0, 0] = f32(p["lb2"])[0]
    packed["w1a"] = jnp.asarray(w1a, _CDT)
    packed["w1b"] = jnp.asarray(w1b, _CDT)
    packed["b1"] = jnp.asarray(b1, jnp.float32)
    packed["w2p"] = jnp.asarray(w2, _CDT)
    packed["b2p"] = jnp.asarray(b2, jnp.float32)
    return packed


def _pick_block(n, max_block=8):
    """Images per grid step: largest divisor of n within the cap, keeping at
    least two grid steps so both v7x TensorCores get work ("parallel" axis)."""
    cap = max(1, min(max_block, n // 2))
    for b in range(cap, 0, -1):
        if n % b == 0:
            return b
    return 1


def _const_spec(arr):
    nd = arr.ndim
    # Same block every grid step -> fetched once, not re-DMA'd per step.
    return pl.BlockSpec(arr.shape, lambda i: (0,) * nd)


_CONST_ORDER = ("bd1", "s1", "r1", "aff1", "bd2", "s2", "r2", "aff2",
                "bd3", "s3", "r3", "aff3", "w1a", "w1b", "b1", "w2p", "b2p")


@jax.jit
def patch_cnn_forward(x_nchw, packed):
    # dropout1 / dropout2 are identity in eval mode.
    # TODO(synk): train-mode Dropout RNG and batch-statistic BatchNorm are not
    # implemented (eval-mode semantics only).
    n = x_nchw.shape[0]
    b_blk = packed["s1"].shape[0] // 8        # block size baked into selectors
    assert n % b_blk == 0, (n, b_blk)
    steps = n // b_blk

    # NCHW -> rows = (image, H) stacked along sublanes, lanes = (W, C); channel
    # dim zero-padded 3 -> 8 so the per-step input block is a lane-dense
    # (b_blk*16, 128) tile.
    x = jnp.transpose(x_nchw, (0, 2, 3, 1))                  # (n, 16, 16, 3)
    x = jnp.pad(x, ((0, 0), (0, 0), (0, 0), (0, 5)))         # (n, 16, 16, 8)
    x = x.reshape(n * 16, 128).astype(jnp.float32)

    consts = [packed[k] for k in _CONST_ORDER]
    in_specs = [pl.BlockSpec((b_blk * 16, 128), lambda i: (i, 0))]
    in_specs += [_const_spec(c) for c in consts]

    out = pl.pallas_call(
        _patchcnn_kernel,
        out_shape=jax.ShapeDtypeStruct((2 * n, 128), jnp.float32),
        grid_spec=pltpu.PrefetchScalarGridSpec(
            num_scalar_prefetch=0,
            grid=(steps,),
            in_specs=in_specs,
            out_specs=pl.BlockSpec((2 * b_blk, 128), lambda i: (i, 0)),
        ),
        compiler_params=pltpu.CompilerParams(
            dimension_semantics=("parallel",),
            # Working set (~2 MB of bf16 constants + small activation tiles) is
            # far below every generation's budget; set an explicit, portable
            # limit (safe on v5e's 16 MiB scoped default and v7x's 64 MiB VMEM).
            vmem_limit_bytes=32 * 1024 * 1024,
        ),
    )(x, *consts)
    # Row 2*g holds image g's lane-padded logits; column 0 is the real output.
    return out[0::2, :1]


# ---------------------------------------------------------------------------
# Deterministic synthetic parameters (same shapes as the PyTorch module)
# ---------------------------------------------------------------------------
def init_params(key):
    ks = jax.random.split(key, 5)
    p = {}
    specs = [("1", 16, 3), ("2", 32, 16), ("3", 64, 32)]
    for (suf, cout, cin), k in zip(specs, ks[:3]):
        kw, kb, kg, kbe, km, kv = jax.random.split(k, 6)
        p["w" + suf] = jax.random.normal(kw, (cout, cin, 3, 3), jnp.float32) / jnp.sqrt(9.0 * cin)
        p["b" + suf] = 0.1 * jax.random.normal(kb, (cout,), jnp.float32)
        p["g" + suf] = 1.0 + 0.1 * jax.random.normal(kg, (cout,), jnp.float32)
        p["be" + suf] = 0.1 * jax.random.normal(kbe, (cout,), jnp.float32)
        p["m" + suf] = 0.1 * jax.random.normal(km, (cout,), jnp.float32)
        p["v" + suf] = jax.random.uniform(kv, (cout,), jnp.float32, minval=0.5, maxval=1.5)
    k1w, k1b = jax.random.split(ks[3])
    p["lw1"] = jax.random.normal(k1w, (256, 10), jnp.float32) / jnp.sqrt(256.0)
    p["lb1"] = 0.1 * jax.random.normal(k1b, (10,), jnp.float32)
    k2w, k2b = jax.random.split(ks[4])
    p["lw2"] = jax.random.normal(k2w, (10, 1), jnp.float32) / jnp.sqrt(10.0)
    p["lb2"] = 0.1 * jax.random.normal(k2b, (1,), jnp.float32)
    return p


# ---------------------------------------------------------------------------
# Pure-JAX reference (sanity check of the Pallas path)
# ---------------------------------------------------------------------------
def ref_forward(x_nchw, p):
    def stage(x, w, b, g, be, m, v):
        y = lax.conv_general_dilated(
            x, w, window_strides=(1, 1), padding=((1, 1), (1, 1)),
            dimension_numbers=("NCHW", "OIHW", "NCHW"))
        y = jnp.maximum(y + b[None, :, None, None], 0.0)
        y = lax.reduce_window(y, -jnp.inf, lax.max,
                              (1, 1, 2, 2), (1, 1, 2, 2), "VALID")
        s = g / jnp.sqrt(v + EPS)
        return y * s[None, :, None, None] + (be - m * s)[None, :, None, None]

    x = stage(x_nchw, p["w1"], p["b1"], p["g1"], p["be1"], p["m1"], p["v1"])
    x = stage(x, p["w2"], p["b2"], p["g2"], p["be2"], p["m2"], p["v2"])
    x = stage(x, p["w3"], p["b3"], p["g3"], p["be3"], p["m3"], p["v3"])
    x = x.reshape(x.shape[0], -1)
    h = jnp.maximum(x @ p["lw1"] + p["lb1"], 0.0)
    return h @ p["lw2"] + p["lb2"]


if __name__ == "__main__":
    key = jax.random.PRNGKey(0)
    kx, kp = jax.random.split(key)
    params = init_params(kp)
    # Input implied by the module: 3 channels, 16x16 spatial (64*2*2 = 256 =
    # lin1.in_features).  batch=8 exercises the batched path
    # (4 images per grid step, 2 grid steps).
    x = jax.random.normal(kx, (8, 3, 16, 16), jnp.float32)

    packed = pack_params(params, block=_pick_block(x.shape[0]))  # one-time, host-side
    out = jax.block_until_ready(patch_cnn_forward(x, packed))
    ref = ref_forward(x, params)

    assert out.shape == (8, 1), out.shape
    assert bool(jnp.all(jnp.isfinite(out)))
    # bf16 MXU operands with f32 accumulation: allow ~2e-2.
    assert bool(jnp.allclose(out, ref, rtol=2e-2, atol=2e-2)), (out, ref)
    print("KERNEL_OK")
</pallas_src>

<mosaic_0001>
module attributes {stable_mosaic.version = 11 : i64} {
  func.func @_patchcnn_kernel(%arg0: i32, %arg1: memref<64x128xf32, #tpu.memory_space<vmem>>, %arg2: memref<3x128x256xbf16, #tpu.memory_space<vmem>>, %arg3: memref<32x64xbf16, #tpu.memory_space<vmem>>, %arg4: memref<256x128xbf16, #tpu.memory_space<vmem>>, %arg5: memref<3x128xf32, #tpu.memory_space<vmem>>, %arg6: memref<3x128x256xbf16, #tpu.memory_space<vmem>>, %arg7: memref<16x32xbf16, #tpu.memory_space<vmem>>, %arg8: memref<256x128xbf16, #tpu.memory_space<vmem>>, %arg9: memref<3x128xf32, #tpu.memory_space<vmem>>, %arg10: memref<3x128x256xbf16, #tpu.memory_space<vmem>>, %arg11: memref<8x16xbf16, #tpu.memory_space<vmem>>, %arg12: memref<256x128xbf16, #tpu.memory_space<vmem>>, %arg13: memref<3x128xf32, #tpu.memory_space<vmem>>, %arg14: memref<128x128xbf16, #tpu.memory_space<vmem>>, %arg15: memref<128x128xbf16, #tpu.memory_space<vmem>>, %arg16: memref<1x128xf32, #tpu.memory_space<vmem>>, %arg17: memref<128x128xbf16, #tpu.memory_space<vmem>>, %arg18: memref<1x128xf32, #tpu.memory_space<vmem>>, %arg19: memref<8x128xf32, #tpu.memory_space<vmem>>) attributes {dimension_semantics = [#tpu.dimension_semantics<parallel>], iteration_bounds = array<i64: 2>, scalar_prefetch = 0 : i64, scratch_operands = 0 : i64, tpu.core_type = #tpu.core_type<tc>, window_params = [{transform_indices = @transform_0, window_bounds = array<i64: 64, 128>}, {pipeline_mode = #tpu.pipeline_mode<synchronous>, transform_indices = @transform_1, window_bounds = array<i64: 3, 128, 256>}, {pipeline_mode = #tpu.pipeline_mode<synchronous>, transform_indices = @transform_2, window_bounds = array<i64: 32, 64>}, {pipeline_mode = #tpu.pipeline_mode<synchronous>, transform_indices = @transform_3, window_bounds = array<i64: 256, 128>}, {pipeline_mode = #tpu.pipeline_mode<synchronous>, transform_indices = @transform_4, window_bounds = array<i64: 3, 128>}, {pipeline_mode = #tpu.pipeline_mode<synchronous>, transform_indices = @transform_5, window_bounds = array<i64: 3, 128, 256>}, {pipeline_mode = #tpu.pipeline_mode<synchronous>, transform_indices = @transform_6, window_bounds = array<i64: 16, 32>}, {pipeline_mode = #tpu.pipeline_mode<synchronous>, transform_indices = @transform_7, window_bounds = array<i64: 256, 128>}, {pipeline_mode = #tpu.pipeline_mode<synchronous>, transform_indices = @transform_8, window_bounds = array<i64: 3, 128>}, {pipeline_mode = #tpu.pipeline_mode<synchronous>, transform_indices = @transform_9, window_bounds = array<i64: 3, 128, 256>}, {pipeline_mode = #tpu.pipeline_mode<synchronous>, transform_indices = @transform_10, window_bounds = array<i64: 8, 16>}, {pipeline_mode = #tpu.pipeline_mode<synchronous>, transform_indices = @transform_11, window_bounds = array<i64: 256, 128>}, {pipeline_mode = #tpu.pipeline_mode<synchronous>, transform_indices = @transform_12, window_bounds = array<i64: 3, 128>}, {pipeline_mode = #tpu.pipeline_mode<synchronous>, transform_indices = @transform_13, window_bounds = array<i64: 128, 128>}, {pipeline_mode = #tpu.pipeline_mode<synchronous>, transform_indices = @transform_14, window_bounds = array<i64: 128, 128>}, {pipeline_mode = #tpu.pipeline_mode<synchronous>, transform_indices = @transform_15, window_bounds = array<i64: 1, 128>}, {pipeline_mode = #tpu.pipeline_mode<synchronous>, transform_indices = @transform_16, window_bounds = array<i64: 128, 128>}, {pipeline_mode = #tpu.pipeline_mode<synchronous>, transform_indices = @transform_17, window_bounds = array<i64: 1, 128>}, {transform_indices = @transform_18, window_bounds = array<i64: 8, 128>}]} {
    %c0 = arith.constant 0 : index
    %c0_0 = arith.constant 0 : index
    %0 = vector.load %arg1[%c0, %c0_0] : memref<64x128xf32, #tpu.memory_space<vmem>>, vector<64x128xf32>
    %1 = tpu.iota {dimensions = array<i32: 0>} : vector<64x1xi32>
    %c16_i32 = arith.constant 16 : i32
    %c0_i32 = arith.constant 0 : i32
    %2 = arith.cmpi eq, %c16_i32, %c0_i32 : i32
    %c1_i32 = arith.constant 1 : i32
    %3 = arith.select %2, %c1_i32, %c16_i32 : i32
    %4 = vector.broadcast %3 : i32 to vector<64x1xi32>
    %5 = arith.remsi %1, %4 : vector<64x1xi32>
    %c0_i32_1 = arith.constant 0 : i32
    %6 = vector.broadcast %c0_i32_1 : i32 to vector<64x1xi32>
    %7 = arith.cmpi ne, %5, %6 : vector<64x1xi32>
    %c0_i32_2 = arith.constant 0 : i32
    %8 = vector.broadcast %c0_i32_2 : i32 to vector<64x1xi32>
    %9 = arith.cmpi slt, %5, %8 : vector<64x1xi32>
    %c0_i32_3 = arith.constant 0 : i32
    %10 = arith.cmpi slt, %3, %c0_i32_3 : i32
    %11 = vector.broadcast %10 : i1 to vector<64x1xi1>
    %12 = vector.broadcast %11 : vector<64x1xi1> to vector<64x1xi1>
    %13 = arith.xori %9, %12 : vector<64x1xi1>
    %14 = arith.andi %13, %7 : vector<64x1xi1>
    %15 = vector.broadcast %3 : i32 to vector<64x1xi32>
    %16 = arith.addi %5, %15 : vector<64x1xi32>
    %17 = arith.select %14, %16, %5 : vector<64x1xi1>, vector<64x1xi32>
    %c0_i32_4 = arith.constant 0 : i32
    %18 = vector.broadcast %c0_i32_4 : i32 to vector<64x1xi32>
    %19 = arith.cmpi ne, %17, %18 : vector<64x1xi32>
    %20 = arith.extui %19 : vector<64x1xi1> to vector<64x1xi32>
    %21 = arith.sitofp %20 : vector<64x1xi32> to vector<64x1xf32>
    %c16_i32_5 = arith.constant 16 : i32
    %c0_i32_6 = arith.constant 0 : i32
    %22 = arith.cmpi eq, %c16_i32_5, %c0_i32_6 : i32
    %c1_i32_7 = arith.constant 1 : i32
    %23 = arith.select %22, %c1_i32_7, %c16_i32_5 : i32
    %24 = vector.broadcast %23 : i32 to vector<64x1xi32>
    %25 = arith.remsi %1, %24 : vector<64x1xi32>
    %c0_i32_8 = arith.constant 0 : i32
    %26 = vector.broadcast %c0_i32_8 : i32 to vector<64x1xi32>
    %27 = arith.cmpi ne, %25, %26 : vector<64x1xi32>
    %c0_i32_9 = arith.constant 0 : i32
    %28 = vector.broadcast %c0_i32_9 : i32 to vector<64x1xi32>
    %29 = arith.cmpi slt, %25, %28 : vector<64x1xi32>
    %c0_i32_10 = arith.constant 0 : i32
    %30 = arith.cmpi slt, %23, %c0_i32_10 : i32
    %31 = vector.broadcast %30 : i1 to vector<64x1xi1>
    %32 = vector.broadcast %31 : vector<64x1xi1> to vector<64x1xi1>
    %33 = arith.xori %29, %32 : vector<64x1xi1>
    %34 = arith.andi %33, %27 : vector<64x1xi1>
    %35 = vector.broadcast %23 : i32 to vector<64x1xi32>
    %36 = arith.addi %25, %35 : vector<64x1xi32>
    %37 = arith.select %34, %36, %25 : vector<64x1xi1>, vector<64x1xi32>
    %c15_i32 = arith.constant 15 : i32
    %38 = vector.broadcast %c15_i32 : i32 to vector<64x1xi32>
    %39 = arith.cmpi ne, %37, %38 : vector<64x1xi32>
    %40 = arith.extui %39 : vector<64x1xi1> to vector<64x1xi32>
    %41 = arith.sitofp %40 : vector<64x1xi32> to vector<64x1xf32>
    %c1_i32_11 = arith.constant 1 : i32
    %42 = tpu.dynamic_rotate %0 by %c1_i32_11 dim 0 : vector<64x128xf32>, i32 -> vector<64x128xf32>
    %43 = vector.broadcast %21 : vector<64x1xf32> to vector<64x128xf32>
    %44 = arith.mulf %42, %43 : vector<64x128xf32>
    %45 = arith.truncf %44 : vector<64x128xf32> to vector<64x128xbf16>
    %c63_i32 = arith.constant 63 : i32
    %46 = tpu.dynamic_rotate %0 by %c63_i32 dim 0 : vector<64x128xf32>, i32 -> vector<64x128xf32>
    %47 = vector.broadcast %41 : vector<64x1xf32> to vector<64x128xf32>
    %48 = arith.mulf %46, %47 : vector<64x128xf32>
    %49 = arith.truncf %48 : vector<64x128xf32> to vector<64x128xbf16>
    %c0_12 = arith.constant 0 : index
    %c0_13 = arith.constant 0 : index
    %c0_14 = arith.constant 0 : index
    %50 = vector.load %arg2[%c0_12, %c0_13, %c0_14] : memref<3x128x256xbf16, #tpu.memory_space<vmem>>, vector<1x128x256xbf16>
    %51 = vector.shape_cast %50 : vector<1x128x256xbf16> to vector<128x256xbf16>
    %cst = arith.constant dense<0.000000e+00> : vector<64x256xf32>
    %52 = tpu.matmul %45, %51, %cst {dimension_numbers = #tpu.dot_dimension_numbers<[1], [0], [0], [1], [0, 0, 1, 1], [], []>} : vector<64x128xbf16>, vector<128x256xbf16>, vector<64x256xf32> -> vector<64x256xf32>
    %53 = arith.truncf %0 : vector<64x128xf32> to vector<64x128xbf16>
    %c1 = arith.constant 1 : index
    %c0_15 = arith.constant 0 : index
    %c0_16 = arith.constant 0 : index
    %54 = vector.load %arg2[%c1, %c0_15, %c0_16] : memref<3x128x256xbf16, #tpu.memory_space<vmem>>, vector<1x128x256xbf16>
    %55 = vector.shape_cast %54 : vector<1x128x256xbf16> to vector<128x256xbf16>
    %cst_17 = arith.constant dense<0.000000e+00> : vector<64x256xf32>
    %56 = tpu.matmul %53, %55, %cst_17 {dimension_numbers = #tpu.dot_dimension_numbers<[1], [0], [0], [1], [0, 0, 1, 1], [], []>} : vector<64x128xbf16>, vector<128x256xbf16>, vector<64x256xf32> -> vector<64x256xf32>
    %57 = arith.addf %52, %56 : vector<64x256xf32>
    %c2 = arith.constant 2 : index
    %c0_18 = arith.constant 0 : index
    %c0_19 = arith.constant 0 : index
    %58 = vector.load %arg2[%c2, %c0_18, %c0_19] : memref<3x128x256xbf16, #tpu.memory_space<vmem>>, vector<1x128x256xbf16>
    %59 = vector.shape_cast %58 : vector<1x128x256xbf16> to vector<128x256xbf16>
    %cst_20 = arith.constant dense<0.000000e+00> : vector<64x256xf32>
    %60 = tpu.matmul %49, %59, %cst_20 {dimension_numbers = #tpu.dot_dimension_numbers<[1], [0], [0], [1], [0, 0, 1, 1], [], []>} : vector<64x128xbf16>, vector<128x256xbf16>, vector<64x256xf32> -> vector<64x256xf32>
    %61 = arith.addf %57, %60 : vector<64x256xf32>
    %c63_i32_21 = arith.constant 63 : i32
    %62 = tpu.dynamic_rotate %61 by %c63_i32_21 dim 0 : vector<64x256xf32>, i32 -> vector<64x256xf32>
    %63 = arith.maximumf %61, %62 : vector<64x256xf32>
    %c0_22 = arith.constant 0 : index
    %c0_23 = arith.constant 0 : index
    %64 = vector.load %arg3[%c0_22, %c0_23] : memref<32x64xbf16, #tpu.memory_space<vmem>>, vector<32x64xbf16>
    %65 = arith.truncf %63 : vector<64x256xf32> to vector<64x256xbf16>
    %cst_24 = arith.constant dense<0.000000e+00> : vector<32x256xf32>
    %66 = tpu.matmul %64, %65, %cst_24 {dimension_numbers = #tpu.dot_dimension_numbers<[1], [0], [0], [1], [0, 0, 1, 1], [], []>} : vector<32x64xbf16>, vector<64x256xbf16>, vector<32x256xf32> -> vector<32x256xf32>
    %c240_i32 = arith.constant 240 : i32
    %67 = tpu.dynamic_rotate %66 by %c240_i32 dim 1 : vector<32x256xf32>, i32 -> vector<32x256xf32>
    %68 = arith.maximumf %66, %67 : vector<32x256xf32>
    %69 = arith.truncf %68 : vector<32x256xf32> to vector<32x256xbf16>
    %c0_25 = arith.constant 0 : index
    %c0_26 = arith.constant 0 : index
    %70 = vector.load %arg4[%c0_25, %c0_26] : memref<256x128xbf16, #tpu.memory_space<vmem>>, vector<256x128xbf16>
    %cst_27 = arith.constant dense<0.000000e+00> : vector<32x128xf32>
    %71 = tpu.matmul %69, %70, %cst_27 {dimension_numbers = #tpu.dot_dimension_numbers<[1], [0], [0], [1], [0, 0, 1, 1], [], []>} : vector<32x256xbf16>, vector<256x128xbf16>, vector<32x128xf32> -> vector<32x128xf32>
    %c0_28 = arith.constant 0 : index
    %c0_29 = arith.constant 0 : index
    %72 = vector.load %arg5[%c0_28, %c0_29] : memref<3x128xf32, #tpu.memory_space<vmem>>, vector<3x128xf32>
    %73 = vector.extract_strided_slice %72 {offsets = [0, 0], sizes = [1, 128], strides = [1, 1]} : vector<3x128xf32> to vector<1x128xf32>
    %74 = vector.broadcast %73 : vector<1x128xf32> to vector<32x128xf32>
    %75 = arith.addf %71, %74 : vector<32x128xf32>
    %cst_30 = arith.constant 0.000000e+00 : f32
    %76 = vector.broadcast %cst_30 : f32 to vector<32x128xf32>
    %77 = arith.maximumf %75, %76 : vector<32x128xf32>
    %78 = vector.extract_strided_slice %72 {offsets = [1, 0], sizes = [1, 128], strides = [1, 1]} : vector<3x128xf32> to vector<1x128xf32>
    %79 = vector.broadcast %78 : vector<1x128xf32> to vector<32x128xf32>
    %80 = arith.mulf %77, %79 : vector<32x128xf32>
    %81 = vector.extract_strided_slice %72 {offsets = [2, 0], sizes = [1, 128], strides = [1, 1]} : vector<3x128xf32> to vector<1x128xf32>
    %82 = vector.broadcast %81 : vector<1x128xf32> to vector<32x128xf32>
    %83 = arith.addf %80, %82 : vector<32x128xf32>
    %84 = tpu.iota {dimensions = array<i32: 0>} : vector<32x1xi32>
    %c8_i32 = arith.constant 8 : i32
    %c0_i32_31 = arith.constant 0 : i32
    %85 = arith.cmpi eq, %c8_i32, %c0_i32_31 : i32
    %c1_i32_32 = arith.constant 1 : i32
    %86 = arith.select %85, %c1_i32_32, %c8_i32 : i32
    %87 = vector.broadcast %86 : i32 to vector<32x1xi32>
    %88 = arith.remsi %84, %87 : vector<32x1xi32>
    %c0_i32_33 = arith.constant 0 : i32
    %89 = vector.broadcast %c0_i32_33 : i32 to vector<32x1xi32>
    %90 = arith.cmpi ne, %88, %89 : vector<32x1xi32>
    %c0_i32_34 = arith.constant 0 : i32
    %91 = vector.broadcast %c0_i32_34 : i32 to vector<32x1xi32>
    %92 = arith.cmpi slt, %88, %91 : vector<32x1xi32>
    %c0_i32_35 = arith.constant 0 : i32
    %93 = arith.cmpi slt, %86, %c0_i32_35 : i32
    %94 = vector.broadcast %93 : i1 to vector<32x1xi1>
    %95 = vector.broadcast %94 : vector<32x1xi1> to vector<32x1xi1>
    %96 = arith.xori %92, %95 : vector<32x1xi1>
    %97 = arith.andi %96, %90 : vector<32x1xi1>
    %98 = vector.broadcast %86 : i32 to vector<32x1xi32>
    %99 = arith.addi %88, %98 : vector<32x1xi32>
    %100 = arith.select %97, %99, %88 : vector<32x1xi1>, vector<32x1xi32>
    %c0_i32_36 = arith.constant 0 : i32
    %101 = vector.broadcast %c0_i32_36 : i32 to vector<32x1xi32>
    %102 = arith.cmpi ne, %100, %101 : vector<32x1xi32>
    %103 = arith.extui %102 : vector<32x1xi1> to vector<32x1xi32>
    %104 = arith.sitofp %103 : vector<32x1xi32> to vector<32x1xf32>
    %c8_i32_37 = arith.constant 8 : i32
    %c0_i32_38 = arith.constant 0 : i32
    %105 = arith.cmpi eq, %c8_i32_37, %c0_i32_38 : i32
    %c1_i32_39 = arith.constant 1 : i32
    %106 = arith.select %105, %c1_i32_39, %c8_i32_37 : i32
    %107 = vector.broadcast %106 : i32 to vector<32x1xi32>
    %108 = arith.remsi %84, %107 : vector<32x1xi32>
    %c0_i32_40 = arith.constant 0 : i32
    %109 = vector.broadcast %c0_i32_40 : i32 to vector<32x1xi32>
    %110 = arith.cmpi ne, %108, %109 : vector<32x1xi32>
    %c0_i32_41 = arith.constant 0 : i32
    %111 = vector.broadcast %c0_i32_41 : i32 to vector<32x1xi32>
    %112 = arith.cmpi slt, %108, %111 : vector<32x1xi32>
    %c0_i32_42 = arith.constant 0 : i32
    %113 = arith.cmpi slt, %106, %c0_i32_42 : i32
    %114 = vector.broadcast %113 : i1 to vector<32x1xi1>
    %115 = vector.broadcast %114 : vector<32x1xi1> to vector<32x1xi1>
    %116 = arith.xori %112, %115 : vector<32x1xi1>
    %117 = arith.andi %116, %110 : vector<32x1xi1>
    %118 = vector.broadcast %106 : i32 to vector<32x1xi32>
    %119 = arith.addi %108, %118 : vector<32x1xi32>
    %120 = arith.select %117, %119, %108 : vector<32x1xi1>, vector<32x1xi32>
    %c7_i32 = arith.constant 7 : i32
    %121 = vector.broadcast %c7_i32 : i32 to vector<32x1xi32>
    %122 = arith.cmpi ne, %120, %121 : vector<32x1xi32>
    %123 = arith.extui %122 : vector<32x1xi1> to vector<32x1xi32>
    %124 = arith.sitofp %123 : vector<32x1xi32> to vector<32x1xf32>
    %c1_i32_43 = arith.constant 1 : i32
    %125 = tpu.dynamic_rotate %83 by %c1_i32_43 dim 0 : vector<32x128xf32>, i32 -> vector<32x128xf32>
    %126 = vector.broadcast %104 : vector<32x1xf32> to vector<32x128xf32>
    %127 = arith.mulf %125, %126 : vector<32x128xf32>
    %128 = arith.truncf %127 : vector<32x128xf32> to vector<32x128xbf16>
    %c31_i32 = arith.constant 31 : i32
    %129 = tpu.dynamic_rotate %83 by %c31_i32 dim 0 : vector<32x128xf32>, i32 -> vector<32x128xf32>
    %130 = vector.broadcast %124 : vector<32x1xf32> to vector<32x128xf32>
    %131 = arith.mulf %129, %130 : vector<32x128xf32>
    %132 = arith.truncf %131 : vector<32x128xf32> to vector<32x128xbf16>
    %c0_44 = arith.constant 0 : index
    %c0_45 = arith.constant 0 : index
    %c0_46 = arith.constant 0 : index
    %133 = vector.load %arg6[%c0_44, %c0_45, %c0_46] : memref<3x128x256xbf16, #tpu.memory_space<vmem>>, vector<1x128x256xbf16>
    %134 = vector.shape_cast %133 : vector<1x128x256xbf16> to vector<128x256xbf16>
    %cst_47 = arith.constant dense<0.000000e+00> : vector<32x256xf32>
    %135 = tpu.matmul %128, %134, %cst_47 {dimension_numbers = #tpu.dot_dimension_numbers<[1], [0], [0], [1], [0, 0, 1, 1], [], []>} : vector<32x128xbf16>, vector<128x256xbf16>, vector<32x256xf32> -> vector<32x256xf32>
    %136 = arith.truncf %83 : vector<32x128xf32> to vector<32x128xbf16>
    %c1_48 = arith.constant 1 : index
    %c0_49 = arith.constant 0 : index
    %c0_50 = arith.constant 0 : index
    %137 = vector.load %arg6[%c1_48, %c0_49, %c0_50] : memref<3x128x256xbf16, #tpu.memory_space<vmem>>, vector<1x128x256xbf16>
    %138 = vector.shape_cast %137 : vector<1x128x256xbf16> to vector<128x256xbf16>
    %cst_51 = arith.constant dense<0.000000e+00> : vector<32x256xf32>
    %139 = tpu.matmul %136, %138, %cst_51 {dimension_numbers = #tpu.dot_dimension_numbers<[1], [0], [0], [1], [0, 0, 1, 1], [], []>} : vector<32x128xbf16>, vector<128x256xbf16>, vector<32x256xf32> -> vector<32x256xf32>
    %140 = arith.addf %135, %139 : vector<32x256xf32>
    %c2_52 = arith.constant 2 : index
    %c0_53 = arith.constant 0 : index
    %c0_54 = arith.constant 0 : index
    %141 = vector.load %arg6[%c2_52, %c0_53, %c0_54] : memref<3x128x256xbf16, #tpu.memory_space<vmem>>, vector<1x128x256xbf16>
    %142 = vector.shape_cast %141 : vector<1x128x256xbf16> to vector<128x256xbf16>
    %cst_55 = arith.constant dense<0.000000e+00> : vector<32x256xf32>
    %143 = tpu.matmul %132, %142, %cst_55 {dimension_numbers = #tpu.dot_dimension_numbers<[1], [0], [0], [1], [0, 0, 1, 1], [], []>} : vector<32x128xbf16>, vector<128x256xbf16>, vector<32x256xf32> -> vector<32x256xf32>
    %144 = arith.addf %140, %143 : vector<32x256xf32>
    %c31_i32_56 = arith.constant 31 : i32
    %145 = tpu.dynamic_rotate %144 by %c31_i32_56 dim 0 : vector<32x256xf32>, i32 -> vector<32x256xf32>
    %146 = arith.maximumf %144, %145 : vector<32x256xf32>
    %c0_57 = arith.constant 0 : index
    %c0_58 = arith.constant 0 : index
    %147 = vector.load %arg7[%c0_57, %c0_58] : memref<16x32xbf16, #tpu.memory_space<vmem>>, vector<16x32xbf16>
    %148 = arith.truncf %146 : vector<32x256xf32> to vector<32x256xbf16>
    %cst_59 = arith.constant dense<0.000000e+00> : vector<16x256xf32>
    %149 = tpu.matmul %147, %148, %cst_59 {dimension_numbers = #tpu.dot_dimension_numbers<[1], [0], [0], [1], [0, 0, 1, 1], [], []>} : vector<16x32xbf16>, vector<32x256xbf16>, vector<16x256xf32> -> vector<16x256xf32>
    %c224_i32 = arith.constant 224 : i32
    %150 = tpu.dynamic_rotate %149 by %c224_i32 dim 1 : vector<16x256xf32>, i32 -> vector<16x256xf32>
    %151 = arith.maximumf %149, %150 : vector<16x256xf32>
    %152 = arith.truncf %151 : vector<16x256xf32> to vector<16x256xbf16>
    %c0_60 = arith.constant 0 : index
    %c0_61 = arith.constant 0 : index
    %153 = vector.load %arg8[%c0_60, %c0_61] : memref<256x128xbf16, #tpu.memory_space<vmem>>, vector<256x128xbf16>
    %cst_62 = arith.constant dense<0.000000e+00> : vector<16x128xf32>
    %154 = tpu.matmul %152, %153, %cst_62 {dimension_numbers = #tpu.dot_dimension_numbers<[1], [0], [0], [1], [0, 0, 1, 1], [], []>} : vector<16x256xbf16>, vector<256x128xbf16>, vector<16x128xf32> -> vector<16x128xf32>
    %c0_63 = arith.constant 0 : index
    %c0_64 = arith.constant 0 : index
    %155 = vector.load %arg9[%c0_63, %c0_64] : memref<3x128xf32, #tpu.memory_space<vmem>>, vector<3x128xf32>
    %156 = vector.extract_strided_slice %155 {offsets = [0, 0], sizes = [1, 128], strides = [1, 1]} : vector<3x128xf32> to vector<1x128xf32>
    %157 = vector.broadcast %156 : vector<1x128xf32> to vector<16x128xf32>
    %158 = arith.addf %154, %157 : vector<16x128xf32>
    %cst_65 = arith.constant 0.000000e+00 : f32
    %159 = vector.broadcast %cst_65 : f32 to vector<16x128xf32>
    %160 = arith.maximumf %158, %159 : vector<16x128xf32>
    %161 = vector.extract_strided_slice %155 {offsets = [1, 0], sizes = [1, 128], strides = [1, 1]} : vector<3x128xf32> to vector<1x128xf32>
    %162 = vector.broadcast %161 : vector<1x128xf32> to vector<16x128xf32>
    %163 = arith.mulf %160, %162 : vector<16x128xf32>
    %164 = vector.extract_strided_slice %155 {offsets = [2, 0], sizes = [1, 128], strides = [1, 1]} : vector<3x128xf32> to vector<1x128xf32>
    %165 = vector.broadcast %164 : vector<1x128xf32> to vector<16x128xf32>
    %166 = arith.addf %163, %165 : vector<16x128xf32>
    %167 = tpu.iota {dimensions = array<i32: 0>} : vector<16x1xi32>
    %c4_i32 = arith.constant 4 : i32
    %c0_i32_66 = arith.constant 0 : i32
    %168 = arith.cmpi eq, %c4_i32, %c0_i32_66 : i32
    %c1_i32_67 = arith.constant 1 : i32
    %169 = arith.select %168, %c1_i32_67, %c4_i32 : i32
    %170 = vector.broadcast %169 : i32 to vector<16x1xi32>
    %171 = arith.remsi %167, %170 : vector<16x1xi32>
    %c0_i32_68 = arith.constant 0 : i32
    %172 = vector.broadcast %c0_i32_68 : i32 to vector<16x1xi32>
    %173 = arith.cmpi ne, %171, %172 : vector<16x1xi32>
    %c0_i32_69 = arith.constant 0 : i32
    %174 = vector.broadcast %c0_i32_69 : i32 to vector<16x1xi32>
    %175 = arith.cmpi slt, %171, %174 : vector<16x1xi32>
    %c0_i32_70 = arith.constant 0 : i32
    %176 = arith.cmpi slt, %169, %c0_i32_70 : i32
    %177 = vector.broadcast %176 : i1 to vector<16x1xi1>
    %178 = vector.broadcast %177 : vector<16x1xi1> to vector<16x1xi1>
    %179 = arith.xori %175, %178 : vector<16x1xi1>
    %180 = arith.andi %179, %173 : vector<16x1xi1>
    %181 = vector.broadcast %169 : i32 to vector<16x1xi32>
    %182 = arith.addi %171, %181 : vector<16x1xi32>
    %183 = arith.select %180, %182, %171 : vector<16x1xi1>, vector<16x1xi32>
    %c0_i32_71 = arith.constant 0 : i32
    %184 = vector.broadcast %c0_i32_71 : i32 to vector<16x1xi32>
    %185 = arith.cmpi ne, %183, %184 : vector<16x1xi32>
    %186 = arith.extui %185 : vector<16x1xi1> to vector<16x1xi32>
    %187 = arith.sitofp %186 : vector<16x1xi32> to vector<16x1xf32>
    %c4_i32_72 = arith.constant 4 : i32
    %c0_i32_73 = arith.constant 0 : i32
    %188 = arith.cmpi eq, %c4_i32_72, %c0_i32_73 : i32
    %c1_i32_74 = arith.constant 1 : i32
    %189 = arith.select %188, %c1_i32_74, %c4_i32_72 : i32
    %190 = vector.broadcast %189 : i32 to vector<16x1xi32>
    %191 = arith.remsi %167, %190 : vector<16x1xi32>
    %c0_i32_75 = arith.constant 0 : i32
    %192 = vector.broadcast %c0_i32_75 : i32 to vector<16x1xi32>
    %193 = arith.cmpi ne, %191, %192 : vector<16x1xi32>
    %c0_i32_76 = arith.constant 0 : i32
    %194 = vector.broadcast %c0_i32_76 : i32 to vector<16x1xi32>
    %195 = arith.cmpi slt, %191, %194 : vector<16x1xi32>
    %c0_i32_77 = arith.constant 0 : i32
    %196 = arith.cmpi slt, %189, %c0_i32_77 : i32
    %197 = vector.broadcast %196 : i1 to vector<16x1xi1>
    %198 = vector.broadcast %197 : vector<16x1xi1> to vector<16x1xi1>
    %199 = arith.xori %195, %198 : vector<16x1xi1>
    %200 = arith.andi %199, %193 : vector<16x1xi1>
    %201 = vector.broadcast %189 : i32 to vector<16x1xi32>
    %202 = arith.addi %191, %201 : vector<16x1xi32>
    %203 = arith.select %200, %202, %191 : vector<16x1xi1>, vector<16x1xi32>
    %c3_i32 = arith.constant 3 : i32
    %204 = vector.broadcast %c3_i32 : i32 to vector<16x1xi32>
    %205 = arith.cmpi ne, %203, %204 : vector<16x1xi32>
    %206 = arith.extui %205 : vector<16x1xi1> to vector<16x1xi32>
    %207 = arith.sitofp %206 : vector<16x1xi32> to vector<16x1xf32>
    %c1_i32_78 = arith.constant 1 : i32
    %208 = tpu.dynamic_rotate %166 by %c1_i32_78 dim 0 : vector<16x128xf32>, i32 -> vector<16x128xf32>
    %209 = vector.broadcast %187 : vector<16x1xf32> to vector<16x128xf32>
    %210 = arith.mulf %208, %209 : vector<16x128xf32>
    %211 = arith.truncf %210 : vector<16x128xf32> to vector<16x128xbf16>
    %c15_i32_79 = arith.constant 15 : i32
    %212 = tpu.dynamic_rotate %166 by %c15_i32_79 dim 0 : vector<16x128xf32>, i32 -> vector<16x128xf32>
    %213 = vector.broadcast %207 : vector<16x1xf32> to vector<16x128xf32>
    %214 = arith.mulf %212, %213 : vector<16x128xf32>
    %215 = arith.truncf %214 : vector<16x128xf32> to vector<16x128xbf16>
    %c0_80 = arith.constant 0 : index
    %c0_81 = arith.constant 0 : index
    %c0_82 = arith.constant 0 : index
    %216 = vector.load %arg10[%c0_80, %c0_81, %c0_82] : memref<3x128x256xbf16, #tpu.memory_space<vmem>>, vector<1x128x256xbf16>
    %217 = vector.shape_cast %216 : vector<1x128x256xbf16> to vector<128x256xbf16>
    %cst_83 = arith.constant dense<0.000000e+00> : vector<16x256xf32>
    %218 = tpu.matmul %211, %217, %cst_83 {dimension_numbers = #tpu.dot_dimension_numbers<[1], [0], [0], [1], [0, 0, 1, 1], [], []>} : vector<16x128xbf16>, vector<128x256xbf16>, vector<16x256xf32> -> vector<16x256xf32>
    %219 = arith.truncf %166 : vector<16x128xf32> to vector<16x128xbf16>
    %c1_84 = arith.constant 1 : index
    %c0_85 = arith.constant 0 : index
    %c0_86 = arith.constant 0 : index
    %220 = vector.load %arg10[%c1_84, %c0_85, %c0_86] : memref<3x128x256xbf16, #tpu.memory_space<vmem>>, vector<1x128x256xbf16>
    %221 = vector.shape_cast %220 : vector<1x128x256xbf16> to vector<128x256xbf16>
    %cst_87 = arith.constant dense<0.000000e+00> : vector<16x256xf32>
    %222 = tpu.matmul %219, %221, %cst_87 {dimension_numbers = #tpu.dot_dimension_numbers<[1], [0], [0], [1], [0, 0, 1, 1], [], []>} : vector<16x128xbf16>, vector<128x256xbf16>, vector<16x256xf32> -> vector<16x256xf32>
    %223 = arith.addf %218, %222 : vector<16x256xf32>
    %c2_88 = arith.constant 2 : index
    %c0_89 = arith.constant 0 : index
    %c0_90 = arith.constant 0 : index
    %224 = vector.load %arg10[%c2_88, %c0_89, %c0_90] : memref<3x128x256xbf16, #tpu.memory_space<vmem>>, vector<1x128x256xbf16>
    %225 = vector.shape_cast %224 : vector<1x128x256xbf16> to vector<128x256xbf16>
    %cst_91 = arith.constant dense<0.000000e+00> : vector<16x256xf32>
    %226 = tpu.matmul %215, %225, %cst_91 {dimension_numbers = #tpu.dot_dimension_numbers<[1], [0], [0], [1], [0, 0, 1, 1], [], []>} : vector<16x128xbf16>, vector<128x256xbf16>, vector<16x256xf32> -> vector<16x256xf32>
    %227 = arith.addf %223, %226 : vector<16x256xf32>
    %c15_i32_92 = arith.constant 15 : i32
    %228 = tpu.dynamic_rotate %227 by %c15_i32_92 dim 0 : vector<16x256xf32>, i32 -> vector<16x256xf32>
    %229 = arith.maximumf %227, %228 : vector<16x256xf32>
    %c0_93 = arith.constant 0 : index
    %c0_94 = arith.constant 0 : index
    %230 = vector.load %arg11[%c0_93, %c0_94] : memref<8x16xbf16, #tpu.memory_space<vmem>>, vector<8x16xbf16>
    %231 = arith.truncf %229 : vector<16x256xf32> to vector<16x256xbf16>
    %cst_95 = arith.constant dense<0.000000e+00> : vector<8x256xf32>
    %232 = tpu.matmul %230, %231, %cst_95 {dimension_numbers = #tpu.dot_dimension_numbers<[1], [0], [0], [1], [0, 0, 1, 1], [], []>} : vector<8x16xbf16>, vector<16x256xbf16>, vector<8x256xf32> -> vector<8x256xf32>
    %c192_i32 = arith.constant 192 : i32
    %233 = tpu.dynamic_rotate %232 by %c192_i32 dim 1 : vector<8x256xf32>, i32 -> vector<8x256xf32>
    %234 = arith.maximumf %232, %233 : vector<8x256xf32>
    %235 = arith.truncf %234 : vector<8x256xf32> to vector<8x256xbf16>
    %c0_96 = arith.constant 0 : index
    %c0_97 = arith.constant 0 : index
    %236 = vector.load %arg12[%c0_96, %c0_97] : memref<256x128xbf16, #tpu.memory_space<vmem>>, vector<256x128xbf16>
    %cst_98 = arith.constant dense<0.000000e+00> : vector<8x128xf32>
    %237 = tpu.matmul %235, %236, %cst_98 {dimension_numbers = #tpu.dot_dimension_numbers<[1], [0], [0], [1], [0, 0, 1, 1], [], []>} : vector<8x256xbf16>, vector<256x128xbf16>, vector<8x128xf32> -> vector<8x128xf32>
    %c0_99 = arith.constant 0 : index
    %c0_100 = arith.constant 0 : index
    %238 = vector.load %arg13[%c0_99, %c0_100] : memref<3x128xf32, #tpu.memory_space<vmem>>, vector<3x128xf32>
    %239 = vector.extract_strided_slice %238 {offsets = [0, 0], sizes = [1, 128], strides = [1, 1]} : vector<3x128xf32> to vector<1x128xf32>
    %240 = vector.broadcast %239 : vector<1x128xf32> to vector<8x128xf32>
    %241 = arith.addf %237, %240 : vector<8x128xf32>
    %cst_101 = arith.constant 0.000000e+00 : f32
    %242 = vector.broadcast %cst_101 : f32 to vector<8x128xf32>
    %243 = arith.maximumf %241, %242 : vector<8x128xf32>
    %244 = vector.extract_strided_slice %238 {offsets = [1, 0], sizes = [1, 128], strides = [1, 1]} : vector<3x128xf32> to vector<1x128xf32>
    %245 = vector.broadcast %244 : vector<1x128xf32> to vector<8x128xf32>
    %246 = arith.mulf %243, %245 : vector<8x128xf32>
    %247 = vector.extract_strided_slice %238 {offsets = [2, 0], sizes = [1, 128], strides = [1, 1]} : vector<3x128xf32> to vector<1x128xf32>
    %248 = vector.broadcast %247 : vector<1x128xf32> to vector<8x128xf32>
    %249 = arith.addf %246, %248 : vector<8x128xf32>
    %250 = arith.truncf %249 : vector<8x128xf32> to vector<8x128xbf16>
    %c0_102 = arith.constant 0 : index
    %c0_103 = arith.constant 0 : index
    %251 = vector.load %arg14[%c0_102, %c0_103] : memref<128x128xbf16, #tpu.memory_space<vmem>>, vector<128x128xbf16>
    %cst_104 = arith.constant dense<0.000000e+00> : vector<8x128xf32>
    %252 = tpu.matmul %250, %251, %cst_104 {dimension_numbers = #tpu.dot_dimension_numbers<[1], [0], [0], [1], [0, 0, 1, 1], [], []>} : vector<8x128xbf16>, vector<128x128xbf16>, vector<8x128xf32> -> vector<8x128xf32>
    %c7_i32_105 = arith.constant 7 : i32
    %253 = tpu.dynamic_rotate %249 by %c7_i32_105 dim 0 : vector<8x128xf32>, i32 -> vector<8x128xf32>
    %254 = arith.truncf %253 : vector<8x128xf32> to vector<8x128xbf16>
    %c0_106 = arith.constant 0 : index
    %c0_107 = arith.constant 0 : index
    %255 = vector.load %arg15[%c0_106, %c0_107] : memref<128x128xbf16, #tpu.memory_space<vmem>>, vector<128x128xbf16>
    %cst_108 = arith.constant dense<0.000000e+00> : vector<8x128xf32>
    %256 = tpu.matmul %254, %255, %cst_108 {dimension_numbers = #tpu.dot_dimension_numbers<[1], [0], [0], [1], [0, 0, 1, 1], [], []>} : vector<8x128xbf16>, vector<128x128xbf16>, vector<8x128xf32> -> vector<8x128xf32>
    %257 = arith.addf %252, %256 : vector<8x128xf32>
    %c0_109 = arith.constant 0 : index
    %c0_110 = arith.constant 0 : index
    %258 = vector.load %arg16[%c0_109, %c0_110] : memref<1x128xf32, #tpu.memory_space<vmem>>, vector<1x128xf32>
    %259 = vector.broadcast %258 : vector<1x128xf32> to vector<8x128xf32>
    %260 = arith.addf %257, %259 : vector<8x128xf32>
    %cst_111 = arith.constant 0.000000e+00 : f32
    %261 = vector.broadcast %cst_111 : f32 to vector<8x128xf32>
    %262 = arith.maximumf %260, %261 : vector<8x128xf32>
    %263 = arith.truncf %262 : vector<8x128xf32> to vector<8x128xbf16>
    %c0_112 = arith.constant 0 : index
    %c0_113 = arith.constant 0 : index
    %264 = vector.load %arg17[%c0_112, %c0_113] : memref<128x128xbf16, #tpu.memory_space<vmem>>, vector<128x128xbf16>
    %cst_114 = arith.constant dense<0.000000e+00> : vector<8x128xf32>
    %265 = tpu.matmul %263, %264, %cst_114 {dimension_numbers = #tpu.dot_dimension_numbers<[1], [0], [0], [1], [0, 0, 1, 1], [], []>} : vector<8x128xbf16>, vector<128x128xbf16>, vector<8x128xf32> -> vector<8x128xf32>
    %c0_115 = arith.constant 0 : index
    %c0_116 = arith.constant 0 : index
    %266 = vector.load %arg18[%c0_115, %c0_116] : memref<1x128xf32, #tpu.memory_space<vmem>>, vector<1x128xf32>
    %267 = vector.broadcast %266 : vector<1x128xf32> to vector<8x128xf32>
    %268 = arith.addf %265, %267 : vector<8x128xf32>
    %c0_117 = arith.constant 0 : index
    %c0_118 = arith.constant 0 : index
    %269 = vector.load %arg19[%c0_117, %c0_118] : memref<8x128xf32, #tpu.memory_space<vmem>>, vector<8x128xf32>
    tpu.vector_store %arg19[%c0_117, %c0_118], %268 {strides = array<i32>} : memref<8x128xf32, #tpu.memory_space<vmem>>, vector<8x128xf32>,
    return
  }
  func.func @transform_0(%arg0: i32) -> (i32, i32) {
    %c0_i32 = arith.constant 0 : i32
    %c0_i32_0 = arith.constant 0 : i32
    return %arg0, %c0_i32 : i32, i32
  }
  func.func @transform_1(%arg0: i32) -> (i32, i32, i32) {
    %c0_i32 = arith.constant 0 : i32
    %c0_i32_0 = arith.constant 0 : i32
    %c0_i32_1 = arith.constant 0 : i32
    %c0_i32_2 = arith.constant 0 : i32
    return %c0_i32, %c0_i32_0, %c0_i32_1 : i32, i32, i32
  }
  func.func @transform_2(%arg0: i32) -> (i32, i32) {
    %c0_i32 = arith.constant 0 : i32
    %c0_i32_0 = arith.constant 0 : i32
    %c0_i32_1 = arith.constant 0 : i32
    return %c0_i32, %c0_i32_0 : i32, i32
  }
  func.func @transform_3(%arg0: i32) -> (i32, i32) {
    %c0_i32 = arith.constant 0 : i32
    %c0_i32_0 = arith.constant 0 : i32
    %c0_i32_1 = arith.constant 0 : i32
    return %c0_i32, %c0_i32_0 : i32, i32
  }
  func.func @transform_4(%arg0: i32) -> (i32, i32) {
    %c0_i32 = arith.constant 0 : i32
    %c0_i32_0 = arith.constant 0 : i32
    %c0_i32_1 = arith.constant 0 : i32
    return %c0_i32, %c0_i32_0 : i32, i32
  }
  func.func @transform_5(%arg0: i32) -> (i32, i32, i32) {
    %c0_i32 = arith.constant 0 : i32
    %c0_i32_0 = arith.constant 0 : i32
    %c0_i32_1 = arith.constant 0 : i32
    %c0_i32_2 = arith.constant 0 : i32
    return %c0_i32, %c0_i32_0, %c0_i32_1 : i32, i32, i32
  }
  func.func @transform_6(%arg0: i32) -> (i32, i32) {
    %c0_i32 = arith.constant 0 : i32
    %c0_i32_0 = arith.constant 0 : i32
    %c0_i32_1 = arith.constant 0 : i32
    return %c0_i32, %c0_i32_0 : i32, i32
  }
  func.func @transform_7(%arg0: i32) -> (i32, i32) {
    %c0_i32 = arith.constant 0 : i32
    %c0_i32_0 = arith.constant 0 : i32
    %c0_i32_1 = arith.constant 0 : i32
    return %c0_i32, %c0_i32_0 : i32, i32
  }
  func.func @transform_8(%arg0: i32) -> (i32, i32) {
    %c0_i32 = arith.constant 0 : i32
    %c0_i32_0 = arith.constant 0 : i32
    %c0_i32_1 = arith.constant 0 : i32
    return %c0_i32, %c0_i32_0 : i32, i32
  }
  func.func @transform_9(%arg0: i32) -> (i32, i32, i32) {
    %c0_i32 = arith.constant 0 : i32
    %c0_i32_0 = arith.constant 0 : i32
    %c0_i32_1 = arith.constant 0 : i32
    %c0_i32_2 = arith.constant 0 : i32
    return %c0_i32, %c0_i32_0, %c0_i32_1 : i32, i32, i32
  }
  func.func @transform_10(%arg0: i32) -> (i32, i32) {
    %c0_i32 = arith.constant 0 : i32
    %c0_i32_0 = arith.constant 0 : i32
    %c0_i32_1 = arith.constant 0 : i32
    return %c0_i32, %c0_i32_0 : i32, i32
  }
  func.func @transform_11(%arg0: i32) -> (i32, i32) {
    %c0_i32 = arith.constant 0 : i32
    %c0_i32_0 = arith.constant 0 : i32
    %c0_i32_1 = arith.constant 0 : i32
    return %c0_i32, %c0_i32_0 : i32, i32
  }
  func.func @transform_12(%arg0: i32) -> (i32, i32) {
    %c0_i32 = arith.constant 0 : i32
    %c0_i32_0 = arith.constant 0 : i32
    %c0_i32_1 = arith.constant 0 : i32
    return %c0_i32, %c0_i32_0 : i32, i32
  }
  func.func @transform_13(%arg0: i32) -> (i32, i32) {
    %c0_i32 = arith.constant 0 : i32
    %c0_i32_0 = arith.constant 0 : i32
    %c0_i32_1 = arith.constant 0 : i32
    return %c0_i32, %c0_i32_0 : i32, i32
  }
  func.func @transform_14(%arg0: i32) -> (i32, i32) {
    %c0_i32 = arith.constant 0 : i32
    %c0_i32_0 = arith.constant 0 : i32
    %c0_i32_1 = arith.constant 0 : i32
    return %c0_i32, %c0_i32_0 : i32, i32
  }
  func.func @transform_15(%arg0: i32) -> (i32, i32) {
    %c0_i32 = arith.constant 0 : i32
    %c0_i32_0 = arith.constant 0 : i32
    %c0_i32_1 = arith.constant 0 : i32
    return %c0_i32, %c0_i32_0 : i32, i32
  }
  func.func @transform_16(%arg0: i32) -> (i32, i32) {
    %c0_i32 = arith.constant 0 : i32
    %c0_i32_0 = arith.constant 0 : i32
    %c0_i32_1 = arith.constant 0 : i32
    return %c0_i32, %c0_i32_0 : i32, i32
  }
  func.func @transform_17(%arg0: i32) -> (i32, i32) {
    %c0_i32 = arith.constant 0 : i32
    %c0_i32_0 = arith.constant 0 : i32
    %c0_i32_1 = arith.constant 0 : i32
    return %c0_i32, %c0_i32_0 : i32, i32
  }
  func.func @transform_18(%arg0: i32) -> (i32, i32) {
    %c0_i32 = arith.constant 0 : i32
    %c0_i32_0 = arith.constant 0 : i32
    return %arg0, %c0_i32 : i32, i32
  }
}

</mosaic_0001>

<llo_original>
// kernel: patch_cnn_forward.1
$region0: #{patch_cnn_forward.1}
  #allocation0 [shape = 'u32[]', space=smem, size = 0x4, offset = 0x4, fixed_abs, tag = 'smem constant byte address 0x4 - core index']
  #allocation1 [shape = 'u32[144,128]{1,0:T(1,128)}', space=vmem, size = 0x12000, scoped, tag = 'internal scratch']
  %s0 = inlined_call_operand.vmem [shape: f32[128,128], index: 0, kind: input, shape index: {}]
  %s1 = inlined_call_operand.vmem [shape: bf16[3,128,256], index: 1, kind: input, shape index: {}]
  %s2 = inlined_call_operand.vmem [shape: bf16[32,64], index: 2, kind: input, shape index: {}]
  %s3 = inlined_call_operand.vmem [shape: bf16[256,128], index: 3, kind: input, shape index: {}]
  %s4 = inlined_call_operand.vmem [shape: f32[3,128], index: 4, kind: input, shape index: {}]
  %s5 = inlined_call_operand.vmem [shape: bf16[3,128,256], index: 5, kind: input, shape index: {}]
  %s6 = inlined_call_operand.vmem [shape: bf16[16,32], index: 6, kind: input, shape index: {}]
  %s7 = inlined_call_operand.vmem [shape: bf16[256,128], index: 7, kind: input, shape index: {}]
  %s8 = inlined_call_operand.vmem [shape: f32[3,128], index: 8, kind: input, shape index: {}]
  %s9 = inlined_call_operand.vmem [shape: bf16[3,128,256], index: 9, kind: input, shape index: {}]
  %s10 = inlined_call_operand.vmem [shape: bf16[8,16], index: 10, kind: input, shape index: {}]
  %s11 = inlined_call_operand.vmem [shape: bf16[256,128], index: 11, kind: input, shape index: {}]
  %s12 = inlined_call_operand.vmem [shape: f32[3,128], index: 12, kind: input, shape index: {}]
  %s13 = inlined_call_operand.vmem [shape: bf16[128,128], index: 13, kind: input, shape index: {}]
  %s14 = inlined_call_operand.vmem [shape: bf16[128,128], index: 14, kind: input, shape index: {}]
  %s15 = inlined_call_operand.vmem [shape: f32[1,128], index: 15, kind: input, shape index: {}]
  %s16 = inlined_call_operand.vmem [shape: bf16[128,128], index: 16, kind: input, shape index: {}]
  %s17 = inlined_call_operand.vmem [shape: f32[1,128], index: 17, kind: input, shape index: {}]
  %s18 = inlined_call_operand.vmem [shape: f32[16,128], index: 18, kind: output, shape index: {}]
  %s19 = sld [smem:[#allocation0]]
  $region105: #{patch_cnn_forward.1} parent=0
    _
  %s21 = ssub.s32 1, %s19
  %s22 = scalar_select 0, %s21, %s19
  loop: start=0, step=1, limit=4
  $region2: #{patch_cnn_forward.1} parent=0 // loop_pre_header
    _
  $region3: #{patch_cnn_forward.1} parent=0 // loop_header
    %s24 = sphi 0, %s28
    %p25 = scmp.ge.s32.totalorder %s24, 4
    %s34 = sphi 0, %s36
    %s37 = sphi 0, %s34
    %s38 = sphi 0, %s37
    %s54 = sphi 0, %s38
    %s58 = sphi 0, %s58
    %s60 = sphi 0, %s58
    %s61 = sphi 0, %s60
    %s75 = sphi 0, %s61
    %s79 = sphi 0, %s79
    %s81 = sphi 0, %s79
    %s82 = sphi 0, %s81
    %s96 = sphi 0, %s82
    %s100 = sphi 0, %s100
    %s102 = sphi 0, %s100
    %s103 = sphi 0, %s102
    %s117 = sphi 0, %s103
    %s121 = sphi 0, %s121
    %s123 = sphi 0, %s121
    %s124 = sphi 0, %s123
    %s138 = sphi 0, %s124
    %s142 = sphi 0, %s142
    %s144 = sphi 0, %s142
    %s145 = sphi 0, %s144
    %s159 = sphi 0, %s145
    %s163 = sphi 0, %s163
    %s165 = sphi 0, %s163
    %s166 = sphi 0, %s165
    %s180 = sphi 0, %s166
    %s184 = sphi 0, %s184
    %s186 = sphi 0, %s184
    %s187 = sphi 0, %s186
    %s201 = sphi 0, %s187
    %s205 = sphi 0, %s205
    %s207 = sphi 0, %s205
    %s208 = sphi 0, %s207
    %s222 = sphi 0, %s208
    %s226 = sphi 0, %s226
    %s228 = sphi 0, %s226
    %s229 = sphi 0, %s228
    %s243 = sphi 0, %s229
    %s247 = sphi 0, %s247
    %s249 = sphi 0, %s247
    %s250 = sphi 0, %s249
    %s264 = sphi 0, %s250
    %s268 = sphi 0, %s268
    %s270 = sphi 0, %s268
    %s271 = sphi 0, %s270
    %s285 = sphi 0, %s271
    %s289 = sphi 0, %s289
    %s291 = sphi 0, %s289
    %s292 = sphi 0, %s291
    %s306 = sphi 0, %s292
    %s310 = sphi 0, %s310
    %s312 = sphi 0, %s310
    %s313 = sphi 0, %s312
    %s327 = sphi 0, %s313
    %s331 = sphi 0, %s331
    %s333 = sphi 0, %s331
    %s334 = sphi 0, %s333
    %s348 = sphi 0, %s334
    %s352 = sphi 0, %s352
    %s354 = sphi 0, %s352
    %s355 = sphi 0, %s354
    %s369 = sphi 0, %s355
    %s373 = sphi 0, %s373
    %s375 = sphi 0, %s373
    %s376 = sphi 0, %s375
    %s390 = sphi 0, %s376
    %s394 = sphi 0, %s394
    %s396 = sphi 0, %s394
    %s397 = sphi 0, %s396
    %s411 = sphi 0, %s397
    %s417 = sphi 0, %s419
    %s420 = sphi 0, %s417
    %s421 = sphi 0, %s420
    %s437 = sphi 0, %s421
  $region4: #{patch_cnn_forward.1} parent=0 // loop_header_branch
    %27 = sbr.rel (%p25) target = $region8
  $region5: #{patch_cnn_forward.1} parent=0 // loop_body
    %s29 = ssub.s32 %s24, 1
    %s30 = ssub.s32 %s24, 2
    %s31 = sadd.s32 %s24, 1
    %s32 = ssub.s32 %s24, %s31
    %p33 = scmp.eq.s32.totalorder %s32, 0
    %s35 = sadd.s32 %s34, 1
    %s36 = scalar_select %p33, %s34, %s35
    %p39 = pneg %p33
    %p40 = scmp.eq.s32.totalorder %s24, 1
    %p41 = por %p39, %p40
    %p42 = scmp.ne.s32.totalorder %s34, %s37
    %p43 = scmp.eq.s32.totalorder %s24, 0
    %p44 = por %p42, %p43
    %p45 = scmp.ne.s32.totalorder %s34, %s37
    %p46 = scmp.eq.s32.totalorder %s29, 1
    %p47 = por %p45, %p46
    %p48 = scmp.ne.s32.totalorder %s37, %s38
    %p49 = scmp.eq.s32.totalorder %s29, 0
    %p50 = por %p48, %p49
    %p51 = scmp.ne.s32.totalorder %s37, %s38
    %p52 = scmp.eq.s32.totalorder %s30, 1
    %p53 = por %p51, %p52
    %p55 = scmp.ne.s32.totalorder %s38, %s54
    %p56 = scmp.eq.s32.totalorder %s30, 0
    %p57 = por %p55, %p56
    %s59 = sadd.s32 %s58, 1
    %p62 = scmp.eq.s32.totalorder %s24, 1
    %p63 = scmp.ne.s32.totalorder %s58, %s60
    %p64 = scmp.eq.s32.totalorder %s24, 0
    %p65 = por %p63, %p64
    %p66 = scmp.ne.s32.totalorder %s58, %s60
    %p67 = scmp.eq.s32.totalorder %s29, 1
    %p68 = por %p66, %p67
    %p69 = scmp.ne.s32.totalorder %s60, %s61
    %p70 = scmp.eq.s32.totalorder %s29, 0
    %p71 = por %p69, %p70
    %p72 = scmp.ne.s32.totalorder %s60, %s61
    %p73 = scmp.eq.s32.totalorder %s30, 1
    %p74 = por %p72, %p73
    %p76 = scmp.ne.s32.totalorder %s61, %s75
    %p77 = scmp.eq.s32.totalorder %s30, 0
    %p78 = por %p76, %p77
    %s80 = sadd.s32 %s79, 1
    %p83 = scmp.eq.s32.totalorder %s24, 1
    %p84 = scmp.ne.s32.totalorder %s79, %s81
    %p85 = scmp.eq.s32.totalorder %s24, 0
    %p86 = por %p84, %p85
    %p87 = scmp.ne.s32.totalorder %s79, %s81
    %p88 = scmp.eq.s32.totalorder %s29, 1
    %p89 = por %p87, %p88
    %p90 = scmp.ne.s32.totalorder %s81, %s82
    %p91 = scmp.eq.s32.totalorder %s29, 0
    %p92 = por %p90, %p91
    %p93 = scmp.ne.s32.totalorder %s81, %s82
    %p94 = scmp.eq.s32.totalorder %s30, 1
    %p95 = por %p93, %p94
    %p97 = scmp.ne.s32.totalorder %s82, %s96
    %p98 = scmp.eq.s32.totalorder %s30, 0
    %p99 = por %p97, %p98
    %s101 = sadd.s32 %s100, 1
    %p104 = scmp.eq.s32.totalorder %s24, 1
    %p105 = scmp.ne.s32.totalorder %s100, %s102
    %p106 = scmp.eq.s32.totalorder %s24, 0
    %p107 = por %p105, %p106
    %p108 = scmp.ne.s32.totalorder %s100, %s102
    %p109 = scmp.eq.s32.totalorder %s29, 1
    %p110 = por %p108, %p109
    %p111 = scmp.ne.s32.totalorder %s102, %s103
    %p112 = scmp.eq.s32.totalorder %s29, 0
    %p113 = por %p111, %p112
    %p114 = scmp.ne.s32.totalorder %s102, %s103
    %p115 = scmp.eq.s32.totalorder %s30, 1
    %p116 = por %p114, %p115
    %p118 = scmp.ne.s32.totalorder %s103, %s117
    %p119 = scmp.eq.s32.totalorder %s30, 0
    %p120 = por %p118, %p119
    %s122 = sadd.s32 %s121, 1
    %p125 = scmp.eq.s32.totalorder %s24, 1
    %p126 = scmp.ne.s32.totalorder %s121, %s123
    %p127 = scmp.eq.s32.totalorder %s24, 0
    %p128 = por %p126, %p127
    %p129 = scmp.ne.s32.totalorder %s121, %s123
    %p130 = scmp.eq.s32.totalorder %s29, 1
    %p131 = por %p129, %p130
    %p132 = scmp.ne.s32.totalorder %s123, %s124
    %p133 = scmp.eq.s32.totalorder %s29, 0
    %p134 = por %p132, %p133
    %p135 = scmp.ne.s32.totalorder %s123, %s124
    %p136 = scmp.eq.s32.totalorder %s30, 1
    %p137 = por %p135, %p136
    %p139 = scmp.ne.s32.totalorder %s124, %s138
    %p140 = scmp.eq.s32.totalorder %s30, 0
    %p141 = por %p139, %p140
    %s143 = sadd.s32 %s142, 1
    %p146 = scmp.eq.s32.totalorder %s24, 1
    %p147 = scmp.ne.s32.totalorder %s142, %s144
    %p148 = scmp.eq.s32.totalorder %s24, 0
    %p149 = por %p147, %p148
    %p150 = scmp.ne.s32.totalorder %s142, %s144
    %p151 = scmp.eq.s32.totalorder %s29, 1
    %p152 = por %p150, %p151
    %p153 = scmp.ne.s32.totalorder %s144, %s145
    %p154 = scmp.eq.s32.totalorder %s29, 0
    %p155 = por %p153, %p154
    %p156 = scmp.ne.s32.totalorder %s144, %s145
    %p157 = scmp.eq.s32.totalorder %s30, 1
    %p158 = por %p156, %p157
    %p160 = scmp.ne.s32.totalorder %s145, %s159
    %p161 = scmp.eq.s32.totalorder %s30, 0
    %p162 = por %p160, %p161
    %s164 = sadd.s32 %s163, 1
    %p167 = scmp.eq.s32.totalorder %s24, 1
    %p168 = scmp.ne.s32.totalorder %s163, %s165
    %p169 = scmp.eq.s32.totalorder %s24, 0
    %p170 = por %p168, %p169
    %p171 = scmp.ne.s32.totalorder %s163, %s165
    %p172 = scmp.eq.s32.totalorder %s29, 1
    %p173 = por %p171, %p172
    %p174 = scmp.ne.s32.totalorder %s165, %s166
    %p175 = scmp.eq.s32.totalorder %s29, 0
    %p176 = por %p174, %p175
    %p177 = scmp.ne.s32.totalorder %s165, %s166
    %p178 = scmp.eq.s32.totalorder %s30, 1
    %p179 = por %p177, %p178
    %p181 = scmp.ne.s32.totalorder %s166, %s180
    %p182 = scmp.eq.s32.totalorder %s30, 0
    %p183 = por %p181, %p182
    %s185 = sadd.s32 %s184, 1
    %p188 = scmp.eq.s32.totalorder %s24, 1
    %p189 = scmp.ne.s32.totalorder %s184, %s186
    %p190 = scmp.eq.s32.totalorder %s24, 0
    %p191 = por %p189, %p190
    %p192 = scmp.ne.s32.totalorder %s184, %s186
    %p193 = scmp.eq.s32.totalorder %s29, 1
    %p194 = por %p192, %p193
    %p195 = scmp.ne.s32.totalorder %s186, %s187
    %p196 = scmp.eq.s32.totalorder %s29, 0
    %p197 = por %p195, %p196
    %p198 = scmp.ne.s32.totalorder %s186, %s187
    %p199 = scmp.eq.s32.totalorder %s30, 1
    %p200 = por %p198, %p199
    %p202 = scmp.ne.s32.totalorder %s187, %s201
    %p203 = scmp.eq.s32.totalorder %s30, 0
    %p204 = por %p202, %p203
    %s206 = sadd.s32 %s205, 1
    %p209 = scmp.eq.s32.totalorder %s24, 1
    %p210 = scmp.ne.s32.totalorder %s205, %s207
    %p211 = scmp.eq.s32.totalorder %s24, 0
    %p212 = por %p210, %p211
    %p213 = scmp.ne.s32.totalorder %s205, %s207
    %p214 = scmp.eq.s32.totalorder %s29, 1
    %p215 = por %p213, %p214
    %p216 = scmp.ne.s32.totalorder %s207, %s208
    %p217 = scmp.eq.s32.totalorder %s29, 0
    %p218 = por %p216, %p217
    %p219 = scmp.ne.s32.totalorder %s207, %s208
    %p220 = scmp.eq.s32.totalorder %s30, 1
    %p221 = por %p219, %p220
    %p223 = scmp.ne.s32.totalorder %s208, %s222
    %p224 = scmp.eq.s32.totalorder %s30, 0
    %p225 = por %p223, %p224
    %s227 = sadd.s32 %s226, 1
    %p230 = scmp.eq.s32.totalorder %s24, 1
    %p231 = scmp.ne.s32.totalorder %s226, %s228
    %p232 = scmp.eq.s32.totalorder %s24, 0
    %p233 = por %p231, %p232
    %p234 = scmp.ne.s32.totalorder %s226, %s228
    %p235 = scmp.eq.s32.totalorder %s29, 1
    %p236 = por %p234, %p235
    %p237 = scmp.ne.s32.totalorder %s228, %s229
    %p238 = scmp.eq.s32.totalorder %s29, 0
    %p239 = por %p237, %p238
    %p240 = scmp.ne.s32.totalorder %s228, %s229
    %p241 = scmp.eq.s32.totalorder %s30, 1
    %p242 = por %p240, %p241
    %p244 = scmp.ne.s32.totalorder %s229, %s243
    %p245 = scmp.eq.s32.totalorder %s30, 0
    %p246 = por %p244, %p245
    %s248 = sadd.s32 %s247, 1
    %p251 = scmp.eq.s32.totalorder %s24, 1
    %p252 = scmp.ne.s32.totalorder %s247, %s249
    %p253 = scmp.eq.s32.totalorder %s24, 0
    %p254 = por %p252, %p253
    %p255 = scmp.ne.s32.totalorder %s247, %s249
    %p256 = scmp.eq.s32.totalorder %s29, 1
    %p257 = por %p255, %p256
    %p258 = scmp.ne.s32.totalorder %s249, %s250
    %p259 = scmp.eq.s32.totalorder %s29, 0
    %p260 = por %p258, %p259
    %p261 = scmp.ne.s32.totalorder %s249, %s250
    %p262 = scmp.eq.s32.totalorder %s30, 1
    %p263 = por %p261, %p262
    %p265 = scmp.ne.s32.totalorder %s250, %s264
    %p266 = scmp.eq.s32.totalorder %s30, 0
    %p267 = por %p265, %p266
    %s269 = sadd.s32 %s268, 1
    %p272 = scmp.eq.s32.totalorder %s24, 1
    %p273 = scmp.ne.s32.totalorder %s268, %s270
    %p274 = scmp.eq.s32.totalorder %s24, 0
    %p275 = por %p273, %p274
    %p276 = scmp.ne.s32.totalorder %s268, %s270
    %p277 = scmp.eq.s32.totalorder %s29, 1
    %p278 = por %p276, %p277
    %p279 = scmp.ne.s32.totalorder %s270, %s271
    %p280 = scmp.eq.s32.totalorder %s29, 0
    %p281 = por %p279, %p280
    %p282 = scmp.ne.s32.totalorder %s270, %s271
    %p283 = scmp.eq.s32.totalorder %s30, 1
    %p284 = por %p282, %p283
    %p286 = scmp.ne.s32.totalorder %s271, %s285
    %p287 = scmp.eq.s32.totalorder %s30, 0
    %p288 = por %p286, %p287
    %s290 = sadd.s32 %s289, 1
    %p293 = scmp.eq.s32.totalorder %s24, 1
    %p294 = scmp.ne.s32.totalorder %s289, %s291
    %p295 = scmp.eq.s32.totalorder %s24, 0
    %p296 = por %p294, %p295
    %p297 = scmp.ne.s32.totalorder %s289, %s291
    %p298 = scmp.eq.s32.totalorder %s29, 1
    %p299 = por %p297, %p298
    %p300 = scmp.ne.s32.totalorder %s291, %s292
    %p301 = scmp.eq.s32.totalorder %s29, 0
    %p302 = por %p300, %p301
    %p303 = scmp.ne.s32.totalorder %s291, %s292
    %p304 = scmp.eq.s32.totalorder %s30, 1
    %p305 = por %p303, %p304
    %p307 = scmp.ne.s32.totalorder %s292, %s306
    %p308 = scmp.eq.s32.totalorder %s30, 0
    %p309 = por %p307, %p308
    %s311 = sadd.s32 %s310, 1
    %p314 = scmp.eq.s32.totalorder %s24, 1
    %p315 = scmp.ne.s32.totalorder %s310, %s312
    %p316 = scmp.eq.s32.totalorder %s24, 0
    %p317 = por %p315, %p316
    %p318 = scmp.ne.s32.totalorder %s310, %s312
    %p319 = scmp.eq.s32.totalorder %s29, 1
    %p320 = por %p318, %p319
    %p321 = scmp.ne.s32.totalorder %s312, %s313
    %p322 = scmp.eq.s32.totalorder %s29, 0
    %p323 = por %p321, %p322
    %p324 = scmp.ne.s32.totalorder %s312, %s313
    %p325 = scmp.eq.s32.totalorder %s30, 1
    %p326 = por %p324, %p325
    %p328 = scmp.ne.s32.totalorder %s313, %s327
    %p329 = scmp.eq.s32.totalorder %s30, 0
    %p330 = por %p328, %p329
    %s332 = sadd.s32 %s331, 1
    %p335 = scmp.eq.s32.totalorder %s24, 1
    %p336 = scmp.ne.s32.totalorder %s331, %s333
    %p337 = scmp.eq.s32.totalorder %s24, 0
    %p338 = por %p336, %p337
    %p339 = scmp.ne.s32.totalorder %s331, %s333
    %p340 = scmp.eq.s32.totalorder %s29, 1
    %p341 = por %p339, %p340
    %p342 = scmp.ne.s32.totalorder %s333, %s334
    %p343 = scmp.eq.s32.totalorder %s29, 0
    %p344 = por %p342, %p343
    %p345 = scmp.ne.s32.totalorder %s333, %s334
    %p346 = scmp.eq.s32.totalorder %s30, 1
    %p347 = por %p345, %p346
    %p349 = scmp.ne.s32.totalorder %s334, %s348
    %p350 = scmp.eq.s32.totalorder %s30, 0
    %p351 = por %p349, %p350
    %s353 = sadd.s32 %s352, 1
    %p356 = scmp.eq.s32.totalorder %s24, 1
    %p357 = scmp.ne.s32.totalorder %s352, %s354
    %p358 = scmp.eq.s32.totalorder %s24, 0
    %p359 = por %p357, %p358
    %p360 = scmp.ne.s32.totalorder %s352, %s354
    %p361 = scmp.eq.s32.totalorder %s29, 1
    %p362 = por %p360, %p361
    %p363 = scmp.ne.s32.totalorder %s354, %s355
    %p364 = scmp.eq.s32.totalorder %s29, 0
    %p365 = por %p363, %p364
    %p366 = scmp.ne.s32.totalorder %s354, %s355
    %p367 = scmp.eq.s32.totalorder %s30, 1
    %p368 = por %p366, %p367
    %p370 = scmp.ne.s32.totalorder %s355, %s369
    %p371 = scmp.eq.s32.totalorder %s30, 0
    %p372 = por %p370, %p371
    %s374 = sadd.s32 %s373, 1
    %p377 = scmp.eq.s32.totalorder %s24, 1
    %p378 = scmp.ne.s32.totalorder %s373, %s375
    %p379 = scmp.eq.s32.totalorder %s24, 0
    %p380 = por %p378, %p379
    %p381 = scmp.ne.s32.totalorder %s373, %s375
    %p382 = scmp.eq.s32.totalorder %s29, 1
    %p383 = por %p381, %p382
    %p384 = scmp.ne.s32.totalorder %s375, %s376
    %p385 = scmp.eq.s32.totalorder %s29, 0
    %p386 = por %p384, %p385
    %p387 = scmp.ne.s32.totalorder %s375, %s376
    %p388 = scmp.eq.s32.totalorder %s30, 1
    %p389 = por %p387, %p388
    %p391 = scmp.ne.s32.totalorder %s376, %s390
    %p392 = scmp.eq.s32.totalorder %s30, 0
    %p393 = por %p391, %p392
    %s395 = sadd.s32 %s394, 1
    %p398 = scmp.eq.s32.totalorder %s24, 1
    %p399 = scmp.ne.s32.totalorder %s394, %s396
    %p400 = scmp.eq.s32.totalorder %s24, 0
    %p401 = por %p399, %p400
    %p402 = scmp.ne.s32.totalorder %s394, %s396
    %p403 = scmp.eq.s32.totalorder %s29, 1
    %p404 = por %p402, %p403
    %p405 = scmp.ne.s32.totalorder %s396, %s397
    %p406 = scmp.eq.s32.totalorder %s29, 0
    %p407 = por %p405, %p406
    %p408 = scmp.ne.s32.totalorder %s396, %s397
    %p409 = scmp.eq.s32.totalorder %s30, 1
    %p410 = por %p408, %p409
    %p412 = scmp.ne.s32.totalorder %s397, %s411
    %p413 = scmp.eq.s32.totalorder %s30, 0
    %p414 = por %p412, %p413
    %s415 = ssub.s32 %s24, %s31
    %p416 = scmp.eq.s32.totalorder %s415, 0
    %s418 = sadd.s32 %s417, 1
    %s419 = scalar_select %p416, %s417, %s418
    %p422 = pneg %p416
    %p423 = scmp.eq.s32.totalorder %s24, 1
    %p424 = por %p422, %p423
    %p425 = scmp.ne.s32.totalorder %s417, %s420
    %p426 = scmp.eq.s32.totalorder %s24, 0
    %p427 = por %p425, %p426
    %p428 = scmp.ne.s32.totalorder %s417, %s420
    %p429 = scmp.eq.s32.totalorder %s29, 1
    %p430 = por %p428, %p429
    %p431 = scmp.ne.s32.totalorder %s420, %s421
    %p432 = scmp.eq.s32.totalorder %s29, 0
    %p433 = por %p431, %p432
    %p434 = scmp.ne.s32.totalorder %s420, %s421
    %p435 = scmp.eq.s32.totalorder %s30, 1
    %p436 = por %p434, %p435
    %p438 = scmp.ne.s32.totalorder %s421, %s437
    %p439 = scmp.eq.s32.totalorder %s30, 0
    %p440 = por %p438, %p439
    %p441 = scmp.le.s32.totalorder 1, %s24
    %p442 = scmp.lt.s32.totalorder %s24, 3
    %p443 = pnand %p441, %p442
    %p444 = pneg %p443
    // Predicated region
    $region9: #{patch_cnn_forward.1} parent=5 // pred_check
      _
    $region10: #{patch_cnn_forward.1} parent=5 // pred_check_branch
      %446 = sbr.rel (%p443) target = $region12
    $region11: #{patch_cnn_forward.1} parent=5 // pred_region
      %s447 = ssub.s32 %s24, 1
      // Predicated region
      $region13: #{patch_cnn_forward.1} parent=11 // pred_check
        %p448 = pneg %p71
      $region14: #{patch_cnn_forward.1} parent=11 // pred_check_branch
        %450 = sbr.rel (%p448) target = $region16
      $region15: #{patch_cnn_forward.1} parent=11 // pred_region
        _
      $region16: #{patch_cnn_forward.1} parent=11 // pred_fallthru
        _
      // Predicated region
      $region17: #{patch_cnn_forward.1} parent=11 // pred_check
        %p451 = pneg %p92
      $region18: #{patch_cnn_forward.1} parent=11 // pred_check_branch
        %453 = sbr.rel (%p451) target = $region20
      $region19: #{patch_cnn_forward.1} parent=11 // pred_region
        _
      $region20: #{patch_cnn_forward.1} parent=11 // pred_fallthru
        _
      // Predicated region
      $region21: #{patch_cnn_forward.1} parent=11 // pred_check
        %p454 = pneg %p113
      $region22: #{patch_cnn_forward.1} parent=11 // pred_check_branch
        %456 = sbr.rel (%p454) target = $region24
      $region23: #{patch_cnn_forward.1} parent=11 // pred_region
        _
      $region24: #{patch_cnn_forward.1} parent=11 // pred_fallthru
        _
      // Predicated region
      $region25: #{patch_cnn_forward.1} parent=11 // pred_check
        %p457 = pneg %p134
      $region26: #{patch_cnn_forward.1} parent=11 // pred_check_branch
        %459 = sbr.rel (%p457) target = $region28
      $region27: #{patch_cnn_forward.1} parent=11 // pred_region
        _
      $region28: #{patch_cnn_forward.1} parent=11 // pred_fallthru
        _
      // Predicated region
      $region29: #{patch_cnn_forward.1} parent=11 // pred_check
        %p460 = pneg %p155
      $region30: #{patch_cnn_forward.1} parent=11 // pred_check_branch
        %462 = sbr.rel (%p460) target = $region32
      $region31: #{patch_cnn_forward.1} parent=11 // pred_region
        _
      $region32: #{patch_cnn_forward.1} parent=11 // pred_fallthru
        _
      // Predicated region
      $region33: #{patch_cnn_forward.1} parent=11 // pred_check
        %p463 = pneg %p176
      $region34: #{patch_cnn_forward.1} parent=11 // pred_check_branch
        %465 = sbr.rel (%p463) target = $region36
      $region35: #{patch_cnn_forward.1} parent=11 // pred_region
        _
      $region36: #{patch_cnn_forward.1} parent=11 // pred_fallthru
        _
      // Predicated region
      $region37: #{patch_cnn_forward.1} parent=11 // pred_check
        %p466 = pneg %p197
      $region38: #{patch_cnn_forward.1} parent=11 // pred_check_branch
        %468 = sbr.rel (%p466) target = $region40
      $region39: #{patch_cnn_forward.1} parent=11 // pred_region
        _
      $region40: #{patch_cnn_forward.1} parent=11 // pred_fallthru
        _
      // Predicated region
      $region41: #{patch_cnn_forward.1} parent=11 // pred_check
        %p469 = pneg %p218
      $region42: #{patch_cnn_forward.1} parent=11 // pred_check_branch
        %471 = sbr.rel (%p469) target = $region44
      $region43: #{patch_cnn_forward.1} parent=11 // pred_region
        _
      $region44: #{patch_cnn_forward.1} parent=11 // pred_fallthru
        _
      // Predicated region
      $region45: #{patch_cnn_forward.1} parent=11 // pred_check
        %p472 = pneg %p239
      $region46: #{patch_cnn_forward.1} parent=11 // pred_check_branch
        %474 = sbr.rel (%p472) target = $region48
      $region47: #{patch_cnn_forward.1} parent=11 // pred_region
        _
      $region48: #{patch_cnn_forward.1} parent=11 // pred_fallthru
        _
      // Predicated region
      $region49: #{patch_cnn_forward.1} parent=11 // pred_check
        %p475 = pneg %p260
      $region50: #{patch_cnn_forward.1} parent=11 // pred_check_branch
        %477 = sbr.rel (%p475) target = $region52
      $region51: #{patch_cnn_forward.1} parent=11 // pred_region
        _
      $region52: #{patch_cnn_forward.1} parent=11 // pred_fallthru
        _
      // Predicated region
      $region53: #{patch_cnn_forward.1} parent=11 // pred_check
        %p478 = pneg %p281
      $region54: #{patch_cnn_forward.1} parent=11 // pred_check_branch
        %480 = sbr.rel (%p478) target = $region56
      $region55: #{patch_cnn_forward.1} parent=11 // pred_region
        _
      $region56: #{patch_cnn_forward.1} parent=11 // pred_fallthru
        _
      // Predicated region
      $region57: #{patch_cnn_forward.1} parent=11 // pred_check
        %p481 = pneg %p302
      $region58: #{patch_cnn_forward.1} parent=11 // pred_check_branch
        %483 = sbr.rel (%p481) target = $region60
      $region59: #{patch_cnn_forward.1} parent=11 // pred_region
        _
      $region60: #{patch_cnn_forward.1} parent=11 // pred_fallthru
        _
      // Predicated region
      $region61: #{patch_cnn_forward.1} parent=11 // pred_check
        %p484 = pneg %p323
      $region62: #{patch_cnn_forward.1} parent=11 // pred_check_branch
        %486 = sbr.rel (%p484) target = $region64
      $region63: #{patch_cnn_forward.1} parent=11 // pred_region
        _
      $region64: #{patch_cnn_forward.1} parent=11 // pred_fallthru
        _
      // Predicated region
      $region65: #{patch_cnn_forward.1} parent=11 // pred_check
        %p487 = pneg %p344
      $region66: #{patch_cnn_forward.1} parent=11 // pred_check_branch
        %489 = sbr.rel (%p487) target = $region68
      $region67: #{patch_cnn_forward.1} parent=11 // pred_region
        _
      $region68: #{patch_cnn_forward.1} parent=11 // pred_fallthru
        _
      // Predicated region
      $region69: #{patch_cnn_forward.1} parent=11 // pred_check
        %p490 = pneg %p365
      $region70: #{patch_cnn_forward.1} parent=11 // pred_check_branch
        %492 = sbr.rel (%p490) target = $region72
      $region71: #{patch_cnn_forward.1} parent=11 // pred_region
        _
      $region72: #{patch_cnn_forward.1} parent=11 // pred_fallthru
        _
      // Predicated region
      $region73: #{patch_cnn_forward.1} parent=11 // pred_check
        %p493 = pneg %p386
      $region74: #{patch_cnn_forward.1} parent=11 // pred_check_branch
        %495 = sbr.rel (%p493) target = $region76
      $region75: #{patch_cnn_forward.1} parent=11 // pred_region
        _
      $region76: #{patch_cnn_forward.1} parent=11 // pred_fallthru
        _
      // Predicated region
      $region77: #{patch_cnn_forward.1} parent=11 // pred_check
        %p496 = pneg %p407
      $region78: #{patch_cnn_forward.1} parent=11 // pred_check_branch
        %498 = sbr.rel (%p496) target = $region80
      $region79: #{patch_cnn_forward.1} parent=11 // pred_region
        _
      $region80: #{patch_cnn_forward.1} parent=11 // pred_fallthru
        _
    $region12: #{patch_cnn_forward.1} parent=5 // pred_fallthru
      _
    %p499 = scmp.lt.s32.totalorder %s24, 2
    // Predicated region
    $region81: #{patch_cnn_forward.1} parent=5 // pred_check
      %p500 = pneg %p499
    $region82: #{patch_cnn_forward.1} parent=5 // pred_check_branch
      %502 = sbr.rel (%p500) target = $region84
    $region83: #{patch_cnn_forward.1} parent=5 // pred_region
      // Predicated region
      $region85: #{patch_cnn_forward.1} parent=83 // pred_check
        %p503 = pneg %p44
      $region86: #{patch_cnn_forward.1} parent=83 // pred_check_branch
        %505 = sbr.rel (%p503) target = $region88
      $region87: #{patch_cnn_forward.1} parent=83 // pred_region
        %s506 = smul.u32 8, %s24
        %p507 = scmp.lt.s32.totalorder %s506, 15
        %s508 = scalar_select %p507, %s506, 15
        %s509 = smul.addr %s508, 8
        %s510 = scalar_lea.vmem %s0, %s509
        %s511 = smul.u32 8, %s24
      $region88: #{patch_cnn_forward.1} parent=83 // pred_fallthru
        _
    $region84: #{patch_cnn_forward.1} parent=5 // pred_fallthru
      _
    %p512 = scmp.le.s32.totalorder 1, %s24
    %p513 = scmp.lt.s32.totalorder %s24, 3
    %p514 = pnand %p512, %p513
    %p515 = pneg %p514
    // Predicated region
    $region89: #{patch_cnn_forward.1} parent=5 // pred_check
      _
    $region90: #{patch_cnn_forward.1} parent=5 // pred_check_branch
      %517 = sbr.rel (%p514) target = $region92
    $region91: #{patch_cnn_forward.1} parent=5 // pred_region
      %s518 = ssub.s32 %s24, 1
      %s519 = smul.u32 8, %s29
      %p520 = scmp.lt.s32.totalorder %s519, 15
      %s521 = scalar_select %p520, %s519, 15
      %s522 = smul.addr %s521, 8
      %s523 = scalar_lea.vmem %s0, %s522
      %p524 = pneg %p50
      %p525 = pneg %p47
      %p526 = pneg %p71
      %p527 = pneg %p68
      %p528 = pneg %p92
      %p529 = pneg %p89
      %p530 = pneg %p113
      %p531 = pneg %p110
      %p532 = pneg %p134
      %p533 = pneg %p131
      %p534 = pneg %p155
      %p535 = pneg %p152
      %p536 = pneg %p176
      %p537 = pneg %p173
      %p538 = pneg %p197
      %p539 = pneg %p194
      %p540 = pneg %p218
      %p541 = pneg %p215
      %p542 = pneg %p239
      %p543 = pneg %p236
      %p544 = pneg %p260
      %p545 = pneg %p257
      %p546 = pneg %p281
      %p547 = pneg %p278
      %p548 = pneg %p302
      %p549 = pneg %p299
      %p550 = pneg %p323
      %p551 = pneg %p320
      %p552 = pneg %p344
      %p553 = pneg %p341
      %p554 = pneg %p365
      %p555 = pneg %p362
      %p556 = pneg %p386
      %p557 = pneg %p383
      %p558 = pneg %p407
      %p559 = pneg %p404
      %p560 = pneg %p433
      %p561 = pneg %p430
      %p562 = scmp.lt.s32.totalorder %s29, 1
      %s563 = scalar_select %p562, %s29, 1
      %s564 = smul.addr %s563, 8
      %s565 = scalar_lea.vmem %s18, %s564
      %s566 = smul.u32 8, %s29
      %p567 = scmp.lt.s32.totalorder %s566, 15
      %s568 = scalar_select %p567, %s566, 15
      %s569 = smul.addr %s568, 8
      %s570 = scalar_lea.vmem %s0, %s569
      %s571 = smul.u32 8, %s29
      %p572 = scmp.lt.s32.totalorder %s29, 1
      %s573 = scalar_select %p572, %s29, 1
      %s574 = smul.addr %s573, 8
      %s575 = scalar_lea.vmem %s18, %s574
      %v577 = vld [vmem:[%s570] sm:$0xff]
      %v578 = vld [vmem:[%s570 + $0x8] sm:$0xff]
      %v579 = vld [vmem:[%s570 + $0x10] sm:$0xff]
      %v580 = vld [vmem:[%s570 + $0x18] sm:$0xff]
      %v581 = vld [vmem:[%s570 + $0x20] sm:$0xff]
      %v582 = vld [vmem:[%s570 + $0x28] sm:$0xff]
      %v583 = vld [vmem:[%s570 + $0x30] sm:$0xff]
      %v584 = vld [vmem:[%s570 + $0x38] sm:$0xff]
      %v585 = vlaneseq
      %v586 = vshrl.u32 %v585, 7
      %v587 = vadd.s32 %v586, 8
      %v588 = vadd.s32 %v586, 16
      %v589 = vadd.s32 %v586, 24
      %v590 = vadd.s32 %v586, 32
      %v591 = vadd.s32 %v586, 40
      %v592 = vadd.s32 %v586, 48
      %v593 = vadd.s32 %v586, 56
      %vm594 = vcmp.lt.s32.totalorder %v586, 0
      %v595 = vsub.s32 0, %v586
      %v596 = vsel %vm594, %v595, %v586
      %v597 = vshrl.u32 %v596, 4
      %v598 = vand.u32 %v596, 15
      %v599 = vsub.s32 0, %v598
      %v600 = vsel %vm594, %v599, %v598
      %vm601 = vcmp.lt.s32.totalorder %v587, 0
      %v602 = vsub.s32 0, %v587
      %v603 = vsel %vm601, %v602, %v587
      %v604 = vshrl.u32 %v603, 4
      %v605 = vand.u32 %v603, 15
      %v606 = vsub.s32 0, %v605
      %v607 = vsel %vm601, %v606, %v605
      %vm608 = vcmp.lt.s32.totalorder %v588, 0
      %v609 = vsub.s32 0, %v588
      %v610 = vsel %vm608, %v609, %v588
      %v611 = vshrl.u32 %v610, 4
      %v612 = vand.u32 %v610, 15
      %v613 = vsub.s32 0, %v612
      %v614 = vsel %vm608, %v613, %v612
      %vm615 = vcmp.lt.s32.totalorder %v589, 0
      %v616 = vsub.s32 0, %v589
      %v617 = vsel %vm615, %v616, %v589
      %v618 = vshrl.u32 %v617, 4
      %v619 = vand.u32 %v617, 15
      %v620 = vsub.s32 0, %v619
      %v621 = vsel %vm615, %v620, %v619
      %vm622 = vcmp.lt.s32.totalorder %v590, 0
      %v623 = vsub.s32 0, %v590
      %v624 = vsel %vm622, %v623, %v590
      %v625 = vshrl.u32 %v624, 4
      %v626 = vand.u32 %v624, 15
      %v627 = vsub.s32 0, %v626
      %v628 = vsel %vm622, %v627, %v626
      %vm629 = vcmp.lt.s32.totalorder %v591, 0
      %v630 = vsub.s32 0, %v591
      %v631 = vsel %vm629, %v630, %v591
      %v632 = vshrl.u32 %v631, 4
      %v633 = vand.u32 %v631, 15
      %v634 = vsub.s32 0, %v633
      %v635 = vsel %vm629, %v634, %v633
      %vm636 = vcmp.lt.s32.totalorder %v592, 0
      %v637 = vsub.s32 0, %v592
      %v638 = vsel %vm636, %v637, %v592
      %v639 = vshrl.u32 %v638, 4
      %v640 = vand.u32 %v638, 15
      %v641 = vsub.s32 0, %v640
      %v642 = vsel %vm636, %v641, %v640
      %vm643 = vcmp.lt.s32.totalorder %v593, 0
      %v644 = vsub.s32 0, %v593
      %v645 = vsel %vm643, %v644, %v593
      %v646 = vshrl.u32 %v645, 4
      %v647 = vand.u32 %v645, 15
      %v648 = vsub.s32 0, %v647
      %v649 = vsel %vm643, %v648, %v647
      %vm650 = vcmp.ne.s32.totalorder %v600, 0
      %vm651 = vcmp.ne.s32.totalorder %v607, 0
      %vm652 = vcmp.ne.s32.totalorder %v614, 0
      %vm653 = vcmp.ne.s32.totalorder %v621, 0
      %vm654 = vcmp.ne.s32.totalorder %v628, 0
      %vm655 = vcmp.ne.s32.totalorder %v635, 0
      %vm656 = vcmp.ne.s32.totalorder %v642, 0
      %vm657 = vcmp.ne.s32.totalorder %v649, 0
      %vm658 = vcmp.lt.s32.totalorder %v600, 0
      %vm659 = vcmp.lt.s32.totalorder %v607, 0
      %vm660 = vcmp.lt.s32.totalorder %v614, 0
      %vm661 = vcmp.lt.s32.totalorder %v621, 0
      %vm662 = vcmp.lt.s32.totalorder %v628, 0
      %vm663 = vcmp.lt.s32.totalorder %v635, 0
      %vm664 = vcmp.lt.s32.totalorder %v642, 0
      %vm665 = vcmp.lt.s32.totalorder %v649, 0
      %vm666 = vmand %vm658, %vm650
      %vm667 = vmand %vm659, %vm651
      %vm668 = vmand %vm660, %vm652
      %vm669 = vmand %vm661, %vm653
      %vm670 = vmand %vm662, %vm654
      %vm671 = vmand %vm663, %vm655
      %vm672 = vmand %vm664, %vm656
      %vm673 = vmand %vm665, %vm657
      %v674 = vadd.s32 %v600, 16
      %v675 = vadd.s32 %v607, 16
      %v676 = vadd.s32 %v614, 16
      %v677 = vadd.s32 %v621, 16
      %v678 = vadd.s32 %v628, 16
      %v679 = vadd.s32 %v635, 16
      %v680 = vadd.s32 %v642, 16
      %v681 = vadd.s32 %v649, 16
      %v682 = vsel %vm666, %v674, %v600
      %v683 = vsel %vm667, %v675, %v607
      %v684 = vsel %vm668, %v676, %v614
      %v685 = vsel %vm669, %v677, %v621
      %v686 = vsel %vm670, %v678, %v628
      %v687 = vsel %vm671, %v679, %v635
      %v688 = vsel %vm672, %v680, %v642
      %v689 = vsel %vm673, %v681, %v649
      %vm690 = vcmp.ne.s32.totalorder %v682, 0
      %vm691 = vcmp.ne.s32.totalorder %v683, 0
      %vm692 = vcmp.ne.s32.totalorder %v684, 0
      %vm693 = vcmp.ne.s32.totalorder %v685, 0
      %vm694 = vcmp.ne.s32.totalorder %v686, 0
      %vm695 = vcmp.ne.s32.totalorder %v687, 0
      %vm696 = vcmp.ne.s32.totalorder %v688, 0
      %vm697 = vcmp.ne.s32.totalorder %v689, 0
      %v698 = vsel %vm690, 1, 0
      %v699 = vsel %vm691, 1, 0
      %v700 = vsel %vm692, 1, 0
      %v701 = vsel %vm693, 1, 0
      %v702 = vsel %vm694, 1, 0
      %v703 = vsel %vm695, 1, 0
      %v704 = vsel %vm696, 1, 0
      %v705 = vsel %vm697, 1, 0
      %v706 = vcvt.s32.f32 %v698
      %v707 = vcvt.s32.f32 %v699
      %v708 = vcvt.s32.f32 %v700
      %v709 = vcvt.s32.f32 %v701
      %v710 = vcvt.s32.f32 %v702
      %v711 = vcvt.s32.f32 %v703
      %v712 = vcvt.s32.f32 %v704
      %v713 = vcvt.s32.f32 %v705
      %vm714 = vcmp.ne.s32.totalorder %v682, 15
      %vm715 = vcmp.ne.s32.totalorder %v683, 15
      %vm716 = vcmp.ne.s32.totalorder %v684, 15
      %vm717 = vcmp.ne.s32.totalorder %v685, 15
      %vm718 = vcmp.ne.s32.totalorder %v686, 15
      %vm719 = vcmp.ne.s32.totalorder %v687, 15
      %vm720 = vcmp.ne.s32.totalorder %v688, 15
      %vm721 = vcmp.ne.s32.totalorder %v689, 15
      %v722 = vsel %vm714, 1, 0
      %v723 = vsel %vm715, 1, 0
      %v724 = vsel %vm716, 1, 0
      %v725 = vsel %vm717, 1, 0
      %v726 = vsel %vm718, 1, 0
      %v727 = vsel %vm719, 1, 0
      %v728 = vsel %vm720, 1, 0
      %v729 = vsel %vm721, 1, 0
      %v730 = vcvt.s32.f32 %v722
      %v731 = vcvt.s32.f32 %v723
      %v732 = vcvt.s32.f32 %v724
      %v733 = vcvt.s32.f32 %v725
      %v734 = vcvt.s32.f32 %v726
      %v735 = vcvt.s32.f32 %v727
      %v736 = vcvt.s32.f32 %v728
      %v737 = vcvt.s32.f32 %v729
      %v738 = vrot.slane %v577, 7
      %v739 = vrot.slane %v578, 7
      %v740 = vrot.slane %v579, 7
      %v741 = vrot.slane %v580, 7
      %v742 = vrot.slane %v581, 7
      %v743 = vrot.slane %v582, 7
      %v744 = vrot.slane %v583, 7
      %v745 = vrot.slane %v584, 7
      %vm746 = vcmp.lt.s32.totalorder %v586, 1
      %v747 = vsel %vm746, %v744, %v745
      %v748 = vsel %vm746, %v743, %v744
      %v749 = vsel %vm746, %v742, %v743
      %v750 = vsel %vm746, %v741, %v742
      %v751 = vsel %vm746, %v740, %v741
      %v752 = vsel %vm746, %v739, %v740
      %v753 = vsel %vm746, %v738, %v739
      %v754 = vsel %vm746, %v745, %v738
      %v755 = vmul.f32 %v754, %v706
      %v756 = vmul.f32 %v753, %v707
      %v757 = vmul.f32 %v752, %v708
      %v758 = vmul.f32 %v751, %v709
      %v759 = vmul.f32 %v750, %v710
      %v760 = vmul.f32 %v749, %v711
      %v761 = vmul.f32 %v748, %v712
      %v762 = vmul.f32 %v747, %v713
      %v763 = vpack.c.bf16 %v756, %v755
      %v764 = vpack.c.bf16 %v758, %v757
      %v765 = vpack.c.bf16 %v760, %v759
      %v766 = vpack.c.bf16 %v762, %v761
      %v767 = vrot.slane %v577, 1
      %v768 = vrot.slane %v578, 1
      %v769 = vrot.slane %v579, 1
      %v770 = vrot.slane %v580, 1
      %v771 = vrot.slane %v581, 1
      %v772 = vrot.slane %v582, 1
      %v773 = vrot.slane %v583, 1
      %v774 = vrot.slane %v584, 1
      %vm775 = vcmp.lt.s32.totalorder %v586, 7
      %v776 = vsel %vm775, %v773, %v774
      %v777 = vsel %vm775, %v772, %v773
      %v778 = vsel %vm775, %v771, %v772
      %v779 = vsel %vm775, %v770, %v771
      %v780 = vsel %vm775, %v769, %v770
      %v781 = vsel %vm775, %v768, %v769
      %v782 = vsel %vm775, %v767, %v768
      %v783 = vsel %vm775, %v774, %v767
      %v784 = vmul.f32 %v782, %v730
      %v785 = vmul.f32 %v781, %v731
      %v786 = vmul.f32 %v780, %v732
      %v787 = vmul.f32 %v779, %v733
      %v788 = vmul.f32 %v778, %v734
      %v789 = vmul.f32 %v777, %v735
      %v790 = vmul.f32 %v776, %v736
      %v791 = vmul.f32 %v783, %v737
      %v792 = vpack.c.bf16 %v785, %v784
      %v793 = vpack.c.bf16 %v787, %v786
      %v794 = vpack.c.bf16 %v789, %v788
      %v795 = vpack.c.bf16 %v791, %v790
      %v796 = vld [vmem:[%s1] sm:$0xff]
      %v797 = vld [vmem:[%s1 + $0x8] sm:$0xff]
      %v798 = vld [vmem:[%s1 + $0x10] sm:$0xff]
      %v799 = vld [vmem:[%s1 + $0x18] sm:$0xff]
      %v800 = vld [vmem:[%s1 + $0x20] sm:$0xff]
      %v801 = vld [vmem:[%s1 + $0x28] sm:$0xff]
      %v802 = vld [vmem:[%s1 + $0x30] sm:$0xff]
      %v803 = vld [vmem:[%s1 + $0x38] sm:$0xff]
      %v804 = vld [vmem:[%s1 + $0x40] sm:$0xff]
      %v805 = vld [vmem:[%s1 + $0x48] sm:$0xff]
      %v806 = vld [vmem:[%s1 + $0x50] sm:$0xff]
      %v807 = vld [vmem:[%s1 + $0x58] sm:$0xff]
      %v808 = vld [vmem:[%s1 + $0x60] sm:$0xff]
      %v809 = vld [vmem:[%s1 + $0x68] sm:$0xff]
      %v810 = vld [vmem:[%s1 + $0x70] sm:$0xff]
      %v811 = vld [vmem:[%s1 + $0x78] sm:$0xff]
      %v812 = vpack.c.bf16 %v578, %v577
      %v813 = vpack.c.bf16 %v580, %v579
      %v814 = vpack.c.bf16 %v582, %v581
      %v815 = vpack.c.bf16 %v584, %v583
      %s816 = scalar_lea.vmem %s1, 128
      %v817 = vld [vmem:[%s816] sm:$0xff]
      %v818 = vld [vmem:[%s816 + $0x8] sm:$0xff]
      %v819 = vld [vmem:[%s816 + $0x10] sm:$0xff]
      %v820 = vld [vmem:[%s816 + $0x18] sm:$0xff]
      %v821 = vld [vmem:[%s816 + $0x20] sm:$0xff]
      %v822 = vld [vmem:[%s816 + $0x28] sm:$0xff]
      %v823 = vld [vmem:[%s816 + $0x30] sm:$0xff]
      %v824 = vld [vmem:[%s816 + $0x38] sm:$0xff]
      %v825 = vld [vmem:[%s816 + $0x40] sm:$0xff]
      %v826 = vld [vmem:[%s816 + $0x48] sm:$0xff]
      %v827 = vld [vmem:[%s816 + $0x50] sm:$0xff]
      %v828 = vld [vmem:[%s816 + $0x58] sm:$0xff]
      %v829 = vld [vmem:[%s816 + $0x60] sm:$0xff]
      %v830 = vld [vmem:[%s816 + $0x68] sm:$0xff]
      %v831 = vld [vmem:[%s816 + $0x70] sm:$0xff]
      %v832 = vld [vmem:[%s816 + $0x78] sm:$0xff]
      %v849 = vunpack.c.l.b16 %v817
      %v850 = vunpack.c.h.b16 %v817
      %v851 = vunpack.c.l.b16 %v818
      %v852 = vunpack.c.h.b16 %v818
      %v853 = vunpack.c.l.b16 %v819
      %v854 = vunpack.c.h.b16 %v819
      %v855 = vunpack.c.l.b16 %v820
      %v856 = vunpack.c.h.b16 %v820
      %v857 = vunpack.c.l.b16 %v821
      %v858 = vunpack.c.h.b16 %v821
      %v859 = vunpack.c.l.b16 %v822
      %v860 = vunpack.c.h.b16 %v822
      %v861 = vunpack.c.l.b16 %v823
      %v862 = vunpack.c.h.b16 %v823
      %v863 = vunpack.c.l.b16 %v824
      %v864 = vunpack.c.h.b16 %v824
      %v865 = vunpack.c.l.b16 %v825
      %v866 = vunpack.c.h.b16 %v825
      %v867 = vunpack.c.l.b16 %v826
      %v868 = vunpack.c.h.b16 %v826
      %v869 = vunpack.c.l.b16 %v827
      %v870 = vunpack.c.h.b16 %v827
      %v871 = vunpack.c.l.b16 %v828
      %v872 = vunpack.c.h.b16 %v828
      %v873 = vunpack.c.l.b16 %v829
      %v874 = vunpack.c.h.b16 %v829
      %v875 = vunpack.c.l.b16 %v830
      %v876 = vunpack.c.h.b16 %v830
      %v877 = vunpack.c.l.b16 %v831
      %v878 = vunpack.c.h.b16 %v831
      %v879 = vunpack.c.l.b16 %v832
      %v880 = vunpack.c.h.b16 %v832
      %v881 = vpack.c.b16 %v851, %v849
      %v882 = vpack.c.b16 %v852, %v850
      %v883 = vpack.c.b16 %v855, %v853
      %v884 = vpack.c.b16 %v856, %v854
      %v885 = vpack.c.b16 %v859, %v857
      %v886 = vpack.c.b16 %v860, %v858
      %v887 = vpack.c.b16 %v863, %v861
      %v888 = vpack.c.b16 %v864, %v862
      %v889 = vpack.c.b16 %v867, %v865
      %v890 = vpack.c.b16 %v868, %v866
      %v891 = vpack.c.b16 %v871, %v869
      %v892 = vpack.c.b16 %v872, %v870
      %v893 = vpack.c.b16 %v875, %v873
      %v894 = vpack.c.b16 %v876, %v874
      %v895 = vpack.c.b16 %v879, %v877
      %v896 = vpack.c.b16 %v880, %v878
      %913 = vmatprep.subr.bf16.mxu0 %v882
      %914 = vmatpush1.bf16.msra.mxu0 %v881
      %915 = vmatprep.subr.bf16.mxu0 %v884
      %916 = vmatpush1.bf16.msra.mxu0 %v883
      %917 = vmatprep.subr.bf16.mxu0 %v886
      %918 = vmatpush1.bf16.msra.mxu0 %v885
      %919 = vmatprep.subr.bf16.mxu0 %v888
      %920 = vmatpush1.bf16.msra.mxu0 %v887
      %921 = vmatprep.subr.bf16.mxu0 %v890
      %922 = vmatpush1.bf16.msra.mxu0 %v889
      %923 = vmatprep.subr.bf16.mxu0 %v892
      %924 = vmatpush1.bf16.msra.mxu0 %v891
      %925 = vmatprep.subr.bf16.mxu0 %v894
      %926 = vmatpush1.bf16.msra.mxu0 %v893
      %927 = vmatprep.subr.bf16.mxu0 %v896
      %928 = vmatpush1.bf16.msra.mxu0 %v895
      %929 = vmatprep.subr.bf16.mxu0 0
      %930 = vmatpush1.bf16.msra.mxu0 0
      %931 = vmatprep.subr.bf16.mxu0 0
      %932 = vmatpush1.bf16.msra.mxu0 0
      %933 = vmatprep.subr.bf16.mxu0 0
      %934 = vmatpush1.bf16.msra.mxu0 0
      %935 = vmatprep.subr.bf16.mxu0 0
      %936 = vmatpush1.bf16.msra.mxu0 0
      %937 = vmatprep.subr.bf16.mxu0 0
      %938 = vmatpush1.bf16.msra.mxu0 0
      %939 = vmatprep.subr.bf16.mxu0 0
      %940 = vmatpush1.bf16.msra.mxu0 0
      %941 = vmatprep.subr.bf16.mxu0 0
      %942 = vmatpush1.bf16.msra.mxu0 0
      %943 = vmatprep.subr.bf16.mxu0 0
      %944 = vmatpush1.bf16.msra.mxu0 0
      %945 = vmatprep.mubr.bf16.mxu0 0
      %946 = vmatmul.mubr.bf16.gmra.mrb[0].mxu0 %v812
      %v947 = vpop.f32.mrb[0].mxu0
      %v948 = vadd.f32 0.0, %v947
      %v949 = vpop.f32.mrb[0].mxu0
      %v950 = vadd.f32 0.0, %v949
      %v951 = vpop.f32.mrb[0].mxu0
      %v952 = vadd.f32 0.0, %v951
      %v953 = vpop.f32.mrb[0].mxu0
      %v954 = vadd.f32 0.0, %v953
      %955 = vmatprep.mubr.bf16.mxu0 0
      %956 = vmatmul.mubr.bf16.gmra.mrb[0].mxu0 %v813
      %v957 = vpop.f32.mrb[0].mxu0
      %v958 = vadd.f32 0.0, %v957
      %v959 = vpop.f32.mrb[0].mxu0
      %v960 = vadd.f32 0.0, %v959
      %v961 = vpop.f32.mrb[0].mxu0
      %v962 = vadd.f32 0.0, %v961
      %v963 = vpop.f32.mrb[0].mxu0
      %v964 = vadd.f32 0.0, %v963
      %965 = vmatprep.mubr.bf16.mxu0 0
      %966 = vmatmul.mubr.bf16.gmra.mrb[0].mxu0 %v814
      %v967 = vpop.f32.mrb[0].mxu0
      %v968 = vadd.f32 0.0, %v967
      %v969 = vpop.f32.mrb[0].mxu0
      %v970 = vadd.f32 0.0, %v969
      %v971 = vpop.f32.mrb[0].mxu0
      %v972 = vadd.f32 0.0, %v971
      %v973 = vpop.f32.mrb[0].mxu0
      %v974 = vadd.f32 0.0, %v973
      %975 = vmatprep.mubr.bf16.mxu0 0
      %976 = vmatmul.mubr.bf16.gmra.mrb[0].mxu0 %v815
      %v977 = vpop.f32.mrb[0].mxu0
      %v978 = vadd.f32 0.0, %v977
      %v979 = vpop.f32.mrb[0].mxu0
      %v980 = vadd.f32 0.0, %v979
      %v981 = vpop.f32.mrb[0].mxu0
      %v982 = vadd.f32 0.0, %v981
      %v983 = vpop.f32.mrb[0].mxu0
      %v984 = vadd.f32 0.0, %v983
      %985 = vdwg.mxu0
      %v1002 = vunpack.c.l.b16 %v796
      %v1003 = vunpack.c.h.b16 %v796
      %v1004 = vunpack.c.l.b16 %v797
      %v1005 = vunpack.c.h.b16 %v797
      %v1006 = vunpack.c.l.b16 %v798
      %v1007 = vunpack.c.h.b16 %v798
      %v1008 = vunpack.c.l.b16 %v799
      %v1009 = vunpack.c.h.b16 %v799
      %v1010 = vunpack.c.l.b16 %v800
      %v1011 = vunpack.c.h.b16 %v800
      %v1012 = vunpack.c.l.b16 %v801
      %v1013 = vunpack.c.h.b16 %v801
      %v1014 = vunpack.c.l.b16 %v802
      %v1015 = vunpack.c.h.b16 %v802
      %v1016 = vunpack.c.l.b16 %v803
      %v1017 = vunpack.c.h.b16 %v803
      %v1018 = vunpack.c.l.b16 %v804
      %v1019 = vunpack.c.h.b16 %v804
      %v1020 = vunpack.c.l.b16 %v805
      %v1021 = vunpack.c.h.b16 %v805
      %v1022 = vunpack.c.l.b16 %v806
      %v1023 = vunpack.c.h.b16 %v806
      %v1024 = vunpack.c.l.b16 %v807
      %v1025 = vunpack.c.h.b16 %v807
      %v1026 = vunpack.c.l.b16 %v808
      %v1027 = vunpack.c.h.b16 %v808
      %v1028 = vunpack.c.l.b16 %v809
      %v1029 = vunpack.c.h.b16 %v809
      %v1030 = vunpack.c.l.b16 %v810
      %v1031 = vunpack.c.h.b16 %v810
      %v1032 = vunpack.c.l.b16 %v811
      %v1033 = vunpack.c.h.b16 %v811
      %v1034 = vpack.c.b16 %v1004, %v1002
      %v1035 = vpack.c.b16 %v1005, %v1003
      %v1036 = vpack.c.b16 %v1008, %v1006
      %v1037 = vpack.c.b16 %v1009, %v1007
      %v1038 = vpack.c.b16 %v1012, %v1010
      %v1039 = vpack.c.b16 %v1013, %v1011
      %v1040 = vpack.c.b16 %v1016, %v1014
      %v1041 = vpack.c.b16 %v1017, %v1015
      %v1042 = vpack.c.b16 %v1020, %v1018
      %v1043 = vpack.c.b16 %v1021, %v1019
      %v1044 = vpack.c.b16 %v1024, %v1022
      %v1045 = vpack.c.b16 %v1025, %v1023
      %v1046 = vpack.c.b16 %v1028, %v1026
      %v1047 = vpack.c.b16 %v1029, %v1027
      %v1048 = vpack.c.b16 %v1032, %v1030
      %v1049 = vpack.c.b16 %v1033, %v1031
      %1066 = vmatprep.subr.bf16.mxu0 %v1035
      %1067 = vmatpush1.bf16.msra.mxu0 %v1034
      %1068 = vmatprep.subr.bf16.mxu0 %v1037
      %1069 = vmatpush1.bf16.msra.mxu0 %v1036
      %1070 = vmatprep.subr.bf16.mxu0 %v1039
      %1071 = vmatpush1.bf16.msra.mxu0 %v1038
      %1072 = vmatprep.subr.bf16.mxu0 %v1041
      %1073 = vmatpush1.bf16.msra.mxu0 %v1040
      %1074 = vmatprep.subr.bf16.mxu0 %v1043
      %1075 = vmatpush1.bf16.msra.mxu0 %v1042
      %1076 = vmatprep.subr.bf16.mxu0 %v1045
      %1077 = vmatpush1.bf16.msra.mxu0 %v1044
      %1078 = vmatprep.subr.bf16.mxu0 %v1047
      %1079 = vmatpush1.bf16.msra.mxu0 %v1046
      %1080 = vmatprep.subr.bf16.mxu0 %v1049
      %1081 = vmatpush1.bf16.msra.mxu0 %v1048
      %1082 = vmatprep.subr.bf16.mxu0 0
      %1083 = vmatpush1.bf16.msra.mxu0 0
      %1084 = vmatprep.subr.bf16.mxu0 0
      %1085 = vmatpush1.bf16.msra.mxu0 0
      %1086 = vmatprep.subr.bf16.mxu0 0
      %1087 = vmatpush1.bf16.msra.mxu0 0
      %1088 = vmatprep.subr.bf16.mxu0 0
      %1089 = vmatpush1.bf16.msra.mxu0 0
      %1090 = vmatprep.subr.bf16.mxu0 0
      %1091 = vmatpush1.bf16.msra.mxu0 0
      %1092 = vmatprep.subr.bf16.mxu0 0
      %1093 = vmatpush1.bf16.msra.mxu0 0
      %1094 = vmatprep.subr.bf16.mxu0 0
      %1095 = vmatpush1.bf16.msra.mxu0 0
      %1096 = vmatprep.subr.bf16.mxu0 0
      %1097 = vmatpush1.bf16.msra.mxu0 0
      %1098 = vmatprep.mubr.bf16.mxu0 0
      %1099 = vmatmul.mubr.bf16.gmra.mrb[0].mxu0 %v763
      %v1100 = vpop.f32.mrb[0].mxu0
      %v1101 = vadd.f32 %v948, %v1100
      %v1102 = vpop.f32.mrb[0].mxu0
      %v1103 = vadd.f32 %v950, %v1102
      %v1104 = vpop.f32.mrb[0].mxu0
      %v1105 = vadd.f32 %v952, %v1104
      %v1106 = vpop.f32.mrb[0].mxu0
      %v1107 = vadd.f32 %v954, %v1106
      %1108 = vmatprep.mubr.bf16.mxu0 0
      %1109 = vmatmul.mubr.bf16.gmra.mrb[0].mxu0 %v764
      %v1110 = vpop.f32.mrb[0].mxu0
      %v1111 = vadd.f32 %v958, %v1110
      %v1112 = vpop.f32.mrb[0].mxu0
      %v1113 = vadd.f32 %v960, %v1112
      %v1114 = vpop.f32.mrb[0].mxu0
      %v1115 = vadd.f32 %v962, %v1114
      %v1116 = vpop.f32.mrb[0].mxu0
      %v1117 = vadd.f32 %v964, %v1116
      %1118 = vmatprep.mubr.bf16.mxu0 0
      %1119 = vmatmul.mubr.bf16.gmra.mrb[0].mxu0 %v765
      %v1120 = vpop.f32.mrb[0].mxu0
      %v1121 = vadd.f32 %v968, %v1120
      %v1122 = vpop.f32.mrb[0].mxu0
      %v1123 = vadd.f32 %v970, %v1122
      %v1124 = vpop.f32.mrb[0].mxu0
      %v1125 = vadd.f32 %v972, %v1124
      %v1126 = vpop.f32.mrb[0].mxu0
      %v1127 = vadd.f32 %v974, %v1126
      %1128 = vmatprep.mubr.bf16.mxu0 0
      %1129 = vmatmul.mubr.bf16.gmra.mrb[0].mxu0 %v766
      %v1130 = vpop.f32.mrb[0].mxu0
      %v1131 = vadd.f32 %v978, %v1130
      %v1132 = vpop.f32.mrb[0].mxu0
      %v1133 = vadd.f32 %v980, %v1132
      %v1134 = vpop.f32.mrb[0].mxu0
      %v1135 = vadd.f32 %v982, %v1134
      %v1136 = vpop.f32.mrb[0].mxu0
      %v1137 = vadd.f32 %v984, %v1136
      %1138 = vdwg.mxu0
      %s1139 = scalar_lea.vmem %s1, 256
      %v1140 = vld [vmem:[%s1139] sm:$0xff]
      %v1141 = vld [vmem:[%s1139 + $0x8] sm:$0xff]
      %v1142 = vld [vmem:[%s1139 + $0x10] sm:$0xff]
      %v1143 = vld [vmem:[%s1139 + $0x18] sm:$0xff]
      %v1144 = vld [vmem:[%s1139 + $0x20] sm:$0xff]
      %v1145 = vld [vmem:[%s1139 + $0x28] sm:$0xff]
      %v1146 = vld [vmem:[%s1139 + $0x30] sm:$0xff]
      %v1147 = vld [vmem:[%s1139 + $0x38] sm:$0xff]
      %v1148 = vld [vmem:[%s1139 + $0x40] sm:$0xff]
      %v1149 = vld [vmem:[%s1139 + $0x48] sm:$0xff]
      %v1150 = vld [vmem:[%s1139 + $0x50] sm:$0xff]
      %v1151 = vld [vmem:[%s1139 + $0x58] sm:$0xff]
      %v1152 = vld [vmem:[%s1139 + $0x60] sm:$0xff]
      %v1153 = vld [vmem:[%s1139 + $0x68] sm:$0xff]
      %v1154 = vld [vmem:[%s1139 + $0x70] sm:$0xff]
      %v1155 = vld [vmem:[%s1139 + $0x78] sm:$0xff]
      %v1172 = vunpack.c.l.b16 %v1140
      %v1173 = vunpack.c.h.b16 %v1140
      %v1174 = vunpack.c.l.b16 %v1141
      %v1175 = vunpack.c.h.b16 %v1141
      %v1176 = vunpack.c.l.b16 %v1142
      %v1177 = vunpack.c.h.b16 %v1142
      %v1178 = vunpack.c.l.b16 %v1143
      %v1179 = vunpack.c.h.b16 %v1143
      %v1180 = vunpack.c.l.b16 %v1144
      %v1181 = vunpack.c.h.b16 %v1144
      %v1182 = vunpack.c.l.b16 %v1145
      %v1183 = vunpack.c.h.b16 %v1145
      %v1184 = vunpack.c.l.b16 %v1146
      %v1185 = vunpack.c.h.b16 %v1146
      %v1186 = vunpack.c.l.b16 %v1147
      %v1187 = vunpack.c.h.b16 %v1147
      %v1188 = vunpack.c.l.b16 %v1148
      %v1189 = vunpack.c.h.b16 %v1148
      %v1190 = vunpack.c.l.b16 %v1149
      %v1191 = vunpack.c.h.b16 %v1149
      %v1192 = vunpack.c.l.b16 %v1150
      %v1193 = vunpack.c.h.b16 %v1150
      %v1194 = vunpack.c.l.b16 %v1151
      %v1195 = vunpack.c.h.b16 %v1151
      %v1196 = vunpack.c.l.b16 %v1152
      %v1197 = vunpack.c.h.b16 %v1152
      %v1198 = vunpack.c.l.b16 %v1153
      %v1199 = vunpack.c.h.b16 %v1153
      %v1200 = vunpack.c.l.b16 %v1154
      %v1201 = vunpack.c.h.b16 %v1154
      %v1202 = vunpack.c.l.b16 %v1155
      %v1203 = vunpack.c.h.b16 %v1155
      %v1204 = vpack.c.b16 %v1174, %v1172
      %v1205 = vpack.c.b16 %v1175, %v1173
      %v1206 = vpack.c.b16 %v1178, %v1176
      %v1207 = vpack.c.b16 %v1179, %v1177
      %v1208 = vpack.c.b16 %v1182, %v1180
      %v1209 = vpack.c.b16 %v1183, %v1181
      %v1210 = vpack.c.b16 %v1186, %v1184
      %v1211 = vpack.c.b16 %v1187, %v1185
      %v1212 = vpack.c.b16 %v1190, %v1188
      %v1213 = vpack.c.b16 %v1191, %v1189
      %v1214 = vpack.c.b16 %v1194, %v1192
      %v1215 = vpack.c.b16 %v1195, %v1193
      %v1216 = vpack.c.b16 %v1198, %v1196
      %v1217 = vpack.c.b16 %v1199, %v1197
      %v1218 = vpack.c.b16 %v1202, %v1200
      %v1219 = vpack.c.b16 %v1203, %v1201
      %1236 = vmatprep.subr.bf16.mxu0 %v1205
      %1237 = vmatpush1.bf16.msra.mxu0 %v1204
      %1238 = vmatprep.subr.bf16.mxu0 %v1207
      %1239 = vmatpush1.bf16.msra.mxu0 %v1206
      %1240 = vmatprep.subr.bf16.mxu0 %v1209
      %1241 = vmatpush1.bf16.msra.mxu0 %v1208
      %1242 = vmatprep.subr.bf16.mxu0 %v1211
      %1243 = vmatpush1.bf16.msra.mxu0 %v1210
      %1244 = vmatprep.subr.bf16.mxu0 %v1213
      %1245 = vmatpush1.bf16.msra.mxu0 %v1212
      %1246 = vmatprep.subr.bf16.mxu0 %v1215
      %1247 = vmatpush1.bf16.msra.mxu0 %v1214
      %1248 = vmatprep.subr.bf16.mxu0 %v1217
      %1249 = vmatpush1.bf16.msra.mxu0 %v1216
      %1250 = vmatprep.subr.bf16.mxu0 %v1219
      %1251 = vmatpush1.bf16.msra.mxu0 %v1218
      %1252 = vmatprep.subr.bf16.mxu0 0
      %1253 = vmatpush1.bf16.msra.mxu0 0
      %1254 = vmatprep.subr.bf16.mxu0 0
      %1255 = vmatpush1.bf16.msra.mxu0 0
      %1256 = vmatprep.subr.bf16.mxu0 0
      %1257 = vmatpush1.bf16.msra.mxu0 0
      %1258 = vmatprep.subr.bf16.mxu0 0
      %1259 = vmatpush1.bf16.msra.mxu0 0
      %1260 = vmatprep.subr.bf16.mxu0 0
      %1261 = vmatpush1.bf16.msra.mxu0 0
      %1262 = vmatprep.subr.bf16.mxu0 0
      %1263 = vmatpush1.bf16.msra.mxu0 0
      %1264 = vmatprep.subr.bf16.mxu0 0
      %1265 = vmatpush1.bf16.msra.mxu0 0
      %1266 = vmatprep.subr.bf16.mxu0 0
      %1267 = vmatpush1.bf16.msra.mxu0 0
      %1268 = vmatprep.mubr.bf16.mxu0 0
      %1269 = vmatmul.mubr.bf16.gmra.mrb[0].mxu0 %v792
      %v1270 = vpop.f32.mrb[0].mxu0
      %v1271 = vadd.f32 0.0, %v1270
      %v1272 = vpop.f32.mrb[0].mxu0
      %v1273 = vadd.f32 0.0, %v1272
      %v1274 = vpop.f32.mrb[0].mxu0
      %v1275 = vadd.f32 0.0, %v1274
      %v1276 = vpop.f32.mrb[0].mxu0
      %v1277 = vadd.f32 0.0, %v1276
      %1278 = vmatprep.mubr.bf16.mxu0 0
      %1279 = vmatmul.mubr.bf16.gmra.mrb[0].mxu0 %v793
      %v1280 = vpop.f32.mrb[0].mxu0
      %v1281 = vadd.f32 0.0, %v1280
      %v1282 = vpop.f32.mrb[0].mxu0
      %v1283 = vadd.f32 0.0, %v1282
      %v1284 = vpop.f32.mrb[0].mxu0
      %v1285 = vadd.f32 0.0, %v1284
      %v1286 = vpop.f32.mrb[0].mxu0
      %v1287 = vadd.f32 0.0, %v1286
      %1288 = vmatprep.mubr.bf16.mxu0 0
      %1289 = vmatmul.mubr.bf16.gmra.mrb[0].mxu0 %v794
      %v1290 = vpop.f32.mrb[0].mxu0
      %v1291 = vadd.f32 0.0, %v1290
      %v1292 = vpop.f32.mrb[0].mxu0
      %v1293 = vadd.f32 0.0, %v1292
      %v1294 = vpop.f32.mrb[0].mxu0
      %v1295 = vadd.f32 0.0, %v1294
      %v1296 = vpop.f32.mrb[0].mxu0
      %v1297 = vadd.f32 0.0, %v1296
      %1298 = vmatprep.mubr.bf16.mxu0 0
      %1299 = vmatmul.mubr.bf16.gmra.mrb[0].mxu0 %v795
      %v1300 = vpop.f32.mrb[0].mxu0
      %v1301 = vadd.f32 0.0, %v1300
      %v1302 = vpop.f32.mrb[0].mxu0
      %v1303 = vadd.f32 0.0, %v1302
      %v1304 = vpop.f32.mrb[0].mxu0
      %v1305 = vadd.f32 0.0, %v1304
      %v1306 = vpop.f32.mrb[0].mxu0
      %v1307 = vadd.f32 0.0, %v1306
      %1308 = vdwg.mxu0
      %v1309 = vadd.f32 %v1101, %v1271
      %v1310 = vadd.f32 %v1103, %v1273
      %v1311 = vadd.f32 %v1105, %v1275
      %v1312 = vadd.f32 %v1107, %v1277
      %v1313 = vadd.f32 %v1111, %v1281
      %v1314 = vadd.f32 %v1113, %v1283
      %v1315 = vadd.f32 %v1115, %v1285
      %v1316 = vadd.f32 %v1117, %v1287
      %v1317 = vadd.f32 %v1121, %v1291
      %v1318 = vadd.f32 %v1123, %v1293
      %v1319 = vadd.f32 %v1125, %v1295
      %v1320 = vadd.f32 %v1127, %v1297
      %v1321 = vadd.f32 %v1131, %v1301
      %v1322 = vadd.f32 %v1133, %v1303
      %v1323 = vadd.f32 %v1135, %v1305
      %v1324 = vadd.f32 %v1137, %v1307
      %v1325 = vrot.slane %v1309, 1
      %v1326 = vrot.slane %v1310, 1
      %v1327 = vrot.slane %v1311, 1
      %v1328 = vrot.slane %v1312, 1
      %v1329 = vrot.slane %v1313, 1
      %v1330 = vrot.slane %v1314, 1
      %v1331 = vrot.slane %v1315, 1
      %v1332 = vrot.slane %v1316, 1
      %v1333 = vrot.slane %v1317, 1
      %v1334 = vrot.slane %v1318, 1
      %v1335 = vrot.slane %v1319, 1
      %v1336 = vrot.slane %v1320, 1
      %v1337 = vrot.slane %v1321, 1
      %v1338 = vrot.slane %v1322, 1
      %v1339 = vrot.slane %v1323, 1
      %v1340 = vrot.slane %v1324, 1
      %v1341 = vsel %vm775, %v1337, %v1339
      %v1342 = vsel %vm775, %v1338, %v1340
      %v1343 = vsel %vm775, %v1335, %v1337
      %v1344 = vsel %vm775, %v1336, %v1338
      %v1345 = vsel %vm775, %v1333, %v1335
      %v1346 = vsel %vm775, %v1334, %v1336
      %v1347 = vsel %vm775, %v1331, %v1333
      %v1348 = vsel %vm775, %v1332, %v1334
      %v1349 = vsel %vm775, %v1329, %v1331
      %v1350 = vsel %vm775, %v1330, %v1332
      %v1351 = vsel %vm775, %v1327, %v1329
      %v1352 = vsel %vm775, %v1328, %v1330
      %v1353 = vsel %vm775, %v1325, %v1327
      %v1354 = vsel %vm775, %v1326, %v1328
      %v1355 = vsel %vm775, %v1339, %v1325
      %v1356 = vsel %vm775, %v1340, %v1326
      %v1357 = vmax.f32 %v1309, %v1353
      %v1358 = vmax.f32 %v1310, %v1354
      %v1359 = vmax.f32 %v1311, %v1351
      %v1360 = vmax.f32 %v1312, %v1352
      %v1361 = vmax.f32 %v1313, %v1349
      %v1362 = vmax.f32 %v1314, %v1350
      %v1363 = vmax.f32 %v1315, %v1347
      %v1364 = vmax.f32 %v1316, %v1348
      %v1365 = vmax.f32 %v1317, %v1345
      %v1366 = vmax.f32 %v1318, %v1346
      %v1367 = vmax.f32 %v1319, %v1343
      %v1368 = vmax.f32 %v1320, %v1344
      %v1369 = vmax.f32 %v1321, %v1341
      %v1370 = vmax.f32 %v1322, %v1342
      %v1371 = vmax.f32 %v1323, %v1355
      %v1372 = vmax.f32 %v1324, %v1356
      %v1373 = vld [vmem:[%s2] sm:$0xf]
      %v1374 = vld [vmem:[%s2 + $0x4] sm:$0xf]
      %v1375 = vld [vmem:[%s2 + $0x8] sm:$0xf]
      %v1376 = vld [vmem:[%s2 + $0xc] sm:$0xf]
      %v1377 = vpack.c.bf16 %v1359, %v1357
      %v1378 = vpack.c.bf16 %v1360, %v1358
      %v1379 = vpack.c.bf16 %v1363, %v1361
      %v1380 = vpack.c.bf16 %v1364, %v1362
      %v1381 = vpack.c.bf16 %v1367, %v1365
      %v1382 = vpack.c.bf16 %v1368, %v1366
      %v1383 = vpack.c.bf16 %v1371, %v1369
      %v1384 = vpack.c.bf16 %v1372, %v1370
      %v1389 = vunpack.c.l.b16 %v1373
      %v1390 = vunpack.c.l.b16 %v1374
      %v1391 = vunpack.c.l.b16 %v1375
      %v1392 = vunpack.c.l.b16 %v1376
      %v1393 = vpack.c.b16 %v1390, %v1389
      %v1394 = vpack.c.b16 %v1392, %v1391
      %vm1395 = vcmask 523264
      %v1397 = vsel %vm1395, %v1393, 0
      %v1400 = vsel %vm1395, %v1394, 0
      %1402 = vmatprep.subr.bf16.mxu0 %v1378
      %1403 = vmatpush1.bf16.msra.mxu0 %v1377
      %1404 = vmatprep.subr.bf16.mxu0 %v1380
      %1405 = vmatpush1.bf16.msra.mxu0 %v1379
      %1406 = vmatprep.subr.bf16.mxu0 %v1382
      %1407 = vmatpush1.bf16.msra.mxu0 %v1381
      %1408 = vmatprep.subr.bf16.mxu0 %v1384
      %1409 = vmatpush1.bf16.msra.mxu0 %v1383
      %1410 = vmatprep.subr.bf16.mxu0 0
      %1411 = vmatpush1.bf16.msra.mxu0 0
      %1412 = vmatprep.subr.bf16.mxu0 0
      %1413 = vmatpush1.bf16.msra.mxu0 0
      %1414 = vmatprep.subr.bf16.mxu0 0
      %1415 = vmatpush1.bf16.msra.mxu0 0
      %1416 = vmatprep.subr.bf16.mxu0 0
      %1417 = vmatpush1.bf16.msra.mxu0 0
      %1418 = vmatprep.subr.bf16.mxu0 0
      %1419 = vmatpush1.bf16.msra.mxu0 0
      %1420 = vmatprep.subr.bf16.mxu0 0
      %1421 = vmatpush1.bf16.msra.mxu0 0
      %1422 = vmatprep.subr.bf16.mxu0 0
      %1423 = vmatpush1.bf16.msra.mxu0 0
      %1424 = vmatprep.subr.bf16.mxu0 0
      %1425 = vmatpush1.bf16.msra.mxu0 0
      %1426 = vmatprep.subr.bf16.mxu0 0
      %1427 = vmatpush1.bf16.msra.mxu0 0
      %1428 = vmatprep.subr.bf16.mxu0 0
      %1429 = vmatpush1.bf16.msra.mxu0 0
      %1430 = vmatprep.subr.bf16.mxu0 0
      %1431 = vmatpush1.bf16.msra.mxu0 0
      %1432 = vmatprep.subr.bf16.mxu0 0
      %1433 = vmatpush1.bf16.msra.mxu0 0
      %1434 = vmatprep.mubr.bf16.mxu0 0
      %1435 = vmatmul.mubr.bf16.gmra.mrb[0].mxu0 %v1397
      %v1436 = vpop.f32.mrb[0].mxu0
      %v1437 = vadd.f32 0.0, %v1436
      %v1438 = vpop.f32.mrb[0].mxu0
      %v1439 = vadd.f32 0.0, %v1438
      %v1440 = vpop.f32.mrb[0].mxu0
      %v1441 = vadd.f32 0.0, %v1440
      %v1442 = vpop.f32.mrb[0].mxu0
      %v1443 = vadd.f32 0.0, %v1442
      %1444 = vmatprep.mubr.bf16.mxu0 0
      %1445 = vmatmul.mubr.bf16.gmra.mrb[0].mxu0 %v1400
      %v1446 = vpop.f32.mrb[0].mxu0
      %v1447 = vadd.f32 0.0, %v1446
      %v1448 = vpop.f32.mrb[0].mxu0
      %v1449 = vadd.f32 0.0, %v1448
      %v1450 = vpop.f32.mrb[0].mxu0
      %v1451 = vadd.f32 0.0, %v1450
      %v1452 = vpop.f32.mrb[0].mxu0
      %v1453 = vadd.f32 0.0, %v1452
      %1454 = vdwg.mxu0
      %1455 = vrot.lane.b32.xlu0 %v1437, 112
      %v1456 = vpop.permute.xlu0 %1455
      %1457 = vrot.lane.b32.xlu0 %v1441, 112
      %v1458 = vpop.permute.xlu0 %1457
      %1459 = vrot.lane.b32.xlu0 %v1447, 112
      %v1460 = vpop.permute.xlu0 %1459
      %1461 = vrot.lane.b32.xlu0 %v1451, 112
      %v1462 = vpop.permute.xlu0 %1461
      %1463 = vrot.lane.b32.xlu0 %v1439, 112
      %v1464 = vpop.permute.xlu0 %1463
      %1465 = vrot.lane.b32.xlu0 %v1443, 112
      %v1466 = vpop.permute.xlu0 %1465
      %1467 = vrot.lane.b32.xlu0 %v1449, 112
      %v1468 = vpop.permute.xlu0 %1467
      %1469 = vrot.lane.b32.xlu0 %v1453, 112
      %v1470 = vpop.permute.xlu0 %1469
      %v1471 = vlaneseq
      %v1472 = vand.u32 %v1471, 127
      %vm1473 = vcmp.lt.s32.totalorder %v1472, 112
      %v1474 = vsel %vm1473, %v1456, %v1464
      %v1475 = vsel %vm1473, %v1458, %v1466
      %v1476 = vsel %vm1473, %v1460, %v1468
      %v1477 = vsel %vm1473, %v1462, %v1470
      %v1478 = vsel %vm1473, %v1464, %v1456
      %v1479 = vsel %vm1473, %v1466, %v1458
      %v1480 = vsel %vm1473, %v1468, %v1460
      %v1481 = vsel %vm1473, %v1470, %v1462
      %v1482 = vmax.f32 %v1437, %v1474
      %v1483 = vmax.f32 %v1439, %v1478
      %v1484 = vmax.f32 %v1441, %v1475
      %v1485 = vmax.f32 %v1443, %v1479
      %v1486 = vmax.f32 %v1447, %v1476
      %v1487 = vmax.f32 %v1449, %v1480
      %v1488 = vmax.f32 %v1451, %v1477
      %v1489 = vmax.f32 %v1453, %v1481
      %v1490 = vpack.c.bf16 %v1484, %v1482
      %v1491 = vpack.c.bf16 %v1485, %v1483
      %v1492 = vpack.c.bf16 %v1488, %v1486
      %v1493 = vpack.c.bf16 %v1489, %v1487
      %v1494 = vld [vmem:[%s3] sm:$0xf]
      %v1495 = vld [vmem:[%s3 + $0x4] sm:$0xf]
      %v1496 = vld [vmem:[%s3 + $0x8] sm:$0xf]
      %v1497 = vld [vmem:[%s3 + $0xc] sm:$0xf]
      %v1498 = vld [vmem:[%s3 + $0x10] sm:$0xf]
      %v1499 = vld [vmem:[%s3 + $0x14] sm:$0xf]
      %v1500 = vld [vmem:[%s3 + $0x18] sm:$0xf]
      %v1501 = vld [vmem:[%s3 + $0x1c] sm:$0xf]
      %v1502 = vld [vmem:[%s3 + $0x20] sm:$0xf]
      %v1503 = vld [vmem:[%s3 + $0x24] sm:$0xf]
      %v1504 = vld [vmem:[%s3 + $0x28] sm:$0xf]
      %v1505 = vld [vmem:[%s3 + $0x2c] sm:$0xf]
      %v1506 = vld [vmem:[%s3 + $0x30] sm:$0xf]
      %v1507 = vld [vmem:[%s3 + $0x34] sm:$0xf]
      %v1508 = vld [vmem:[%s3 + $0x38] sm:$0xf]
      %v1509 = vld [vmem:[%s3 + $0x3c] sm:$0xf]
      %v1510 = vld [vmem:[%s3 + $0x40] sm:$0xf]
      %v1511 = vld [vmem:[%s3 + $0x44] sm:$0xf]
      %v1512 = vld [vmem:[%s3 + $0x48] sm:$0xf]
      %v1513 = vld [vmem:[%s3 + $0x4c] sm:$0xf]
      %v1514 = vld [vmem:[%s3 + $0x50] sm:$0xf]
      %v1515 = vld [vmem:[%s3 + $0x54] sm:$0xf]
      %v1516 = vld [vmem:[%s3 + $0x58] sm:$0xf]
      %v1517 = vld [vmem:[%s3 + $0x5c] sm:$0xf]
      %v1518 = vld [vmem:[%s3 + $0x60] sm:$0xf]
      %v1519 = vld [vmem:[%s3 + $0x64] sm:$0xf]
      %v1520 = vld [vmem:[%s3 + $0x68] sm:$0xf]
      %v1521 = vld [vmem:[%s3 + $0x6c] sm:$0xf]
      %v1522 = vld [vmem:[%s3 + $0x70] sm:$0xf]
      %v1523 = vld [vmem:[%s3 + $0x74] sm:$0xf]
      %v1524 = vld [vmem:[%s3 + $0x78] sm:$0xf]
      %v1525 = vld [vmem:[%s3 + $0x7c] sm:$0xf]
      %v1526 = vld [vmem:[%s4] sm:$0x7]
      %v1527 = vlaneseq
      %v1528 = vshrl.u32 %v1527, 7
      %v1529 = vsub.s32 0, %v1528
      %v1530 = vrot.slane %v1526, %v1529
      %v1563 = vunpack.c.l.b16 %v1494
      %v1564 = vunpack.c.l.b16 %v1495
      %v1565 = vunpack.c.l.b16 %v1496
      %v1566 = vunpack.c.l.b16 %v1497
      %v1567 = vunpack.c.l.b16 %v1498
      %v1568 = vunpack.c.l.b16 %v1499
      %v1569 = vunpack.c.l.b16 %v1500
      %v1570 = vunpack.c.l.b16 %v1501
      %v1571 = vunpack.c.l.b16 %v1502
      %v1572 = vunpack.c.l.b16 %v1503
      %v1573 = vunpack.c.l.b16 %v1504
      %v1574 = vunpack.c.l.b16 %v1505
      %v1575 = vunpack.c.l.b16 %v1506
      %v1576 = vunpack.c.l.b16 %v1507
      %v1577 = vunpack.c.l.b16 %v1508
      %v1578 = vunpack.c.l.b16 %v1509
      %v1579 = vunpack.c.l.b16 %v1510
      %v1580 = vunpack.c.l.b16 %v1511
      %v1581 = vunpack.c.l.b16 %v1512
      %v1582 = vunpack.c.l.b16 %v1513
      %v1583 = vunpack.c.l.b16 %v1514
      %v1584 = vunpack.c.l.b16 %v1515
      %v1585 = vunpack.c.l.b16 %v1516
      %v1586 = vunpack.c.l.b16 %v1517
      %v1587 = vunpack.c.l.b16 %v1518
      %v1588 = vunpack.c.l.b16 %v1519
      %v1589 = vunpack.c.l.b16 %v1520
      %v1590 = vunpack.c.l.b16 %v1521
      %v1591 = vunpack.c.l.b16 %v1522
      %v1592 = vunpack.c.l.b16 %v1523
      %v1593 = vunpack.c.l.b16 %v1524
      %v1594 = vunpack.c.l.b16 %v1525
      %v1595 = vpack.c.b16 %v1564, %v1563
      %v1596 = vpack.c.b16 %v1566, %v1565
      %v1597 = vpack.c.b16 %v1568, %v1567
      %v1598 = vpack.c.b16 %v1570, %v1569
      %v1599 = vpack.c.b16 %v1572, %v1571
      %v1600 = vpack.c.b16 %v1574, %v1573
      %v1601 = vpack.c.b16 %v1576, %v1575
      %v1602 = vpack.c.b16 %v1578, %v1577
      %v1603 = vpack.c.b16 %v1580, %v1579
      %v1604 = vpack.c.b16 %v1582, %v1581
      %v1605 = vpack.c.b16 %v1584, %v1583
      %v1606 = vpack.c.b16 %v1586, %v1585
      %v1607 = vpack.c.b16 %v1588, %v1587
      %v1608 = vpack.c.b16 %v1590, %v1589
      %v1609 = vpack.c.b16 %v1592, %v1591
      %v1610 = vpack.c.b16 %v1594, %v1593
      %1627 = vmatprep.subr.bf16.mxu0 0
      %1628 = vmatpush1.bf16.msra.mxu0 %v1595
      %1629 = vmatprep.subr.bf16.mxu0 0
      %1630 = vmatpush1.bf16.msra.mxu0 %v1596
      %1631 = vmatprep.subr.bf16.mxu0 0
      %1632 = vmatpush1.bf16.msra.mxu0 %v1597
      %1633 = vmatprep.subr.bf16.mxu0 0
      %1634 = vmatpush1.bf16.msra.mxu0 %v1598
      %1635 = vmatprep.subr.bf16.mxu0 0
      %1636 = vmatpush1.bf16.msra.mxu0 %v1599
      %1637 = vmatprep.subr.bf16.mxu0 0
      %1638 = vmatpush1.bf16.msra.mxu0 %v1600
      %1639 = vmatprep.subr.bf16.mxu0 0
      %1640 = vmatpush1.bf16.msra.mxu0 %v1601
      %1641 = vmatprep.subr.bf16.mxu0 0
      %1642 = vmatpush1.bf16.msra.mxu0 %v1602
      %1643 = vmatprep.subr.bf16.mxu0 0
      %1644 = vmatpush1.bf16.msra.mxu0 %v1603
      %1645 = vmatprep.subr.bf16.mxu0 0
      %1646 = vmatpush1.bf16.msra.mxu0 %v1604
      %1647 = vmatprep.subr.bf16.mxu0 0
      %1648 = vmatpush1.bf16.msra.mxu0 %v1605
      %1649 = vmatprep.subr.bf16.mxu0 0
      %1650 = vmatpush1.bf16.msra.mxu0 %v1606
      %1651 = vmatprep.subr.bf16.mxu0 0
      %1652 = vmatpush1.bf16.msra.mxu0 %v1607
      %1653 = vmatprep.subr.bf16.mxu0 0
      %1654 = vmatpush1.bf16.msra.mxu0 %v1608
      %1655 = vmatprep.subr.bf16.mxu0 0
      %1656 = vmatpush1.bf16.msra.mxu0 %v1609
      %1657 = vmatprep.subr.bf16.mxu0 0
      %1658 = vmatpush1.bf16.msra.mxu0 %v1610
      %1659 = vmatprep.mubr.bf16.mxu0 %v1491
      %1660 = vmatmul.mubr.bf16.gmra.mrb[0].mxu0 %v1490
      %v1661 = vpop.f32.mrb[0].mxu0
      %v1662 = vadd.f32 %v1530, %v1661
      %v1663 = vpop.f32.mrb[0].mxu0
      %v1664 = vpop.f32.mrb[0].mxu0
      %v1665 = vadd.f32 %v1530, %v1664
      %v1666 = vpop.f32.mrb[0].mxu0
      %1667 = vmatprep.mubr.bf16.mxu0 %v1493
      %1668 = vmatmul.mubr.bf16.gmra.mrb[0].mxu0 %v1492
      %v1669 = vpop.f32.mrb[0].mxu0
      %v1670 = vadd.f32 %v1530, %v1669
      %v1671 = vpop.f32.mrb[0].mxu0
      %v1672 = vpop.f32.mrb[0].mxu0
      %v1673 = vadd.f32 %v1530, %v1672
      %v1674 = vpop.f32.mrb[0].mxu0
      %1675 = vdwg.mxu0
      %v1676 = vmax.f32 %v1662, 0.0
      %v1677 = vmax.f32 %v1665, 0.0
      %v1678 = vmax.f32 %v1670, 0.0
      %v1679 = vmax.f32 %v1673, 0.0
      %v1680 = vlaneseq
      %v1681 = vshrl.u32 %v1680, 7
      %v1682 = vsub.s32 1, %v1681
      %v1683 = vrot.slane %v1526, %v1682
      %v1684 = vmul.f32 %v1676, %v1683
      %v1685 = vmul.f32 %v1677, %v1683
      %v1686 = vmul.f32 %v1678, %v1683
      %v1687 = vmul.f32 %v1679, %v1683
      %v1688 = vlaneseq
      %v1689 = vshrl.u32 %v1688, 7
      %v1690 = vsub.s32 2, %v1689
      %v1691 = vrot.slane %v1526, %v1690
      %v1692 = vadd.f32 %v1684, %v1691
      %v1693 = vadd.f32 %v1685, %v1691
      %v1694 = vadd.f32 %v1686, %v1691
      %v1695 = vadd.f32 %v1687, %v1691
      %vm1696 = vcmp.lt.s32.totalorder %v586, 0
      %v1697 = vsub.s32 0, %v586
      %v1698 = vsel %vm1696, %v1697, %v586
      %v1699 = vshrl.u32 %v1698, 3
      %v1700 = vand.u32 %v1698, 7
      %v1701 = vsub.s32 0, %v1700
      %v1702 = vsel %vm1696, %v1701, %v1700
      %vm1703 = vcmp.lt.s32.totalorder %v587, 0
      %v1704 = vsub.s32 0, %v587
      %v1705 = vsel %vm1703, %v1704, %v587
      %v1706 = vshrl.u32 %v1705, 3
      %v1707 = vand.u32 %v1705, 7
      %v1708 = vsub.s32 0, %v1707
      %v1709 = vsel %vm1703, %v1708, %v1707
      %vm1710 = vcmp.lt.s32.totalorder %v588, 0
      %v1711 = vsub.s32 0, %v588
      %v1712 = vsel %vm1710, %v1711, %v588
      %v1713 = vshrl.u32 %v1712, 3
      %v1714 = vand.u32 %v1712, 7
      %v1715 = vsub.s32 0, %v1714
      %v1716 = vsel %vm1710, %v1715, %v1714
      %vm1717 = vcmp.lt.s32.totalorder %v589, 0
      %v1718 = vsub.s32 0, %v589
      %v1719 = vsel %vm1717, %v1718, %v589
      %v1720 = vshrl.u32 %v1719, 3
      %v1721 = vand.u32 %v1719, 7
      %v1722 = vsub.s32 0, %v1721
      %v1723 = vsel %vm1717, %v1722, %v1721
      %vm1724 = vcmp.ne.s32.totalorder %v1702, 0
      %vm1725 = vcmp.ne.s32.totalorder %v1709, 0
      %vm1726 = vcmp.ne.s32.totalorder %v1716, 0
      %vm1727 = vcmp.ne.s32.totalorder %v1723, 0
      %vm1728 = vcmp.lt.s32.totalorder %v1702, 0
      %vm1729 = vcmp.lt.s32.totalorder %v1709, 0
      %vm1730 = vcmp.lt.s32.totalorder %v1716, 0
      %vm1731 = vcmp.lt.s32.totalorder %v1723, 0
      %vm1732 = vmand %vm1728, %vm1724
      %vm1733 = vmand %vm1729, %vm1725
      %vm1734 = vmand %vm1730, %vm1726
      %vm1735 = vmand %vm1731, %vm1727
      %v1736 = vadd.s32 %v1702, 8
      %v1737 = vadd.s32 %v1709, 8
      %v1738 = vadd.s32 %v1716, 8
      %v1739 = vadd.s32 %v1723, 8
      %v1740 = vsel %vm1732, %v1736, %v1702
      %v1741 = vsel %vm1733, %v1737, %v1709
      %v1742 = vsel %vm1734, %v1738, %v1716
      %v1743 = vsel %vm1735, %v1739, %v1723
      %vm1744 = vcmp.ne.s32.totalorder %v1740, 0
      %vm1745 = vcmp.ne.s32.totalorder %v1741, 0
      %vm1746 = vcmp.ne.s32.totalorder %v1742, 0
      %vm1747 = vcmp.ne.s32.totalorder %v1743, 0
      %v1748 = vsel %vm1744, 1, 0
      %v1749 = vsel %vm1745, 1, 0
      %v1750 = vsel %vm1746, 1, 0
      %v1751 = vsel %vm1747, 1, 0
      %v1752 = vcvt.s32.f32 %v1748
      %v1753 = vcvt.s32.f32 %v1749
      %v1754 = vcvt.s32.f32 %v1750
      %v1755 = vcvt.s32.f32 %v1751
      %vm1756 = vcmp.ne.s32.totalorder %v1740, 7
      %vm1757 = vcmp.ne.s32.totalorder %v1741, 7
      %vm1758 = vcmp.ne.s32.totalorder %v1742, 7
      %vm1759 = vcmp.ne.s32.totalorder %v1743, 7
      %v1760 = vsel %vm1756, 1, 0
      %v1761 = vsel %vm1757, 1, 0
      %v1762 = vsel %vm1758, 1, 0
      %v1763 = vsel %vm1759, 1, 0
      %v1764 = vcvt.s32.f32 %v1760
      %v1765 = vcvt.s32.f32 %v1761
      %v1766 = vcvt.s32.f32 %v1762
      %v1767 = vcvt.s32.f32 %v1763
      %v1768 = vrot.slane %v1692, 7
      %v1769 = vrot.slane %v1693, 7
      %v1770 = vrot.slane %v1694, 7
      %v1771 = vrot.slane %v1695, 7
      %v1772 = vsel %vm746, %v1770, %v1771
      %v1773 = vsel %vm746, %v1769, %v1770
      %v1774 = vsel %vm746, %v1768, %v1769
      %v1775 = vsel %vm746, %v1771, %v1768
      %v1776 = vmul.f32 %v1775, %v1752
      %v1777 = vmul.f32 %v1774, %v1753
      %v1778 = vmul.f32 %v1773, %v1754
      %v1779 = vmul.f32 %v1772, %v1755
      %v1780 = vpack.c.bf16 %v1777, %v1776
      %v1781 = vpack.c.bf16 %v1779, %v1778
      %v1782 = vrot.slane %v1692, 1
      %v1783 = vrot.slane %v1693, 1
      %v1784 = vrot.slane %v1694, 1
      %v1785 = vrot.slane %v1695, 1
      %v1786 = vsel %vm775, %v1784, %v1785
      %v1787 = vsel %vm775, %v1783, %v1784
      %v1788 = vsel %vm775, %v1782, %v1783
      %v1789 = vsel %vm775, %v1785, %v1782
      %v1790 = vmul.f32 %v1788, %v1764
      %v1791 = vmul.f32 %v1787, %v1765
      %v1792 = vmul.f32 %v1786, %v1766
      %v1793 = vmul.f32 %v1789, %v1767
      %v1794 = vpack.c.bf16 %v1791, %v1790
      %v1795 = vpack.c.bf16 %v1793, %v1792
      %v1796 = vld [vmem:[%s5] sm:$0xff]
      %v1797 = vld [vmem:[%s5 + $0x8] sm:$0xff]
      %v1798 = vld [vmem:[%s5 + $0x10] sm:$0xff]
      %v1799 = vld [vmem:[%s5 + $0x18] sm:$0xff]
      %v1800 = vld [vmem:[%s5 + $0x20] sm:$0xff]
      %v1801 = vld [vmem:[%s5 + $0x28] sm:$0xff]
      %v1802 = vld [vmem:[%s5 + $0x30] sm:$0xff]
      %v1803 = vld [vmem:[%s5 + $0x38] sm:$0xff]
      %v1804 = vld [vmem:[%s5 + $0x40] sm:$0xff]
      %v1805 = vld [vmem:[%s5 + $0x48] sm:$0xff]
      %v1806 = vld [vmem:[%s5 + $0x50] sm:$0xff]
      %v1807 = vld [vmem:[%s5 + $0x58] sm:$0xff]
      %v1808 = vld [vmem:[%s5 + $0x60] sm:$0xff]
      %v1809 = vld [vmem:[%s5 + $0x68] sm:$0xff]
      %v1810 = vld [vmem:[%s5 + $0x70] sm:$0xff]
      %v1811 = vld [vmem:[%s5 + $0x78] sm:$0xff]
      %v1812 = vpack.c.bf16 %v1693, %v1692
      %v1813 = vpack.c.bf16 %v1695, %v1694
      %s1814 = scalar_lea.vmem %s5, 128
      %v1815 = vld [vmem:[%s1814] sm:$0xff]
      %v1816 = vld [vmem:[%s1814 + $0x8] sm:$0xff]
      %v1817 = vld [vmem:[%s1814 + $0x10] sm:$0xff]
      %v1818 = vld [vmem:[%s1814 + $0x18] sm:$0xff]
      %v1819 = vld [vmem:[%s1814 + $0x20] sm:$0xff]
      %v1820 = vld [vmem:[%s1814 + $0x28] sm:$0xff]
      %v1821 = vld [vmem:[%s1814 + $0x30] sm:$0xff]
      %v1822 = vld [vmem:[%s1814 + $0x38] sm:$0xff]
      %v1823 = vld [vmem:[%s1814 + $0x40] sm:$0xff]
      %v1824 = vld [vmem:[%s1814 + $0x48] sm:$0xff]
      %v1825 = vld [vmem:[%s1814 + $0x50] sm:$0xff]
      %v1826 = vld [vmem:[%s1814 + $0x58] sm:$0xff]
      %v1827 = vld [vmem:[%s1814 + $0x60] sm:$0xff]
      %v1828 = vld [vmem:[%s1814 + $0x68] sm:$0xff]
      %v1829 = vld [vmem:[%s1814 + $0x70] sm:$0xff]
      %v1830 = vld [vmem:[%s1814 + $0x78] sm:$0xff]
      %v1847 = vunpack.c.l.b16 %v1815
      %v1848 = vunpack.c.h.b16 %v1815
      %v1849 = vunpack.c.l.b16 %v1816
      %v1850 = vunpack.c.h.b16 %v1816
      %v1851 = vunpack.c.l.b16 %v1817
      %v1852 = vunpack.c.h.b16 %v1817
      %v1853 = vunpack.c.l.b16 %v1818
      %v1854 = vunpack.c.h.b16 %v1818
      %v1855 = vunpack.c.l.b16 %v1819
      %v1856 = vunpack.c.h.b16 %v1819
      %v1857 = vunpack.c.l.b16 %v1820
      %v1858 = vunpack.c.h.b16 %v1820
      %v1859 = vunpack.c.l.b16 %v1821
      %v1860 = vunpack.c.h.b16 %v1821
      %v1861 = vunpack.c.l.b16 %v1822
      %v1862 = vunpack.c.h.b16 %v1822
      %v1863 = vunpack.c.l.b16 %v1823
      %v1864 = vunpack.c.h.b16 %v1823
      %v1865 = vunpack.c.l.b16 %v1824
      %v1866 = vunpack.c.h.b16 %v1824
      %v1867 = vunpack.c.l.b16 %v1825
      %v1868 = vunpack.c.h.b16 %v1825
      %v1869 = vunpack.c.l.b16 %v1826
      %v1870 = vunpack.c.h.b16 %v1826
      %v1871 = vunpack.c.l.b16 %v1827
      %v1872 = vunpack.c.h.b16 %v1827
      %v1873 = vunpack.c.l.b16 %v1828
      %v1874 = vunpack.c.h.b16 %v1828
      %v1875 = vunpack.c.l.b16 %v1829
      %v1876 = vunpack.c.h.b16 %v1829
      %v1877 = vunpack.c.l.b16 %v1830
      %v1878 = vunpack.c.h.b16 %v1830
      %v1879 = vpack.c.b16 %v1849, %v1847
      %v1880 = vpack.c.b16 %v1850, %v1848
      %v1881 = vpack.c.b16 %v1853, %v1851
      %v1882 = vpack.c.b16 %v1854, %v1852
      %v1883 = vpack.c.b16 %v1857, %v1855
      %v1884 = vpack.c.b16 %v1858, %v1856
      %v1885 = vpack.c.b16 %v1861, %v1859
      %v1886 = vpack.c.b16 %v1862, %v1860
      %v1887 = vpack.c.b16 %v1865, %v1863
      %v1888 = vpack.c.b16 %v1866, %v1864
      %v1889 = vpack.c.b16 %v1869, %v1867
      %v1890 = vpack.c.b16 %v1870, %v1868
      %v1891 = vpack.c.b16 %v1873, %v1871
      %v1892 = vpack.c.b16 %v1874, %v1872
      %v1893 = vpack.c.b16 %v1877, %v1875
      %v1894 = vpack.c.b16 %v1878, %v1876
      %1911 = vmatprep.subr.bf16.mxu0 %v1880
      %1912 = vmatpush1.bf16.msra.mxu0 %v1879
      %1913 = vmatprep.subr.bf16.mxu0 %v1882
      %1914 = vmatpush1.bf16.msra.mxu0 %v1881
      %1915 = vmatprep.subr.bf16.mxu0 %v1884
      %1916 = vmatpush1.bf16.msra.mxu0 %v1883
      %1917 = vmatprep.subr.bf16.mxu0 %v1886
      %1918 = vmatpush1.bf16.msra.mxu0 %v1885
      %1919 = vmatprep.subr.bf16.mxu0 %v1888
      %1920 = vmatpush1.bf16.msra.mxu0 %v1887
      %1921 = vmatprep.subr.bf16.mxu0 %v1890
      %1922 = vmatpush1.bf16.msra.mxu0 %v1889
      %1923 = vmatprep.subr.bf16.mxu0 %v1892
      %1924 = vmatpush1.bf16.msra.mxu0 %v1891
      %1925 = vmatprep.subr.bf16.mxu0 %v1894
      %1926 = vmatpush1.bf16.msra.mxu0 %v1893
      %1927 = vmatprep.subr.bf16.mxu0 0
      %1928 = vmatpush1.bf16.msra.mxu0 0
      %1929 = vmatprep.subr.bf16.mxu0 0
      %1930 = vmatpush1.bf16.msra.mxu0 0
      %1931 = vmatprep.subr.bf16.mxu0 0
      %1932 = vmatpush1.bf16.msra.mxu0 0
      %1933 = vmatprep.subr.bf16.mxu0 0
      %1934 = vmatpush1.bf16.msra.mxu0 0
      %1935 = vmatprep.subr.bf16.mxu0 0
      %1936 = vmatpush1.bf16.msra.mxu0 0
      %1937 = vmatprep.subr.bf16.mxu0 0
      %1938 = vmatpush1.bf16.msra.mxu0 0
      %1939 = vmatprep.subr.bf16.mxu0 0
      %1940 = vmatpush1.bf16.msra.mxu0 0
      %1941 = vmatprep.subr.bf16.mxu0 0
      %1942 = vmatpush1.bf16.msra.mxu0 0
      %1943 = vmatprep.mubr.bf16.mxu0 0
      %1944 = vmatmul.mubr.bf16.gmra.mrb[0].mxu0 %v1812
      %v1945 = vpop.f32.mrb[0].mxu0
      %v1946 = vadd.f32 0.0, %v1945
      %v1947 = vpop.f32.mrb[0].mxu0
      %v1948 = vadd.f32 0.0, %v1947
      %v1949 = vpop.f32.mrb[0].mxu0
      %v1950 = vadd.f32 0.0, %v1949
      %v1951 = vpop.f32.mrb[0].mxu0
      %v1952 = vadd.f32 0.0, %v1951
      %1953 = vmatprep.mubr.bf16.mxu0 0
      %1954 = vmatmul.mubr.bf16.gmra.mrb[0].mxu0 %v1813
      %v1955 = vpop.f32.mrb[0].mxu0
      %v1956 = vadd.f32 0.0, %v1955
      %v1957 = vpop.f32.mrb[0].mxu0
      %v1958 = vadd.f32 0.0, %v1957
      %v1959 = vpop.f32.mrb[0].mxu0
      %v1960 = vadd.f32 0.0, %v1959
      %v1961 = vpop.f32.mrb[0].mxu0
      %v1962 = vadd.f32 0.0, %v1961
      %1963 = vdwg.mxu0
      %v1980 = vunpack.c.l.b16 %v1796
      %v1981 = vunpack.c.h.b16 %v1796
      %v1982 = vunpack.c.l.b16 %v1797
      %v1983 = vunpack.c.h.b16 %v1797
      %v1984 = vunpack.c.l.b16 %v1798
      %v1985 = vunpack.c.h.b16 %v1798
      %v1986 = vunpack.c.l.b16 %v1799
      %v1987 = vunpack.c.h.b16 %v1799
      %v1988 = vunpack.c.l.b16 %v1800
      %v1989 = vunpack.c.h.b16 %v1800
      %v1990 = vunpack.c.l.b16 %v1801
      %v1991 = vunpack.c.h.b16 %v1801
      %v1992 = vunpack.c.l.b16 %v1802
      %v1993 = vunpack.c.h.b16 %v1802
      %v1994 = vunpack.c.l.b16 %v1803
      %v1995 = vunpack.c.h.b16 %v1803
      %v1996 = vunpack.c.l.b16 %v1804
      %v1997 = vunpack.c.h.b16 %v1804
      %v1998 = vunpack.c.l.b16 %v1805
      %v1999 = vunpack.c.h.b16 %v1805
      %v2000 = vunpack.c.l.b16 %v1806
      %v2001 = vunpack.c.h.b16 %v1806
      %v2002 = vunpack.c.l.b16 %v1807
      %v2003 = vunpack.c.h.b16 %v1807
      %v2004 = vunpack.c.l.b16 %v1808
      %v2005 = vunpack.c.h.b16 %v1808
      %v2006 = vunpack.c.l.b16 %v1809
      %v2007 = vunpack.c.h.b16 %v1809
      %v2008 = vunpack.c.l.b16 %v1810
      %v2009 = vunpack.c.h.b16 %v1810
      %v2010 = vunpack.c.l.b16 %v1811
      %v2011 = vunpack.c.h.b16 %v1811
      %v2012 = vpack.c.b16 %v1982, %v1980
      %v2013 = vpack.c.b16 %v1983, %v1981
      %v2014 = vpack.c.b16 %v1986, %v1984
      %v2015 = vpack.c.b16 %v1987, %v1985
      %v2016 = vpack.c.b16 %v1990, %v1988
      %v2017 = vpack.c.b16 %v1991, %v1989
      %v2018 = vpack.c.b16 %v1994, %v1992
      %v2019 = vpack.c.b16 %v1995, %v1993
      %v2020 = vpack.c.b16 %v1998, %v1996
      %v2021 = vpack.c.b16 %v1999, %v1997
      %v2022 = vpack.c.b16 %v2002, %v2000
      %v2023 = vpack.c.b16 %v2003, %v2001
      %v2024 = vpack.c.b16 %v2006, %v2004
      %v2025 = vpack.c.b16 %v2007, %v2005
      %v2026 = vpack.c.b16 %v2010, %v2008
      %v2027 = vpack.c.b16 %v2011, %v2009
      %2044 = vmatprep.subr.bf16.mxu0 %v2013
      %2045 = vmatpush1.bf16.msra.mxu0 %v2012
      %2046 = vmatprep.subr.bf16.mxu0 %v2015
      %2047 = vmatpush1.bf16.msra.mxu0 %v2014
      %2048 = vmatprep.subr.bf16.mxu0 %v2017
      %2049 = vmatpush1.bf16.msra.mxu0 %v2016
      %2050 = vmatprep.subr.bf16.mxu0 %v2019
      %2051 = vmatpush1.bf16.msra.mxu0 %v2018
      %2052 = vmatprep.subr.bf16.mxu0 %v2021
      %2053 = vmatpush1.bf16.msra.mxu0 %v2020
      %2054 = vmatprep.subr.bf16.mxu0 %v2023
      %2055 = vmatpush1.bf16.msra.mxu0 %v2022
      %2056 = vmatprep.subr.bf16.mxu0 %v2025
      %2057 = vmatpush1.bf16.msra.mxu0 %v2024
      %2058 = vmatprep.subr.bf16.mxu0 %v2027
      %2059 = vmatpush1.bf16.msra.mxu0 %v2026
      %2060 = vmatprep.subr.bf16.mxu0 0
      %2061 = vmatpush1.bf16.msra.mxu0 0
      %2062 = vmatprep.subr.bf16.mxu0 0
      %2063 = vmatpush1.bf16.msra.mxu0 0
      %2064 = vmatprep.subr.bf16.mxu0 0
      %2065 = vmatpush1.bf16.msra.mxu0 0
      %2066 = vmatprep.subr.bf16.mxu0 0
      %2067 = vmatpush1.bf16.msra.mxu0 0
      %2068 = vmatprep.subr.bf16.mxu0 0
      %2069 = vmatpush1.bf16.msra.mxu0 0
      %2070 = vmatprep.subr.bf16.mxu0 0
      %2071 = vmatpush1.bf16.msra.mxu0 0
      %2072 = vmatprep.subr.bf16.mxu0 0
      %2073 = vmatpush1.bf16.msra.mxu0 0
      %2074 = vmatprep.subr.bf16.mxu0 0
      %2075 = vmatpush1.bf16.msra.mxu0 0
      %2076 = vmatprep.mubr.bf16.mxu0 0
      %2077 = vmatmul.mubr.bf16.gmra.mrb[0].mxu0 %v1780
      %v2078 = vpop.f32.mrb[0].mxu0
      %v2079 = vadd.f32 %v1946, %v2078
      %v2080 = vpop.f32.mrb[0].mxu0
      %v2081 = vadd.f32 %v1948, %v2080
      %v2082 = vpop.f32.mrb[0].mxu0
      %v2083 = vadd.f32 %v1950, %v2082
      %v2084 = vpop.f32.mrb[0].mxu0
      %v2085 = vadd.f32 %v1952, %v2084
      %2086 = vmatprep.mubr.bf16.mxu0 0
      %2087 = vmatmul.mubr.bf16.gmra.mrb[0].mxu0 %v1781
      %v2088 = vpop.f32.mrb[0].mxu0
      %v2089 = vadd.f32 %v1956, %v2088
      %v2090 = vpop.f32.mrb[0].mxu0
      %v2091 = vadd.f32 %v1958, %v2090
      %v2092 = vpop.f32.mrb[0].mxu0
      %v2093 = vadd.f32 %v1960, %v2092
      %v2094 = vpop.f32.mrb[0].mxu0
      %v2095 = vadd.f32 %v1962, %v2094
      %2096 = vdwg.mxu0
      %s2097 = scalar_lea.vmem %s5, 256
      %v2098 = vld [vmem:[%s2097] sm:$0xff]
      %v2099 = vld [vmem:[%s2097 + $0x8] sm:$0xff]
      %v2100 = vld [vmem:[%s2097 + $0x10] sm:$0xff]
      %v2101 = vld [vmem:[%s2097 + $0x18] sm:$0xff]
      %v2102 = vld [vmem:[%s2097 + $0x20] sm:$0xff]
      %v2103 = vld [vmem:[%s2097 + $0x28] sm:$0xff]
      %v2104 = vld [vmem:[%s2097 + $0x30] sm:$0xff]
      %v2105 = vld [vmem:[%s2097 + $0x38] sm:$0xff]
      %v2106 = vld [vmem:[%s2097 + $0x40] sm:$0xff]
      %v2107 = vld [vmem:[%s2097 + $0x48] sm:$0xff]
      %v2108 = vld [vmem:[%s2097 + $0x50] sm:$0xff]
      %v2109 = vld [vmem:[%s2097 + $0x58] sm:$0xff]
      %v2110 = vld [vmem:[%s2097 + $0x60] sm:$0xff]
      %v2111 = vld [vmem:[%s2097 + $0x68] sm:$0xff]
      %v2112 = vld [vmem:[%s2097 + $0x70] sm:$0xff]
      %v2113 = vld [vmem:[%s2097 + $0x78] sm:$0xff]
      %v2130 = vunpack.c.l.b16 %v2098
      %v2131 = vunpack.c.h.b16 %v2098
      %v2132 = vunpack.c.l.b16 %v2099
      %v2133 = vunpack.c.h.b16 %v2099
      %v2134 = vunpack.c.l.b16 %v2100
      %v2135 = vunpack.c.h.b16 %v2100
      %v2136 = vunpack.c.l.b16 %v2101
      %v2137 = vunpack.c.h.b16 %v2101
      %v2138 = vunpack.c.l.b16 %v2102
      %v2139 = vunpack.c.h.b16 %v2102
      %v2140 = vunpack.c.l.b16 %v2103
      %v2141 = vunpack.c.h.b16 %v2103
      %v2142 = vunpack.c.l.b16 %v2104
      %v2143 = vunpack.c.h.b16 %v2104
      %v2144 = vunpack.c.l.b16 %v2105
      %v2145 = vunpack.c.h.b16 %v2105
      %v2146 = vunpack.c.l.b16 %v2106
      %v2147 = vunpack.c.h.b16 %v2106
      %v2148 = vunpack.c.l.b16 %v2107
      %v2149 = vunpack.c.h.b16 %v2107
      %v2150 = vunpack.c.l.b16 %v2108
      %v2151 = vunpack.c.h.b16 %v2108
      %v2152 = vunpack.c.l.b16 %v2109
      %v2153 = vunpack.c.h.b16 %v2109
      %v2154 = vunpack.c.l.b16 %v2110
      %v2155 = vunpack.c.h.b16 %v2110
      %v2156 = vunpack.c.l.b16 %v2111
      %v2157 = vunpack.c.h.b16 %v2111
      %v2158 = vunpack.c.l.b16 %v2112
      %v2159 = vunpack.c.h.b16 %v2112
      %v2160 = vunpack.c.l.b16 %v2113
      %v2161 = vunpack.c.h.b16 %v2113
      %v2162 = vpack.c.b16 %v2132, %v2130
      %v2163 = vpack.c.b16 %v2133, %v2131
      %v2164 = vpack.c.b16 %v2136, %v2134
      %v2165 = vpack.c.b16 %v2137, %v2135
      %v2166 = vpack.c.b16 %v2140, %v2138
      %v2167 = vpack.c.b16 %v2141, %v2139
      %v2168 = vpack.c.b16 %v2144, %v2142
      %v2169 = vpack.c.b16 %v2145, %v2143
      %v2170 = vpack.c.b16 %v2148, %v2146
      %v2171 = vpack.c.b16 %v2149, %v2147
      %v2172 = vpack.c.b16 %v2152, %v2150
      %v2173 = vpack.c.b16 %v2153, %v2151
      %v2174 = vpack.c.b16 %v2156, %v2154
      %v2175 = vpack.c.b16 %v2157, %v2155
      %v2176 = vpack.c.b16 %v2160, %v2158
      %v2177 = vpack.c.b16 %v2161, %v2159
      %2194 = vmatprep.subr.bf16.mxu0 %v2163
      %2195 = vmatpush1.bf16.msra.mxu0 %v2162
      %2196 = vmatprep.subr.bf16.mxu0 %v2165
      %2197 = vmatpush1.bf16.msra.mxu0 %v2164
      %2198 = vmatprep.subr.bf16.mxu0 %v2167
      %2199 = vmatpush1.bf16.msra.mxu0 %v2166
      %2200 = vmatprep.subr.bf16.mxu0 %v2169
      %2201 = vmatpush1.bf16.msra.mxu0 %v2168
      %2202 = vmatprep.subr.bf16.mxu0 %v2171
      %2203 = vmatpush1.bf16.msra.mxu0 %v2170
      %2204 = vmatprep.subr.bf16.mxu0 %v2173
      %2205 = vmatpush1.bf16.msra.mxu0 %v2172
      %2206 = vmatprep.subr.bf16.mxu0 %v2175
      %2207 = vmatpush1.bf16.msra.mxu0 %v2174
      %2208 = vmatprep.subr.bf16.mxu0 %v2177
      %2209 = vmatpush1.bf16.msra.mxu0 %v2176
      %2210 = vmatprep.subr.bf16.mxu0 0
      %2211 = vmatpush1.bf16.msra.mxu0 0
      %2212 = vmatprep.subr.bf16.mxu0 0
      %2213 = vmatpush1.bf16.msra.mxu0 0
      %2214 = vmatprep.subr.bf16.mxu0 0
      %2215 = vmatpush1.bf16.msra.mxu0 0
      %2216 = vmatprep.subr.bf16.mxu0 0
      %2217 = vmatpush1.bf16.msra.mxu0 0
      %2218 = vmatprep.subr.bf16.mxu0 0
      %2219 = vmatpush1.bf16.msra.mxu0 0
      %2220 = vmatprep.subr.bf16.mxu0 0
      %2221 = vmatpush1.bf16.msra.mxu0 0
      %2222 = vmatprep.subr.bf16.mxu0 0
      %2223 = vmatpush1.bf16.msra.mxu0 0
      %2224 = vmatprep.subr.bf16.mxu0 0
      %2225 = vmatpush1.bf16.msra.mxu0 0
      %2226 = vmatprep.mubr.bf16.mxu0 0
      %2227 = vmatmul.mubr.bf16.gmra.mrb[0].mxu0 %v1794
      %v2228 = vpop.f32.mrb[0].mxu0
      %v2229 = vadd.f32 0.0, %v2228
      %v2230 = vpop.f32.mrb[0].mxu0
      %v2231 = vadd.f32 0.0, %v2230
      %v2232 = vpop.f32.mrb[0].mxu0
      %v2233 = vadd.f32 0.0, %v2232
      %v2234 = vpop.f32.mrb[0].mxu0
      %v2235 = vadd.f32 0.0, %v2234
      %2236 = vmatprep.mubr.bf16.mxu0 0
      %2237 = vmatmul.mubr.bf16.gmra.mrb[0].mxu0 %v1795
      %v2238 = vpop.f32.mrb[0].mxu0
      %v2239 = vadd.f32 0.0, %v2238
      %v2240 = vpop.f32.mrb[0].mxu0
      %v2241 = vadd.f32 0.0, %v2240
      %v2242 = vpop.f32.mrb[0].mxu0
      %v2243 = vadd.f32 0.0, %v2242
      %v2244 = vpop.f32.mrb[0].mxu0
      %v2245 = vadd.f32 0.0, %v2244
      %2246 = vdwg.mxu0
      %v2247 = vadd.f32 %v2079, %v2229
      %v2248 = vadd.f32 %v2081, %v2231
      %v2249 = vadd.f32 %v2083, %v2233
      %v2250 = vadd.f32 %v2085, %v2235
      %v2251 = vadd.f32 %v2089, %v2239
      %v2252 = vadd.f32 %v2091, %v2241
      %v2253 = vadd.f32 %v2093, %v2243
      %v2254 = vadd.f32 %v2095, %v2245
      %v2255 = vrot.slane %v2247, 1
      %v2256 = vrot.slane %v2248, 1
      %v2257 = vrot.slane %v2249, 1
      %v2258 = vrot.slane %v2250, 1
      %v2259 = vrot.slane %v2251, 1
      %v2260 = vrot.slane %v2252, 1
      %v2261 = vrot.slane %v2253, 1
      %v2262 = vrot.slane %v2254, 1
      %v2263 = vsel %vm775, %v2259, %v2261
      %v2264 = vsel %vm775, %v2260, %v2262
      %v2265 = vsel %vm775, %v2257, %v2259
      %v2266 = vsel %vm775, %v2258, %v2260
      %v2267 = vsel %vm775, %v2255, %v2257
      %v2268 = vsel %vm775, %v2256, %v2258
      %v2269 = vsel %vm775, %v2261, %v2255
      %v2270 = vsel %vm775, %v2262, %v2256
      %v2271 = vmax.f32 %v2247, %v2267
      %v2272 = vmax.f32 %v2248, %v2268
      %v2273 = vmax.f32 %v2249, %v2265
      %v2274 = vmax.f32 %v2250, %v2266
      %v2275 = vmax.f32 %v2251, %v2263
      %v2276 = vmax.f32 %v2252, %v2264
      %v2277 = vmax.f32 %v2253, %v2269
      %v2278 = vmax.f32 %v2254, %v2270
      %v2279 = vld [vmem:[%s6] sm:$0xf]
      %v2280 = vld [vmem:[%s6 + $0x4] sm:$0xf]
      %v2281 = vpack.c.bf16 %v2273, %v2271
      %v2282 = vpack.c.bf16 %v2274, %v2272
      %v2283 = vpack.c.bf16 %v2277, %v2275
      %v2284 = vpack.c.bf16 %v2278, %v2276
      %v2287 = vunpack.c.l.b16 %v2279
      %v2288 = vunpack.c.l.b16 %v2280
      %v2289 = vpack.c.b16 %v2288, %v2287
      %vm2290 = vcmask 261120
      %v2292 = vsel %vm2290, %v2289, 0
      %2294 = vmatprep.subr.bf16.mxu0 %v2282
      %2295 = vmatpush1.bf16.msra.mxu0 %v2281
      %2296 = vmatprep.subr.bf16.mxu0 %v2284
      %2297 = vmatpush1.bf16.msra.mxu0 %v2283
      %2298 = vmatprep.subr.bf16.mxu0 0
      %2299 = vmatpush1.bf16.msra.mxu0 0
      %2300 = vmatprep.subr.bf16.mxu0 0
      %2301 = vmatpush1.bf16.msra.mxu0 0
      %2302 = vmatprep.subr.bf16.mxu0 0
      %2303 = vmatpush1.bf16.msra.mxu0 0
      %2304 = vmatprep.subr.bf16.mxu0 0
      %2305 = vmatpush1.bf16.msra.mxu0 0
      %2306 = vmatprep.subr.bf16.mxu0 0
      %2307 = vmatpush1.bf16.msra.mxu0 0
      %2308 = vmatprep.subr.bf16.mxu0 0
      %2309 = vmatpush1.bf16.msra.mxu0 0
      %2310 = vmatprep.subr.bf16.mxu0 0
      %2311 = vmatpush1.bf16.msra.mxu0 0
      %2312 = vmatprep.subr.bf16.mxu0 0
      %2313 = vmatpush1.bf16.msra.mxu0 0
      %2314 = vmatprep.subr.bf16.mxu0 0
      %2315 = vmatpush1.bf16.msra.mxu0 0
      %2316 = vmatprep.subr.bf16.mxu0 0
      %2317 = vmatpush1.bf16.msra.mxu0 0
      %2318 = vmatprep.subr.bf16.mxu0 0
      %2319 = vmatpush1.bf16.msra.mxu0 0
      %2320 = vmatprep.subr.bf16.mxu0 0
      %2321 = vmatpush1.bf16.msra.mxu0 0
      %2322 = vmatprep.subr.bf16.mxu0 0
      %2323 = vmatpush1.bf16.msra.mxu0 0
      %2324 = vmatprep.subr.bf16.mxu0 0
      %2325 = vmatpush1.bf16.msra.mxu0 0
      %2326 = vmatprep.mubr.bf16.mxu0 0
      %2327 = vmatmul.mubr.bf16.gmra.mrb[0].mxu0 %v2292
      %v2328 = vpop.f32.mrb[0].mxu0
      %v2329 = vadd.f32 0.0, %v2328
      %v2330 = vpop.f32.mrb[0].mxu0
      %v2331 = vadd.f32 0.0, %v2330
      %v2332 = vpop.f32.mrb[0].mxu0
      %v2333 = vadd.f32 0.0, %v2332
      %v2334 = vpop.f32.mrb[0].mxu0
      %v2335 = vadd.f32 0.0, %v2334
      %2336 = vdwg.mxu0
      %2337 = vrot.lane.b32.xlu0 %v2329, 96
      %v2338 = vpop.permute.xlu0 %2337
      %2339 = vrot.lane.b32.xlu0 %v2333, 96
      %v2340 = vpop.permute.xlu0 %2339
      %2341 = vrot.lane.b32.xlu0 %v2331, 96
      %v2342 = vpop.permute.xlu0 %2341
      %2343 = vrot.lane.b32.xlu0 %v2335, 96
      %v2344 = vpop.permute.xlu0 %2343
      %vm2345 = vcmp.lt.s32.totalorder %v1472, 96
      %v2346 = vsel %vm2345, %v2338, %v2342
      %v2347 = vsel %vm2345, %v2340, %v2344
      %v2348 = vsel %vm2345, %v2342, %v2338
      %v2349 = vsel %vm2345, %v2344, %v2340
      %v2350 = vmax.f32 %v2329, %v2346
      %v2351 = vmax.f32 %v2331, %v2348
      %v2352 = vmax.f32 %v2333, %v2347
      %v2353 = vmax.f32 %v2335, %v2349
      %v2354 = vpack.c.bf16 %v2352, %v2350
      %v2355 = vpack.c.bf16 %v2353, %v2351
      %v2356 = vld [vmem:[%s7] sm:$0xf]
      %v2357 = vld [vmem:[%s7 + $0x4] sm:$0xf]
      %v2358 = vld [vmem:[%s7 + $0x8] sm:$0xf]
      %v2359 = vld [vmem:[%s7 + $0xc] sm:$0xf]
      %v2360 = vld [vmem:[%s7 + $0x10] sm:$0xf]
      %v2361 = vld [vmem:[%s7 + $0x14] sm:$0xf]
      %v2362 = vld [vmem:[%s7 + $0x18] sm:$0xf]
      %v2363 = vld [vmem:[%s7 + $0x1c] sm:$0xf]
      %v2364 = vld [vmem:[%s7 + $0x20] sm:$0xf]
      %v2365 = vld [vmem:[%s7 + $0x24] sm:$0xf]
      %v2366 = vld [vmem:[%s7 + $0x28] sm:$0xf]
      %v2367 = vld [vmem:[%s7 + $0x2c] sm:$0xf]
      %v2368 = vld [vmem:[%s7 + $0x30] sm:$0xf]
      %v2369 = vld [vmem:[%s7 + $0x34] sm:$0xf]
      %v2370 = vld [vmem:[%s7 + $0x38] sm:$0xf]
      %v2371 = vld [vmem:[%s7 + $0x3c] sm:$0xf]
      %v2372 = vld [vmem:[%s7 + $0x40] sm:$0xf]
      %v2373 = vld [vmem:[%s7 + $0x44] sm:$0xf]
      %v2374 = vld [vmem:[%s7 + $0x48] sm:$0xf]
      %v2375 = vld [vmem:[%s7 + $0x4c] sm:$0xf]
      %v2376 = vld [vmem:[%s7 + $0x50] sm:$0xf]
      %v2377 = vld [vmem:[%s7 + $0x54] sm:$0xf]
      %v2378 = vld [vmem:[%s7 + $0x58] sm:$0xf]
      %v2379 = vld [vmem:[%s7 + $0x5c] sm:$0xf]
      %v2380 = vld [vmem:[%s7 + $0x60] sm:$0xf]
      %v2381 = vld [vmem:[%s7 + $0x64] sm:$0xf]
      %v2382 = vld [vmem:[%s7 + $0x68] sm:$0xf]
      %v2383 = vld [vmem:[%s7 + $0x6c] sm:$0xf]
      %v2384 = vld [vmem:[%s7 + $0x70] sm:$0xf]
      %v2385 = vld [vmem:[%s7 + $0x74] sm:$0xf]
      %v2386 = vld [vmem:[%s7 + $0x78] sm:$0xf]
      %v2387 = vld [vmem:[%s7 + $0x7c] sm:$0xf]
      %v2388 = vld [vmem:[%s8] sm:$0x7]
      %v2389 = vlaneseq
      %v2390 = vshrl.u32 %v2389, 7
      %v2391 = vsub.s32 0, %v2390
      %v2392 = vrot.slane %v2388, %v2391
      %v2425 = vunpack.c.l.b16 %v2356
      %v2426 = vunpack.c.l.b16 %v2357
      %v2427 = vunpack.c.l.b16 %v2358
      %v2428 = vunpack.c.l.b16 %v2359
      %v2429 = vunpack.c.l.b16 %v2360
      %v2430 = vunpack.c.l.b16 %v2361
      %v2431 = vunpack.c.l.b16 %v2362
      %v2432 = vunpack.c.l.b16 %v2363
      %v2433 = vunpack.c.l.b16 %v2364
      %v2434 = vunpack.c.l.b16 %v2365
      %v2435 = vunpack.c.l.b16 %v2366
      %v2436 = vunpack.c.l.b16 %v2367
      %v2437 = vunpack.c.l.b16 %v2368
      %v2438 = vunpack.c.l.b16 %v2369
      %v2439 = vunpack.c.l.b16 %v2370
      %v2440 = vunpack.c.l.b16 %v2371
      %v2441 = vunpack.c.l.b16 %v2372
      %v2442 = vunpack.c.l.b16 %v2373
      %v2443 = vunpack.c.l.b16 %v2374
      %v2444 = vunpack.c.l.b16 %v2375
      %v2445 = vunpack.c.l.b16 %v2376
      %v2446 = vunpack.c.l.b16 %v2377
      %v2447 = vunpack.c.l.b16 %v2378
      %v2448 = vunpack.c.l.b16 %v2379
      %v2449 = vunpack.c.l.b16 %v2380
      %v2450 = vunpack.c.l.b16 %v2381
      %v2451 = vunpack.c.l.b16 %v2382
      %v2452 = vunpack.c.l.b16 %v2383
      %v2453 = vunpack.c.l.b16 %v2384
      %v2454 = vunpack.c.l.b16 %v2385
      %v2455 = vunpack.c.l.b16 %v2386
      %v2456 = vunpack.c.l.b16 %v2387
      %v2457 = vpack.c.b16 %v2426, %v2425
      %v2458 = vpack.c.b16 %v2428, %v2427
      %v2459 = vpack.c.b16 %v2430, %v2429
      %v2460 = vpack.c.b16 %v2432, %v2431
      %v2461 = vpack.c.b16 %v2434, %v2433
      %v2462 = vpack.c.b16 %v2436, %v2435
      %v2463 = vpack.c.b16 %v2438, %v2437
      %v2464 = vpack.c.b16 %v2440, %v2439
      %v2465 = vpack.c.b16 %v2442, %v2441
      %v2466 = vpack.c.b16 %v2444, %v2443
      %v2467 = vpack.c.b16 %v2446, %v2445
      %v2468 = vpack.c.b16 %v2448, %v2447
      %v2469 = vpack.c.b16 %v2450, %v2449
      %v2470 = vpack.c.b16 %v2452, %v2451
      %v2471 = vpack.c.b16 %v2454, %v2453
      %v2472 = vpack.c.b16 %v2456, %v2455
      %2489 = vmatprep.subr.bf16.mxu0 0
      %2490 = vmatpush1.bf16.msra.mxu0 %v2457
      %2491 = vmatprep.subr.bf16.mxu0 0
      %2492 = vmatpush1.bf16.msra.mxu0 %v2458
      %2493 = vmatprep.subr.bf16.mxu0 0
      %2494 = vmatpush1.bf16.msra.mxu0 %v2459
      %2495 = vmatprep.subr.bf16.mxu0 0
      %2496 = vmatpush1.bf16.msra.mxu0 %v2460
      %2497 = vmatprep.subr.bf16.mxu0 0
      %2498 = vmatpush1.bf16.msra.mxu0 %v2461
      %2499 = vmatprep.subr.bf16.mxu0 0
      %2500 = vmatpush1.bf16.msra.mxu0 %v2462
      %2501 = vmatprep.subr.bf16.mxu0 0
      %2502 = vmatpush1.bf16.msra.mxu0 %v2463
      %2503 = vmatprep.subr.bf16.mxu0 0
      %2504 = vmatpush1.bf16.msra.mxu0 %v2464
      %2505 = vmatprep.subr.bf16.mxu0 0
      %2506 = vmatpush1.bf16.msra.mxu0 %v2465
      %2507 = vmatprep.subr.bf16.mxu0 0
      %2508 = vmatpush1.bf16.msra.mxu0 %v2466
      %2509 = vmatprep.subr.bf16.mxu0 0
      %2510 = vmatpush1.bf16.msra.mxu0 %v2467
      %2511 = vmatprep.subr.bf16.mxu0 0
      %2512 = vmatpush1.bf16.msra.mxu0 %v2468
      %2513 = vmatprep.subr.bf16.mxu0 0
      %2514 = vmatpush1.bf16.msra.mxu0 %v2469
      %2515 = vmatprep.subr.bf16.mxu0 0
      %2516 = vmatpush1.bf16.msra.mxu0 %v2470
      %2517 = vmatprep.subr.bf16.mxu0 0
      %2518 = vmatpush1.bf16.msra.mxu0 %v2471
      %2519 = vmatprep.subr.bf16.mxu0 0
      %2520 = vmatpush1.bf16.msra.mxu0 %v2472
      %2521 = vmatprep.mubr.bf16.mxu0 %v2355
      %2522 = vmatmul.mubr.bf16.gmra.mrb[0].mxu0 %v2354
      %v2523 = vpop.f32.mrb[0].mxu0
      %v2524 = vadd.f32 %v2392, %v2523
      %v2525 = vpop.f32.mrb[0].mxu0
      %v2526 = vpop.f32.mrb[0].mxu0
      %v2527 = vadd.f32 %v2392, %v2526
      %v2528 = vpop.f32.mrb[0].mxu0
      %2529 = vdwg.mxu0
      %v2530 = vmax.f32 %v2524, 0.0
      %v2531 = vmax.f32 %v2527, 0.0
      %v2532 = vlaneseq
      %v2533 = vshrl.u32 %v2532, 7
      %v2534 = vsub.s32 1, %v2533
      %v2535 = vrot.slane %v2388, %v2534
      %v2536 = vmul.f32 %v2530, %v2535
      %v2537 = vmul.f32 %v2531, %v2535
      %v2538 = vlaneseq
      %v2539 = vshrl.u32 %v2538, 7
      %v2540 = vsub.s32 2, %v2539
      %v2541 = vrot.slane %v2388, %v2540
      %v2542 = vadd.f32 %v2536, %v2541
      %v2543 = vadd.f32 %v2537, %v2541
      %vm2544 = vcmp.lt.s32.totalorder %v586, 0
      %v2545 = vsub.s32 0, %v586
      %v2546 = vsel %vm2544, %v2545, %v586
      %v2547 = vshrl.u32 %v2546, 2
      %v2548 = vand.u32 %v2546, 3
      %v2549 = vsub.s32 0, %v2548
      %v2550 = vsel %vm2544, %v2549, %v2548
      %vm2551 = vcmp.lt.s32.totalorder %v587, 0
      %v2552 = vsub.s32 0, %v587
      %v2553 = vsel %vm2551, %v2552, %v587
      %v2554 = vshrl.u32 %v2553, 2
      %v2555 = vand.u32 %v2553, 3
      %v2556 = vsub.s32 0, %v2555
      %v2557 = vsel %vm2551, %v2556, %v2555
      %vm2558 = vcmp.ne.s32.totalorder %v2550, 0
      %vm2559 = vcmp.ne.s32.totalorder %v2557, 0
      %vm2560 = vcmp.lt.s32.totalorder %v2550, 0
      %vm2561 = vcmp.lt.s32.totalorder %v2557, 0
      %vm2562 = vmand %vm2560, %vm2558
      %vm2563 = vmand %vm2561, %vm2559
      %v2564 = vadd.s32 %v2550, 4
      %v2565 = vadd.s32 %v2557, 4
      %v2566 = vsel %vm2562, %v2564, %v2550
      %v2567 = vsel %vm2563, %v2565, %v2557
      %vm2568 = vcmp.ne.s32.totalorder %v2566, 0
      %vm2569 = vcmp.ne.s32.totalorder %v2567, 0
      %v2570 = vsel %vm2568, 1, 0
      %v2571 = vsel %vm2569, 1, 0
      %v2572 = vcvt.s32.f32 %v2570
      %v2573 = vcvt.s32.f32 %v2571
      %vm2574 = vcmp.ne.s32.totalorder %v2566, 3
      %vm2575 = vcmp.ne.s32.totalorder %v2567, 3
      %v2576 = vsel %vm2574, 1, 0
      %v2577 = vsel %vm2575, 1, 0
      %v2578 = vcvt.s32.f32 %v2576
      %v2579 = vcvt.s32.f32 %v2577
      %v2580 = vrot.slane %v2542, 7
      %v2581 = vrot.slane %v2543, 7
      %v2582 = vsel %vm746, %v2580, %v2581
      %v2583 = vsel %vm746, %v2581, %v2580
      %v2584 = vmul.f32 %v2583, %v2572
      %v2585 = vmul.f32 %v2582, %v2573
      %v2586 = vpack.c.bf16 %v2585, %v2584
      %v2587 = vrot.slane %v2542, 1
      %v2588 = vrot.slane %v2543, 1
      %v2589 = vsel %vm775, %v2587, %v2588
      %v2590 = vsel %vm775, %v2588, %v2587
      %v2591 = vmul.f32 %v2589, %v2578
      %v2592 = vmul.f32 %v2590, %v2579
      %v2593 = vpack.c.bf16 %v2592, %v2591
      %v2594 = vld [vmem:[%s9] sm:$0xff]
      %v2595 = vld [vmem:[%s9 + $0x8] sm:$0xff]
      %v2596 = vld [vmem:[%s9 + $0x10] sm:$0xff]
      %v2597 = vld [vmem:[%s9 + $0x18] sm:$0xff]
      %v2598 = vld [vmem:[%s9 + $0x20] sm:$0xff]
      %v2599 = vld [vmem:[%s9 + $0x28] sm:$0xff]
      %v2600 = vld [vmem:[%s9 + $0x30] sm:$0xff]
      %v2601 = vld [vmem:[%s9 + $0x38] sm:$0xff]
      %v2602 = vld [vmem:[%s9 + $0x40] sm:$0xff]
      %v2603 = vld [vmem:[%s9 + $0x48] sm:$0xff]
      %v2604 = vld [vmem:[%s9 + $0x50] sm:$0xff]
      %v2605 = vld [vmem:[%s9 + $0x58] sm:$0xff]
      %v2606 = vld [vmem:[%s9 + $0x60] sm:$0xff]
      %v2607 = vld [vmem:[%s9 + $0x68] sm:$0xff]
      %v2608 = vld [vmem:[%s9 + $0x70] sm:$0xff]
      %v2609 = vld [vmem:[%s9 + $0x78] sm:$0xff]
      %v2610 = vpack.c.bf16 %v2543, %v2542
      %s2611 = scalar_lea.vmem %s9, 128
      %v2612 = vld [vmem:[%s2611] sm:$0xff]
      %v2613 = vld [vmem:[%s2611 + $0x8] sm:$0xff]
      %v2614 = vld [vmem:[%s2611 + $0x10] sm:$0xff]
      %v2615 = vld [vmem:[%s2611 + $0x18] sm:$0xff]
      %v2616 = vld [vmem:[%s2611 + $0x20] sm:$0xff]
      %v2617 = vld [vmem:[%s2611 + $0x28] sm:$0xff]
      %v2618 = vld [vmem:[%s2611 + $0x30] sm:$0xff]
      %v2619 = vld [vmem:[%s2611 + $0x38] sm:$0xff]
      %v2620 = vld [vmem:[%s2611 + $0x40] sm:$0xff]
      %v2621 = vld [vmem:[%s2611 + $0x48] sm:$0xff]
      %v2622 = vld [vmem:[%s2611 + $0x50] sm:$0xff]
      %v2623 = vld [vmem:[%s2611 + $0x58] sm:$0xff]
      %v2624 = vld [vmem:[%s2611 + $0x60] sm:$0xff]
      %v2625 = vld [vmem:[%s2611 + $0x68] sm:$0xff]
      %v2626 = vld [vmem:[%s2611 + $0x70] sm:$0xff]
      %v2627 = vld [vmem:[%s2611 + $0x78] sm:$0xff]
      %v2644 = vunpack.c.l.b16 %v2612
      %v2645 = vunpack.c.h.b16 %v2612
      %v2646 = vunpack.c.l.b16 %v2613
      %v2647 = vunpack.c.h.b16 %v2613
      %v2648 = vunpack.c.l.b16 %v2614
      %v2649 = vunpack.c.h.b16 %v2614
      %v2650 = vunpack.c.l.b16 %v2615
      %v2651 = vunpack.c.h.b16 %v2615
      %v2652 = vunpack.c.l.b16 %v2616
      %v2653 = vunpack.c.h.b16 %v2616
      %v2654 = vunpack.c.l.b16 %v2617
      %v2655 = vunpack.c.h.b16 %v2617
      %v2656 = vunpack.c.l.b16 %v2618
      %v2657 = vunpack.c.h.b16 %v2618
      %v2658 = vunpack.c.l.b16 %v2619
      %v2659 = vunpack.c.h.b16 %v2619
      %v2660 = vunpack.c.l.b16 %v2620
      %v2661 = vunpack.c.h.b16 %v2620
      %v2662 = vunpack.c.l.b16 %v2621
      %v2663 = vunpack.c.h.b16 %v2621
      %v2664 = vunpack.c.l.b16 %v2622
      %v2665 = vunpack.c.h.b16 %v2622
      %v2666 = vunpack.c.l.b16 %v2623
      %v2667 = vunpack.c.h.b16 %v2623
      %v2668 = vunpack.c.l.b16 %v2624
      %v2669 = vunpack.c.h.b16 %v2624
      %v2670 = vunpack.c.l.b16 %v2625
      %v2671 = vunpack.c.h.b16 %v2625
      %v2672 = vunpack.c.l.b16 %v2626
      %v2673 = vunpack.c.h.b16 %v2626
      %v2674 = vunpack.c.l.b16 %v2627
      %v2675 = vunpack.c.h.b16 %v2627
      %v2676 = vpack.c.b16 %v2646, %v2644
      %v2677 = vpack.c.b16 %v2647, %v2645
      %v2678 = vpack.c.b16 %v2650, %v2648
      %v2679 = vpack.c.b16 %v2651, %v2649
      %v2680 = vpack.c.b16 %v2654, %v2652
      %v2681 = vpack.c.b16 %v2655, %v2653
      %v2682 = vpack.c.b16 %v2658, %v2656
      %v2683 = vpack.c.b16 %v2659, %v2657
      %v2684 = vpack.c.b16 %v2662, %v2660
      %v2685 = vpack.c.b16 %v2663, %v2661
      %v2686 = vpack.c.b16 %v2666, %v2664
      %v2687 = vpack.c.b16 %v2667, %v2665
      %v2688 = vpack.c.b16 %v2670, %v2668
      %v2689 = vpack.c.b16 %v2671, %v2669
      %v2690 = vpack.c.b16 %v2674, %v2672
      %v2691 = vpack.c.b16 %v2675, %v2673
      %2708 = vmatprep.subr.bf16.mxu0 %v2677
      %2709 = vmatpush1.bf16.msra.mxu0 %v2676
      %2710 = vmatprep.subr.bf16.mxu0 %v2679
      %2711 = vmatpush1.bf16.msra.mxu0 %v2678
      %2712 = vmatprep.subr.bf16.mxu0 %v2681
      %2713 = vmatpush1.bf16.msra.mxu0 %v2680
      %2714 = vmatprep.subr.bf16.mxu0 %v2683
      %2715 = vmatpush1.bf16.msra.mxu0 %v2682
      %2716 = vmatprep.subr.bf16.mxu0 %v2685
      %2717 = vmatpush1.bf16.msra.mxu0 %v2684
      %2718 = vmatprep.subr.bf16.mxu0 %v2687
      %2719 = vmatpush1.bf16.msra.mxu0 %v2686
      %2720 = vmatprep.subr.bf16.mxu0 %v2689
      %2721 = vmatpush1.bf16.msra.mxu0 %v2688
      %2722 = vmatprep.subr.bf16.mxu0 %v2691
      %2723 = vmatpush1.bf16.msra.mxu0 %v2690
      %2724 = vmatprep.subr.bf16.mxu0 0
      %2725 = vmatpush1.bf16.msra.mxu0 0
      %2726 = vmatprep.subr.bf16.mxu0 0
      %2727 = vmatpush1.bf16.msra.mxu0 0
      %2728 = vmatprep.subr.bf16.mxu0 0
      %2729 = vmatpush1.bf16.msra.mxu0 0
      %2730 = vmatprep.subr.bf16.mxu0 0
      %2731 = vmatpush1.bf16.msra.mxu0 0
      %2732 = vmatprep.subr.bf16.mxu0 0
      %2733 = vmatpush1.bf16.msra.mxu0 0
      %2734 = vmatprep.subr.bf16.mxu0 0
      %2735 = vmatpush1.bf16.msra.mxu0 0
      %2736 = vmatprep.subr.bf16.mxu0 0
      %2737 = vmatpush1.bf16.msra.mxu0 0
      %2738 = vmatprep.subr.bf16.mxu0 0
      %2739 = vmatpush1.bf16.msra.mxu0 0
      %2740 = vmatprep.mubr.bf16.mxu0 0
      %2741 = vmatmul.mubr.bf16.gmra.mrb[0].mxu0 %v2610
      %v2742 = vpop.f32.mrb[0].mxu0
      %v2743 = vadd.f32 0.0, %v2742
      %v2744 = vpop.f32.mrb[0].mxu0
      %v2745 = vadd.f32 0.0, %v2744
      %v2746 = vpop.f32.mrb[0].mxu0
      %v2747 = vadd.f32 0.0, %v2746
      %v2748 = vpop.f32.mrb[0].mxu0
      %v2749 = vadd.f32 0.0, %v2748
      %2750 = vdwg.mxu0
      %v2767 = vunpack.c.l.b16 %v2594
      %v2768 = vunpack.c.h.b16 %v2594
      %v2769 = vunpack.c.l.b16 %v2595
      %v2770 = vunpack.c.h.b16 %v2595
      %v2771 = vunpack.c.l.b16 %v2596
      %v2772 = vunpack.c.h.b16 %v2596
      %v2773 = vunpack.c.l.b16 %v2597
      %v2774 = vunpack.c.h.b16 %v2597
      %v2775 = vunpack.c.l.b16 %v2598
      %v2776 = vunpack.c.h.b16 %v2598
      %v2777 = vunpack.c.l.b16 %v2599
      %v2778 = vunpack.c.h.b16 %v2599
      %v2779 = vunpack.c.l.b16 %v2600
      %v2780 = vunpack.c.h.b16 %v2600
      %v2781 = vunpack.c.l.b16 %v2601
      %v2782 = vunpack.c.h.b16 %v2601
      %v2783 = vunpack.c.l.b16 %v2602
      %v2784 = vunpack.c.h.b16 %v2602
      %v2785 = vunpack.c.l.b16 %v2603
      %v2786 = vunpack.c.h.b16 %v2603
      %v2787 = vunpack.c.l.b16 %v2604
      %v2788 = vunpack.c.h.b16 %v2604
      %v2789 = vunpack.c.l.b16 %v2605
      %v2790 = vunpack.c.h.b16 %v2605
      %v2791 = vunpack.c.l.b16 %v2606
      %v2792 = vunpack.c.h.b16 %v2606
      %v2793 = vunpack.c.l.b16 %v2607
      %v2794 = vunpack.c.h.b16 %v2607
      %v2795 = vunpack.c.l.b16 %v2608
      %v2796 = vunpack.c.h.b16 %v2608
      %v2797 = vunpack.c.l.b16 %v2609
      %v2798 = vunpack.c.h.b16 %v2609
      %v2799 = vpack.c.b16 %v2769, %v2767
      %v2800 = vpack.c.b16 %v2770, %v2768
      %v2801 = vpack.c.b16 %v2773, %v2771
      %v2802 = vpack.c.b16 %v2774, %v2772
      %v2803 = vpack.c.b16 %v2777, %v2775
      %v2804 = vpack.c.b16 %v2778, %v2776
      %v2805 = vpack.c.b16 %v2781, %v2779
      %v2806 = vpack.c.b16 %v2782, %v2780
      %v2807 = vpack.c.b16 %v2785, %v2783
      %v2808 = vpack.c.b16 %v2786, %v2784
      %v2809 = vpack.c.b16 %v2789, %v2787
      %v2810 = vpack.c.b16 %v2790, %v2788
      %v2811 = vpack.c.b16 %v2793, %v2791
      %v2812 = vpack.c.b16 %v2794, %v2792
      %v2813 = vpack.c.b16 %v2797, %v2795
      %v2814 = vpack.c.b16 %v2798, %v2796
      %2831 = vmatprep.subr.bf16.mxu0 %v2800
      %2832 = vmatpush1.bf16.msra.mxu0 %v2799
      %2833 = vmatprep.subr.bf16.mxu0 %v2802
      %2834 = vmatpush1.bf16.msra.mxu0 %v2801
      %2835 = vmatprep.subr.bf16.mxu0 %v2804
      %2836 = vmatpush1.bf16.msra.mxu0 %v2803
      %2837 = vmatprep.subr.bf16.mxu0 %v2806
      %2838 = vmatpush1.bf16.msra.mxu0 %v2805
      %2839 = vmatprep.subr.bf16.mxu0 %v2808
      %2840 = vmatpush1.bf16.msra.mxu0 %v2807
      %2841 = vmatprep.subr.bf16.mxu0 %v2810
      %2842 = vmatpush1.bf16.msra.mxu0 %v2809
      %2843 = vmatprep.subr.bf16.mxu0 %v2812
      %2844 = vmatpush1.bf16.msra.mxu0 %v2811
      %2845 = vmatprep.subr.bf16.mxu0 %v2814
      %2846 = vmatpush1.bf16.msra.mxu0 %v2813
      %2847 = vmatprep.subr.bf16.mxu0 0
      %2848 = vmatpush1.bf16.msra.mxu0 0
      %2849 = vmatprep.subr.bf16.mxu0 0
      %2850 = vmatpush1.bf16.msra.mxu0 0
      %2851 = vmatprep.subr.bf16.mxu0 0
      %2852 = vmatpush1.bf16.msra.mxu0 0
      %2853 = vmatprep.subr.bf16.mxu0 0
      %2854 = vmatpush1.bf16.msra.mxu0 0
      %2855 = vmatprep.subr.bf16.mxu0 0
      %2856 = vmatpush1.bf16.msra.mxu0 0
      %2857 = vmatprep.subr.bf16.mxu0 0
      %2858 = vmatpush1.bf16.msra.mxu0 0
      %2859 = vmatprep.subr.bf16.mxu0 0
      %2860 = vmatpush1.bf16.msra.mxu0 0
      %2861 = vmatprep.subr.bf16.mxu0 0
      %2862 = vmatpush1.bf16.msra.mxu0 0
      %2863 = vmatprep.mubr.bf16.mxu0 0
      %2864 = vmatmul.mubr.bf16.gmra.mrb[0].mxu0 %v2586
      %v2865 = vpop.f32.mrb[0].mxu0
      %v2866 = vadd.f32 %v2743, %v2865
      %v2867 = vpop.f32.mrb[0].mxu0
      %v2868 = vadd.f32 %v2745, %v2867
      %v2869 = vpop.f32.mrb[0].mxu0
      %v2870 = vadd.f32 %v2747, %v2869
      %v2871 = vpop.f32.mrb[0].mxu0
      %v2872 = vadd.f32 %v2749, %v2871
      %2873 = vdwg.mxu0
      %s2874 = scalar_lea.vmem %s9, 256
      %v2875 = vld [vmem:[%s2874] sm:$0xff]
      %v2876 = vld [vmem:[%s2874 + $0x8] sm:$0xff]
      %v2877 = vld [vmem:[%s2874 + $0x10] sm:$0xff]
      %v2878 = vld [vmem:[%s2874 + $0x18] sm:$0xff]
      %v2879 = vld [vmem:[%s2874 + $0x20] sm:$0xff]
      %v2880 = vld [vmem:[%s2874 + $0x28] sm:$0xff]
      %v2881 = vld [vmem:[%s2874 + $0x30] sm:$0xff]
      %v2882 = vld [vmem:[%s2874 + $0x38] sm:$0xff]
      %v2883 = vld [vmem:[%s2874 + $0x40] sm:$0xff]
      %v2884 = vld [vmem:[%s2874 + $0x48] sm:$0xff]
      %v2885 = vld [vmem:[%s2874 + $0x50] sm:$0xff]
      %v2886 = vld [vmem:[%s2874 + $0x58] sm:$0xff]
      %v2887 = vld [vmem:[%s2874 + $0x60] sm:$0xff]
      %v2888 = vld [vmem:[%s2874 + $0x68] sm:$0xff]
      %v2889 = vld [vmem:[%s2874 + $0x70] sm:$0xff]
      %v2890 = vld [vmem:[%s2874 + $0x78] sm:$0xff]
      %v2907 = vunpack.c.l.b16 %v2875
      %v2908 = vunpack.c.h.b16 %v2875
      %v2909 = vunpack.c.l.b16 %v2876
      %v2910 = vunpack.c.h.b16 %v2876
      %v2911 = vunpack.c.l.b16 %v2877
      %v2912 = vunpack.c.h.b16 %v2877
      %v2913 = vunpack.c.l.b16 %v2878
      %v2914 = vunpack.c.h.b16 %v2878
      %v2915 = vunpack.c.l.b16 %v2879
      %v2916 = vunpack.c.h.b16 %v2879
      %v2917 = vunpack.c.l.b16 %v2880
      %v2918 = vunpack.c.h.b16 %v2880
      %v2919 = vunpack.c.l.b16 %v2881
      %v2920 = vunpack.c.h.b16 %v2881
      %v2921 = vunpack.c.l.b16 %v2882
      %v2922 = vunpack.c.h.b16 %v2882
      %v2923 = vunpack.c.l.b16 %v2883
      %v2924 = vunpack.c.h.b16 %v2883
      %v2925 = vunpack.c.l.b16 %v2884
      %v2926 = vunpack.c.h.b16 %v2884
      %v2927 = vunpack.c.l.b16 %v2885
      %v2928 = vunpack.c.h.b16 %v2885
      %v2929 = vunpack.c.l.b16 %v2886
      %v2930 = vunpack.c.h.b16 %v2886
      %v2931 = vunpack.c.l.b16 %v2887
      %v2932 = vunpack.c.h.b16 %v2887
      %v2933 = vunpack.c.l.b16 %v2888
      %v2934 = vunpack.c.h.b16 %v2888
      %v2935 = vunpack.c.l.b16 %v2889
      %v2936 = vunpack.c.h.b16 %v2889
      %v2937 = vunpack.c.l.b16 %v2890
      %v2938 = vunpack.c.h.b16 %v2890
      %v2939 = vpack.c.b16 %v2909, %v2907
      %v2940 = vpack.c.b16 %v2910, %v2908
      %v2941 = vpack.c.b16 %v2913, %v2911
      %v2942 = vpack.c.b16 %v2914, %v2912
      %v2943 = vpack.c.b16 %v2917, %v2915
      %v2944 = vpack.c.b16 %v2918, %v2916
      %v2945 = vpack.c.b16 %v2921, %v2919
      %v2946 = vpack.c.b16 %v2922, %v2920
      %v2947 = vpack.c.b16 %v2925, %v2923
      %v2948 = vpack.c.b16 %v2926, %v2924
      %v2949 = vpack.c.b16 %v2929, %v2927
      %v2950 = vpack.c.b16 %v2930, %v2928
      %v2951 = vpack.c.b16 %v2933, %v2931
      %v2952 = vpack.c.b16 %v2934, %v2932
      %v2953 = vpack.c.b16 %v2937, %v2935
      %v2954 = vpack.c.b16 %v2938, %v2936
      %2971 = vmatprep.subr.bf16.mxu0 %v2940
      %2972 = vmatpush1.bf16.msra.mxu0 %v2939
      %2973 = vmatprep.subr.bf16.mxu0 %v2942
      %2974 = vmatpush1.bf16.msra.mxu0 %v2941
      %2975 = vmatprep.subr.bf16.mxu0 %v2944
      %2976 = vmatpush1.bf16.msra.mxu0 %v2943
      %2977 = vmatprep.subr.bf16.mxu0 %v2946
      %2978 = vmatpush1.bf16.msra.mxu0 %v2945
      %2979 = vmatprep.subr.bf16.mxu0 %v2948
      %2980 = vmatpush1.bf16.msra.mxu0 %v2947
      %2981 = vmatprep.subr.bf16.mxu0 %v2950
      %2982 = vmatpush1.bf16.msra.mxu0 %v2949
      %2983 = vmatprep.subr.bf16.mxu0 %v2952
      %2984 = vmatpush1.bf16.msra.mxu0 %v2951
      %2985 = vmatprep.subr.bf16.mxu0 %v2954
      %2986 = vmatpush1.bf16.msra.mxu0 %v2953
      %2987 = vmatprep.subr.bf16.mxu0 0
      %2988 = vmatpush1.bf16.msra.mxu0 0
      %2989 = vmatprep.subr.bf16.mxu0 0
      %2990 = vmatpush1.bf16.msra.mxu0 0
      %2991 = vmatprep.subr.bf16.mxu0 0
      %2992 = vmatpush1.bf16.msra.mxu0 0
      %2993 = vmatprep.subr.bf16.mxu0 0
      %2994 = vmatpush1.bf16.msra.mxu0 0
      %2995 = vmatprep.subr.bf16.mxu0 0
      %2996 = vmatpush1.bf16.msra.mxu0 0
      %2997 = vmatprep.subr.bf16.mxu0 0
      %2998 = vmatpush1.bf16.msra.mxu0 0
      %2999 = vmatprep.subr.bf16.mxu0 0
      %3000 = vmatpush1.bf16.msra.mxu0 0
      %3001 = vmatprep.subr.bf16.mxu0 0
      %3002 = vmatpush1.bf16.msra.mxu0 0
      %3003 = vmatprep.mubr.bf16.mxu0 0
      %3004 = vmatmul.mubr.bf16.gmra.mrb[0].mxu0 %v2593
      %v3005 = vpop.f32.mrb[0].mxu0
      %v3006 = vadd.f32 0.0, %v3005
      %v3007 = vpop.f32.mrb[0].mxu0
      %v3008 = vadd.f32 0.0, %v3007
      %v3009 = vpop.f32.mrb[0].mxu0
      %v3010 = vadd.f32 0.0, %v3009
      %v3011 = vpop.f32.mrb[0].mxu0
      %v3012 = vadd.f32 0.0, %v3011
      %3013 = vdwg.mxu0
      %v3014 = vadd.f32 %v2866, %v3006
      %v3015 = vadd.f32 %v2868, %v3008
      %v3016 = vadd.f32 %v2870, %v3010
      %v3017 = vadd.f32 %v2872, %v3012
      %v3018 = vrot.slane %v3014, 1
      %v3019 = vrot.slane %v3015, 1
      %v3020 = vrot.slane %v3016, 1
      %v3021 = vrot.slane %v3017, 1
      %v3022 = vsel %vm775, %v3018, %v3020
      %v3023 = vsel %vm775, %v3019, %v3021
      %v3024 = vsel %vm775, %v3020, %v3018
      %v3025 = vsel %vm775, %v3021, %v3019
      %v3026 = vmax.f32 %v3014, %v3022
      %v3027 = vmax.f32 %v3015, %v3023
      %v3028 = vmax.f32 %v3016, %v3024
      %v3029 = vmax.f32 %v3017, %v3025
      %v3030 = vld [vmem:[%s10] sm:$0xf]
      %v3031 = vpack.c.bf16 %v3028, %v3026
      %v3032 = vpack.c.bf16 %v3029, %v3027
      %vm3033 = vcmask 130048
      %v3035 = vsel %vm3033, %v3030, 0
      %3037 = vmatprep.subr.bf16.mxu0 %v3032
      %3038 = vmatpush1.bf16.msra.mxu0 %v3031
      %3039 = vmatprep.subr.bf16.mxu0 0
      %3040 = vmatpush1.bf16.msra.mxu0 0
      %3041 = vmatprep.subr.bf16.mxu0 0
      %3042 = vmatpush1.bf16.msra.mxu0 0
      %3043 = vmatprep.subr.bf16.mxu0 0
      %3044 = vmatpush1.bf16.msra.mxu0 0
      %3045 = vmatprep.subr.bf16.mxu0 0
      %3046 = vmatpush1.bf16.msra.mxu0 0
      %3047 = vmatprep.subr.bf16.mxu0 0
      %3048 = vmatpush1.bf16.msra.mxu0 0
      %3049 = vmatprep.subr.bf16.mxu0 0
      %3050 = vmatpush1.bf16.msra.mxu0 0
      %3051 = vmatprep.subr.bf16.mxu0 0
      %3052 = vmatpush1.bf16.msra.mxu0 0
      %3053 = vmatprep.subr.bf16.mxu0 0
      %3054 = vmatpush1.bf16.msra.mxu0 0
      %3055 = vmatprep.subr.bf16.mxu0 0
      %3056 = vmatpush1.bf16.msra.mxu0 0
      %3057 = vmatprep.subr.bf16.mxu0 0
      %3058 = vmatpush1.bf16.msra.mxu0 0
      %3059 = vmatprep.subr.bf16.mxu0 0
      %3060 = vmatpush1.bf16.msra.mxu0 0
      %3061 = vmatprep.subr.bf16.mxu0 0
      %3062 = vmatpush1.bf16.msra.mxu0 0
      %3063 = vmatprep.subr.bf16.mxu0 0
      %3064 = vmatpush1.bf16.msra.mxu0 0
      %3065 = vmatprep.subr.bf16.mxu0 0
      %3066 = vmatpush1.bf16.msra.mxu0 0
      %3067 = vmatprep.subr.bf16.mxu0 0
      %3068 = vmatpush1.bf16.msra.mxu0 0
      %3069 = vmatprep.mubr.bf16.mxu0 0
      %3070 = vmatmul.mubr.bf16.gmra.mrb[0].mxu0 %v3035
      %v3071 = vpop.f32.mrb[0].mxu0
      %v3072 = vadd.f32 0.0, %v3071
      %v3073 = vpop.f32.mrb[0].mxu0
      %v3074 = vadd.f32 0.0, %v3073
      %v3075 = vpop.f32.mrb[0].mxu0
      %v3076 = vpop.f32.mrb[0].mxu0
      %3077 = vdwg.mxu0
      %3078 = vrot.lane.b32.xlu0 %v3072, 64
      %v3079 = vpop.permute.xlu0 %3078
      %3080 = vrot.lane.b32.xlu0 %v3074, 64
      %v3081 = vpop.permute.xlu0 %3080
      %vm3082 = vcmp.lt.s32.totalorder %v1472, 64
      %v3083 = vsel %vm3082, %v3079, %v3081
      %v3084 = vsel %vm3082, %v3081, %v3079
      %v3085 = vmax.f32 %v3072, %v3083
      %v3086 = vmax.f32 %v3074, %v3084
      %v3087 = vpack.c.bf16 %v3085, %v3085
      %v3088 = vpack.c.bf16 %v3086, %v3086
      %v3089 = vld [vmem:[%s11] sm:$0xf]
      %v3090 = vld [vmem:[%s11 + $0x4] sm:$0xf]
      %v3091 = vld [vmem:[%s11 + $0x8] sm:$0xf]
      %v3092 = vld [vmem:[%s11 + $0xc] sm:$0xf]
      %v3093 = vld [vmem:[%s11 + $0x10] sm:$0xf]
      %v3094 = vld [vmem:[%s11 + $0x14] sm:$0xf]
      %v3095 = vld [vmem:[%s11 + $0x18] sm:$0xf]
      %v3096 = vld [vmem:[%s11 + $0x1c] sm:$0xf]
      %v3097 = vld [vmem:[%s11 + $0x20] sm:$0xf]
      %v3098 = vld [vmem:[%s11 + $0x24] sm:$0xf]
      %v3099 = vld [vmem:[%s11 + $0x28] sm:$0xf]
      %v3100 = vld [vmem:[%s11 + $0x2c] sm:$0xf]
      %v3101 = vld [vmem:[%s11 + $0x30] sm:$0xf]
      %v3102 = vld [vmem:[%s11 + $0x34] sm:$0xf]
      %v3103 = vld [vmem:[%s11 + $0x38] sm:$0xf]
      %v3104 = vld [vmem:[%s11 + $0x3c] sm:$0xf]
      %v3105 = vld [vmem:[%s11 + $0x40] sm:$0xf]
      %v3106 = vld [vmem:[%s11 + $0x44] sm:$0xf]
      %v3107 = vld [vmem:[%s11 + $0x48] sm:$0xf]
      %v3108 = vld [vmem:[%s11 + $0x4c] sm:$0xf]
      %v3109 = vld [vmem:[%s11 + $0x50] sm:$0xf]
      %v3110 = vld [vmem:[%s11 + $0x54] sm:$0xf]
      %v3111 = vld [vmem:[%s11 + $0x58] sm:$0xf]
      %v3112 = vld [vmem:[%s11 + $0x5c] sm:$0xf]
      %v3113 = vld [vmem:[%s11 + $0x60] sm:$0xf]
      %v3114 = vld [vmem:[%s11 + $0x64] sm:$0xf]
      %v3115 = vld [vmem:[%s11 + $0x68] sm:$0xf]
      %v3116 = vld [vmem:[%s11 + $0x6c] sm:$0xf]
      %v3117 = vld [vmem:[%s11 + $0x70] sm:$0xf]
      %v3118 = vld [vmem:[%s11 + $0x74] sm:$0xf]
      %v3119 = vld [vmem:[%s11 + $0x78] sm:$0xf]
      %v3120 = vld [vmem:[%s11 + $0x7c] sm:$0xf]
      %v3121 = vld [vmem:[%s12] sm:$0x7]
      %v3122 = vlaneseq
      %v3123 = vshrl.u32 %v3122, 7
      %v3124 = vsub.s32 0, %v3123
      %v3125 = vrot.slane %v3121, %v3124
      %v3158 = vunpack.c.l.b16 %v3089
      %v3159 = vunpack.c.l.b16 %v3090
      %v3160 = vunpack.c.l.b16 %v3091
      %v3161 = vunpack.c.l.b16 %v3092
      %v3162 = vunpack.c.l.b16 %v3093
      %v3163 = vunpack.c.l.b16 %v3094
      %v3164 = vunpack.c.l.b16 %v3095
      %v3165 = vunpack.c.l.b16 %v3096
      %v3166 = vunpack.c.l.b16 %v3097
      %v3167 = vunpack.c.l.b16 %v3098
      %v3168 = vunpack.c.l.b16 %v3099
      %v3169 = vunpack.c.l.b16 %v3100
      %v3170 = vunpack.c.l.b16 %v3101
      %v3171 = vunpack.c.l.b16 %v3102
      %v3172 = vunpack.c.l.b16 %v3103
      %v3173 = vunpack.c.l.b16 %v3104
      %v3174 = vunpack.c.l.b16 %v3105
      %v3175 = vunpack.c.l.b16 %v3106
      %v3176 = vunpack.c.l.b16 %v3107
      %v3177 = vunpack.c.l.b16 %v3108
      %v3178 = vunpack.c.l.b16 %v3109
      %v3179 = vunpack.c.l.b16 %v3110
      %v3180 = vunpack.c.l.b16 %v3111
      %v3181 = vunpack.c.l.b16 %v3112
      %v3182 = vunpack.c.l.b16 %v3113
      %v3183 = vunpack.c.l.b16 %v3114
      %v3184 = vunpack.c.l.b16 %v3115
      %v3185 = vunpack.c.l.b16 %v3116
      %v3186 = vunpack.c.l.b16 %v3117
      %v3187 = vunpack.c.l.b16 %v3118
      %v3188 = vunpack.c.l.b16 %v3119
      %v3189 = vunpack.c.l.b16 %v3120
      %v3190 = vpack.c.b16 %v3159, %v3158
      %v3191 = vpack.c.b16 %v3161, %v3160
      %v3192 = vpack.c.b16 %v3163, %v3162
      %v3193 = vpack.c.b16 %v3165, %v3164
      %v3194 = vpack.c.b16 %v3167, %v3166
      %v3195 = vpack.c.b16 %v3169, %v3168
      %v3196 = vpack.c.b16 %v3171, %v3170
      %v3197 = vpack.c.b16 %v3173, %v3172
      %v3198 = vpack.c.b16 %v3175, %v3174
      %v3199 = vpack.c.b16 %v3177, %v3176
      %v3200 = vpack.c.b16 %v3179, %v3178
      %v3201 = vpack.c.b16 %v3181, %v3180
      %v3202 = vpack.c.b16 %v3183, %v3182
      %v3203 = vpack.c.b16 %v3185, %v3184
      %v3204 = vpack.c.b16 %v3187, %v3186
      %v3205 = vpack.c.b16 %v3189, %v3188
      %3222 = vmatprep.subr.bf16.mxu0 0
      %3223 = vmatpush1.bf16.msra.mxu0 %v3190
      %3224 = vmatprep.subr.bf16.mxu0 0
      %3225 = vmatpush1.bf16.msra.mxu0 %v3191
      %3226 = vmatprep.subr.bf16.mxu0 0
      %3227 = vmatpush1.bf16.msra.mxu0 %v3192
      %3228 = vmatprep.subr.bf16.mxu0 0
      %3229 = vmatpush1.bf16.msra.mxu0 %v3193
      %3230 = vmatprep.subr.bf16.mxu0 0
      %3231 = vmatpush1.bf16.msra.mxu0 %v3194
      %3232 = vmatprep.subr.bf16.mxu0 0
      %3233 = vmatpush1.bf16.msra.mxu0 %v3195
      %3234 = vmatprep.subr.bf16.mxu0 0
      %3235 = vmatpush1.bf16.msra.mxu0 %v3196
      %3236 = vmatprep.subr.bf16.mxu0 0
      %3237 = vmatpush1.bf16.msra.mxu0 %v3197
      %3238 = vmatprep.subr.bf16.mxu0 0
      %3239 = vmatpush1.bf16.msra.mxu0 %v3198
      %3240 = vmatprep.subr.bf16.mxu0 0
      %3241 = vmatpush1.bf16.msra.mxu0 %v3199
      %3242 = vmatprep.subr.bf16.mxu0 0
      %3243 = vmatpush1.bf16.msra.mxu0 %v3200
      %3244 = vmatprep.subr.bf16.mxu0 0
      %3245 = vmatpush1.bf16.msra.mxu0 %v3201
      %3246 = vmatprep.subr.bf16.mxu0 0
      %3247 = vmatpush1.bf16.msra.mxu0 %v3202
      %3248 = vmatprep.subr.bf16.mxu0 0
      %3249 = vmatpush1.bf16.msra.mxu0 %v3203
      %3250 = vmatprep.subr.bf16.mxu0 0
      %3251 = vmatpush1.bf16.msra.mxu0 %v3204
      %3252 = vmatprep.subr.bf16.mxu0 0
      %3253 = vmatpush1.bf16.msra.mxu0 %v3205
      %3254 = vmatprep.mubr.bf16.mxu0 %v3088
      %3255 = vmatmul.mubr.bf16.gmra.mrb[0].mxu0 %v3087
      %v3256 = vpop.f32.mrb[0].mxu0
      %v3257 = vadd.f32 %v3125, %v3256
      %v3258 = vpop.f32.mrb[0].mxu0
      %v3259 = vpop.f32.mrb[0].mxu0
      %v3260 = vpop.f32.mrb[0].mxu0
      %3261 = vdwg.mxu0
      %v3262 = vmax.f32 %v3257, 0.0
      %v3263 = vlaneseq
      %v3264 = vshrl.u32 %v3263, 7
      %v3265 = vsub.s32 1, %v3264
      %v3266 = vrot.slane %v3121, %v3265
      %v3267 = vmul.f32 %v3262, %v3266
      %v3268 = vlaneseq
      %v3269 = vshrl.u32 %v3268, 7
      %v3270 = vsub.s32 2, %v3269
      %v3271 = vrot.slane %v3121, %v3270
      %v3272 = vadd.f32 %v3267, %v3271
      %v3273 = vpack.c.bf16 %v3272, %v3272
      %v3274 = vld [vmem:[%s13] sm:$0xf]
      %v3275 = vld [vmem:[%s13 + $0x4] sm:$0xf]
      %v3276 = vld [vmem:[%s13 + $0x8] sm:$0xf]
      %v3277 = vld [vmem:[%s13 + $0xc] sm:$0xf]
      %v3278 = vld [vmem:[%s13 + $0x10] sm:$0xf]
      %v3279 = vld [vmem:[%s13 + $0x14] sm:$0xf]
      %v3280 = vld [vmem:[%s13 + $0x18] sm:$0xf]
      %v3281 = vld [vmem:[%s13 + $0x1c] sm:$0xf]
      %v3282 = vld [vmem:[%s13 + $0x20] sm:$0xf]
      %v3283 = vld [vmem:[%s13 + $0x24] sm:$0xf]
      %v3284 = vld [vmem:[%s13 + $0x28] sm:$0xf]
      %v3285 = vld [vmem:[%s13 + $0x2c] sm:$0xf]
      %v3286 = vld [vmem:[%s13 + $0x30] sm:$0xf]
      %v3287 = vld [vmem:[%s13 + $0x34] sm:$0xf]
      %v3288 = vld [vmem:[%s13 + $0x38] sm:$0xf]
      %v3289 = vld [vmem:[%s13 + $0x3c] sm:$0xf]
      %v3290 = vrot.slane %v3272, 1
      %v3291 = vpack.c.bf16 %v3290, %v3290
      %v3292 = vld [vmem:[%s14] sm:$0xf]
      %v3293 = vld [vmem:[%s14 + $0x4] sm:$0xf]
      %v3294 = vld [vmem:[%s14 + $0x8] sm:$0xf]
      %v3295 = vld [vmem:[%s14 + $0xc] sm:$0xf]
      %v3296 = vld [vmem:[%s14 + $0x10] sm:$0xf]
      %v3297 = vld [vmem:[%s14 + $0x14] sm:$0xf]
      %v3298 = vld [vmem:[%s14 + $0x18] sm:$0xf]
      %v3299 = vld [vmem:[%s14 + $0x1c] sm:$0xf]
      %v3300 = vld [vmem:[%s14 + $0x20] sm:$0xf]
      %v3301 = vld [vmem:[%s14 + $0x24] sm:$0xf]
      %v3302 = vld [vmem:[%s14 + $0x28] sm:$0xf]
      %v3303 = vld [vmem:[%s14 + $0x2c] sm:$0xf]
      %v3304 = vld [vmem:[%s14 + $0x30] sm:$0xf]
      %v3305 = vld [vmem:[%s14 + $0x34] sm:$0xf]
      %v3306 = vld [vmem:[%s14 + $0x38] sm:$0xf]
      %v3307 = vld [vmem:[%s14 + $0x3c] sm:$0xf]
      %v3324 = vunpack.c.l.b16 %v3292
      %v3325 = vunpack.c.l.b16 %v3293
      %v3326 = vunpack.c.l.b16 %v3294
      %v3327 = vunpack.c.l.b16 %v3295
      %v3328 = vunpack.c.l.b16 %v3296
      %v3329 = vunpack.c.l.b16 %v3297
      %v3330 = vunpack.c.l.b16 %v3298
      %v3331 = vunpack.c.l.b16 %v3299
      %v3332 = vunpack.c.l.b16 %v3300
      %v3333 = vunpack.c.l.b16 %v3301
      %v3334 = vunpack.c.l.b16 %v3302
      %v3335 = vunpack.c.l.b16 %v3303
      %v3336 = vunpack.c.l.b16 %v3304
      %v3337 = vunpack.c.l.b16 %v3305
      %v3338 = vunpack.c.l.b16 %v3306
      %v3339 = vunpack.c.l.b16 %v3307
      %v3340 = vpack.c.b16 %v3325, %v3324
      %v3341 = vpack.c.b16 %v3327, %v3326
      %v3342 = vpack.c.b16 %v3329, %v3328
      %v3343 = vpack.c.b16 %v3331, %v3330
      %v3344 = vpack.c.b16 %v3333, %v3332
      %v3345 = vpack.c.b16 %v3335, %v3334
      %v3346 = vpack.c.b16 %v3337, %v3336
      %v3347 = vpack.c.b16 %v3339, %v3338
      %3356 = vmatprep.subr.bf16.mxu0 0
      %3357 = vmatpush1.bf16.msra.mxu0 %v3340
      %3358 = vmatprep.subr.bf16.mxu0 0
      %3359 = vmatpush1.bf16.msra.mxu0 %v3341
      %3360 = vmatprep.subr.bf16.mxu0 0
      %3361 = vmatpush1.bf16.msra.mxu0 %v3342
      %3362 = vmatprep.subr.bf16.mxu0 0
      %3363 = vmatpush1.bf16.msra.mxu0 %v3343
      %3364 = vmatprep.subr.bf16.mxu0 0
      %3365 = vmatpush1.bf16.msra.mxu0 %v3344
      %3366 = vmatprep.subr.bf16.mxu0 0
      %3367 = vmatpush1.bf16.msra.mxu0 %v3345
      %3368 = vmatprep.subr.bf16.mxu0 0
      %3369 = vmatpush1.bf16.msra.mxu0 %v3346
      %3370 = vmatprep.subr.bf16.mxu0 0
      %3371 = vmatpush1.bf16.msra.mxu0 %v3347
      %3372 = vmatprep.subr.bf16.mxu0 0
      %3373 = vmatpush1.bf16.msra.mxu0 0
      %3374 = vmatprep.subr.bf16.mxu0 0
      %3375 = vmatpush1.bf16.msra.mxu0 0
      %3376 = vmatprep.subr.bf16.mxu0 0
      %3377 = vmatpush1.bf16.msra.mxu0 0
      %3378 = vmatprep.subr.bf16.mxu0 0
      %3379 = vmatpush1.bf16.msra.mxu0 0
      %3380 = vmatprep.subr.bf16.mxu0 0
      %3381 = vmatpush1.bf16.msra.mxu0 0
      %3382 = vmatprep.subr.bf16.mxu0 0
      %3383 = vmatpush1.bf16.msra.mxu0 0
      %3384 = vmatprep.subr.bf16.mxu0 0
      %3385 = vmatpush1.bf16.msra.mxu0 0
      %3386 = vmatprep.subr.bf16.mxu0 0
      %3387 = vmatpush1.bf16.msra.mxu0 0
      %3388 = vmatprep.mubr.bf16.mxu0 0
      %3389 = vmatmul.mubr.bf16.gmra.mrb[0].mxu0 %v3291
      %v3390 = vpop.f32.mrb[0].mxu0
      %v3391 = vadd.f32 0.0, %v3390
      %v3392 = vpop.f32.mrb[0].mxu0
      %v3393 = vpop.f32.mrb[0].mxu0
      %v3394 = vpop.f32.mrb[0].mxu0
      %3395 = vdwg.mxu0
      %v3412 = vunpack.c.l.b16 %v3274
      %v3413 = vunpack.c.l.b16 %v3275
      %v3414 = vunpack.c.l.b16 %v3276
      %v3415 = vunpack.c.l.b16 %v3277
      %v3416 = vunpack.c.l.b16 %v3278
      %v3417 = vunpack.c.l.b16 %v3279
      %v3418 = vunpack.c.l.b16 %v3280
      %v3419 = vunpack.c.l.b16 %v3281
      %v3420 = vunpack.c.l.b16 %v3282
      %v3421 = vunpack.c.l.b16 %v3283
      %v3422 = vunpack.c.l.b16 %v3284
      %v3423 = vunpack.c.l.b16 %v3285
      %v3424 = vunpack.c.l.b16 %v3286
      %v3425 = vunpack.c.l.b16 %v3287
      %v3426 = vunpack.c.l.b16 %v3288
      %v3427 = vunpack.c.l.b16 %v3289
      %v3428 = vpack.c.b16 %v3413, %v3412
      %v3429 = vpack.c.b16 %v3415, %v3414
      %v3430 = vpack.c.b16 %v3417, %v3416
      %v3431 = vpack.c.b16 %v3419, %v3418
      %v3432 = vpack.c.b16 %v3421, %v3420
      %v3433 = vpack.c.b16 %v3423, %v3422
      %v3434 = vpack.c.b16 %v3425, %v3424
      %v3435 = vpack.c.b16 %v3427, %v3426
      %3444 = vmatprep.subr.bf16.mxu0 0
      %3445 = vmatpush1.bf16.msra.mxu0 %v3428
      %3446 = vmatprep.subr.bf16.mxu0 0
      %3447 = vmatpush1.bf16.msra.mxu0 %v3429
      %3448 = vmatprep.subr.bf16.mxu0 0
      %3449 = vmatpush1.bf16.msra.mxu0 %v3430
      %3450 = vmatprep.subr.bf16.mxu0 0
      %3451 = vmatpush1.bf16.msra.mxu0 %v3431
      %3452 = vmatprep.subr.bf16.mxu0 0
      %3453 = vmatpush1.bf16.msra.mxu0 %v3432
      %3454 = vmatprep.subr.bf16.mxu0 0
      %3455 = vmatpush1.bf16.msra.mxu0 %v3433
      %3456 = vmatprep.subr.bf16.mxu0 0
      %3457 = vmatpush1.bf16.msra.mxu0 %v3434
      %3458 = vmatprep.subr.bf16.mxu0 0
      %3459 = vmatpush1.bf16.msra.mxu0 %v3435
      %3460 = vmatprep.subr.bf16.mxu0 0
      %3461 = vmatpush1.bf16.msra.mxu0 0
      %3462 = vmatprep.subr.bf16.mxu0 0
      %3463 = vmatpush1.bf16.msra.mxu0 0
      %3464 = vmatprep.subr.bf16.mxu0 0
      %3465 = vmatpush1.bf16.msra.mxu0 0
      %3466 = vmatprep.subr.bf16.mxu0 0
      %3467 = vmatpush1.bf16.msra.mxu0 0
      %3468 = vmatprep.subr.bf16.mxu0 0
      %3469 = vmatpush1.bf16.msra.mxu0 0
      %3470 = vmatprep.subr.bf16.mxu0 0
      %3471 = vmatpush1.bf16.msra.mxu0 0
      %3472 = vmatprep.subr.bf16.mxu0 0
      %3473 = vmatpush1.bf16.msra.mxu0 0
      %3474 = vmatprep.subr.bf16.mxu0 0
      %3475 = vmatpush1.bf16.msra.mxu0 0
      %3476 = vmatprep.mubr.bf16.mxu0 0
      %3477 = vmatmul.mubr.bf16.gmra.mrb[0].mxu0 %v3273
      %v3478 = vpop.f32.mrb[0].mxu0
      %v3479 = vadd.f32 %v3391, %v3478
      %v3480 = vpop.f32.mrb[0].mxu0
      %v3481 = vpop.f32.mrb[0].mxu0
      %v3482 = vpop.f32.mrb[0].mxu0
      %3483 = vdwg.mxu0
      %v3484 = vld [vmem:[%s15] sm:$0x1]
      %v3486 = vlaneseq
      %v3487 = vshrl.u32 %v3486, 7
      %v3488 = vsub.s32 0, %v3487
      %v3489 = vrot.slane %v3484, %v3488
      %v3491 = vadd.f32 %v3479, %v3489
      %v3492 = vmax.f32 %v3491, 0.0
      %v3493 = vpack.c.bf16 %v3492, %v3492
      %v3494 = vld [vmem:[%s16] sm:$0xf]
      %v3495 = vld [vmem:[%s16 + $0x4] sm:$0xf]
      %v3496 = vld [vmem:[%s16 + $0x8] sm:$0xf]
      %v3497 = vld [vmem:[%s16 + $0xc] sm:$0xf]
      %v3498 = vld [vmem:[%s16 + $0x10] sm:$0xf]
      %v3499 = vld [vmem:[%s16 + $0x14] sm:$0xf]
      %v3500 = vld [vmem:[%s16 + $0x18] sm:$0xf]
      %v3501 = vld [vmem:[%s16 + $0x1c] sm:$0xf]
      %v3502 = vld [vmem:[%s16 + $0x20] sm:$0xf]
      %v3503 = vld [vmem:[%s16 + $0x24] sm:$0xf]
      %v3504 = vld [vmem:[%s16 + $0x28] sm:$0xf]
      %v3505 = vld [vmem:[%s16 + $0x2c] sm:$0xf]
      %v3506 = vld [vmem:[%s16 + $0x30] sm:$0xf]
      %v3507 = vld [vmem:[%s16 + $0x34] sm:$0xf]
      %v3508 = vld [vmem:[%s16 + $0x38] sm:$0xf]
      %v3509 = vld [vmem:[%s16 + $0x3c] sm:$0xf]
      %v3510 = vld [vmem:[%s17] sm:$0x1]
      %v3512 = vlaneseq
      %v3513 = vshrl.u32 %v3512, 7
      %v3514 = vsub.s32 0, %v3513
      %v3515 = vrot.slane %v3510, %v3514
      %v3533 = vunpack.c.l.b16 %v3494
      %v3534 = vunpack.c.l.b16 %v3495
      %v3535 = vunpack.c.l.b16 %v3496
      %v3536 = vunpack.c.l.b16 %v3497
      %v3537 = vunpack.c.l.b16 %v3498
      %v3538 = vunpack.c.l.b16 %v3499
      %v3539 = vunpack.c.l.b16 %v3500
      %v3540 = vunpack.c.l.b16 %v3501
      %v3541 = vunpack.c.l.b16 %v3502
      %v3542 = vunpack.c.l.b16 %v3503
      %v3543 = vunpack.c.l.b16 %v3504
      %v3544 = vunpack.c.l.b16 %v3505
      %v3545 = vunpack.c.l.b16 %v3506
      %v3546 = vunpack.c.l.b16 %v3507
      %v3547 = vunpack.c.l.b16 %v3508
      %v3548 = vunpack.c.l.b16 %v3509
      %v3549 = vpack.c.b16 %v3534, %v3533
      %v3550 = vpack.c.b16 %v3536, %v3535
      %v3551 = vpack.c.b16 %v3538, %v3537
      %v3552 = vpack.c.b16 %v3540, %v3539
      %v3553 = vpack.c.b16 %v3542, %v3541
      %v3554 = vpack.c.b16 %v3544, %v3543
      %v3555 = vpack.c.b16 %v3546, %v3545
      %v3556 = vpack.c.b16 %v3548, %v3547
      %3565 = vmatprep.subr.bf16.mxu0 0
      %3566 = vmatpush1.bf16.msra.mxu0 %v3549
      %3567 = vmatprep.subr.bf16.mxu0 0
      %3568 = vmatpush1.bf16.msra.mxu0 %v3550
      %3569 = vmatprep.subr.bf16.mxu0 0
      %3570 = vmatpush1.bf16.msra.mxu0 %v3551
      %3571 = vmatprep.subr.bf16.mxu0 0
      %3572 = vmatpush1.bf16.msra.mxu0 %v3552
      %3573 = vmatprep.subr.bf16.mxu0 0
      %3574 = vmatpush1.bf16.msra.mxu0 %v3553
      %3575 = vmatprep.subr.bf16.mxu0 0
      %3576 = vmatpush1.bf16.msra.mxu0 %v3554
      %3577 = vmatprep.subr.bf16.mxu0 0
      %3578 = vmatpush1.bf16.msra.mxu0 %v3555
      %3579 = vmatprep.subr.bf16.mxu0 0
      %3580 = vmatpush1.bf16.msra.mxu0 %v3556
      %3581 = vmatprep.subr.bf16.mxu0 0
      %3582 = vmatpush1.bf16.msra.mxu0 0
      %3583 = vmatprep.subr.bf16.mxu0 0
      %3584 = vmatpush1.bf16.msra.mxu0 0
      %3585 = vmatprep.subr.bf16.mxu0 0
      %3586 = vmatpush1.bf16.msra.mxu0 0
      %3587 = vmatprep.subr.bf16.mxu0 0
      %3588 = vmatpush1.bf16.msra.mxu0 0
      %3589 = vmatprep.subr.bf16.mxu0 0
      %3590 = vmatpush1.bf16.msra.mxu0 0
      %3591 = vmatprep.subr.bf16.mxu0 0
      %3592 = vmatpush1.bf16.msra.mxu0 0
      %3593 = vmatprep.subr.bf16.mxu0 0
      %3594 = vmatpush1.bf16.msra.mxu0 0
      %3595 = vmatprep.subr.bf16.mxu0 0
      %3596 = vmatpush1.bf16.msra.mxu0 0
      %3597 = vmatprep.mubr.bf16.mxu0 0
      %3598 = vmatmul.mubr.bf16.gmra.mrb[0].mxu0 %v3493
      %v3599 = vpop.f32.mrb[0].mxu0
      %v3600 = vadd.f32 %v3515, %v3599
      %v3601 = vpop.f32.mrb[0].mxu0
      %v3602 = vpop.f32.mrb[0].mxu0
      %v3603 = vpop.f32.mrb[0].mxu0
      %3604 = vdwg.mxu0
      %3605 = vst [vmem:[%s575] sm:$0xff] %v3600
      %p3606 = scmp.lt.s32.totalorder %s29, 1
      %s3607 = scalar_select %p3606, %s29, 1
      %s3608 = smul.addr %s3607, 8
      %s3609 = scalar_lea.vmem %s18, %s3608
      // Predicated region
      $region93: #{patch_cnn_forward.1} parent=91 // pred_check
        %p3610 = pneg %p430
      $region94: #{patch_cnn_forward.1} parent=91 // pred_check_branch
        %3612 = sbr.rel (%p3610) target = $region96
      $region95: #{patch_cnn_forward.1} parent=91 // pred_region
        _
      $region96: #{patch_cnn_forward.1} parent=91 // pred_fallthru
        _
    $region92: #{patch_cnn_forward.1} parent=5 // pred_fallthru
      _
    %p3613 = scmp.le.s32.totalorder 2, %s24
    // Predicated region
    $region97: #{patch_cnn_forward.1} parent=5 // pred_check
      %p3614 = pneg %p3613
    $region98: #{patch_cnn_forward.1} parent=5 // pred_check_branch
      %3616 = sbr.rel (%p3614) target = $region100
    $region99: #{patch_cnn_forward.1} parent=5 // pred_region
      %s3617 = ssub.s32 %s24, 2
      // Predicated region
      $region101: #{patch_cnn_forward.1} parent=99 // pred_check
        %p3618 = pneg %p436
      $region102: #{patch_cnn_forward.1} parent=99 // pred_check_branch
        %3620 = sbr.rel (%p3618) target = $region104
      $region103: #{patch_cnn_forward.1} parent=99 // pred_region
        %p3621 = scmp.lt.s32.totalorder %s30, 1
        %s3622 = scalar_select %p3621, %s30, 1
        %s3623 = smul.addr %s3622, 8
        %s3624 = scalar_lea.vmem %s18, %s3623
      $region104: #{patch_cnn_forward.1} parent=99 // pred_fallthru
        _
    $region100: #{patch_cnn_forward.1} parent=5 // pred_fallthru
      _
  $region6: #{patch_cnn_forward.1} parent=0 // loop_footer
    %s28 = sadd.s32 1, %s24
  $region7: #{patch_cnn_forward.1} parent=0 // loop_footer_branch
    %23 = sbr.rel target = $region3
  $region8: #{patch_cnn_forward.1} parent=0 // loop_exit
    _

</llo_original>
